<compile_context>
chip_gen: v5e
topology: v5e:2x2
jax: 0.10.0
libtpu: 0.0.40
codegen_flags: <defaults>
</compile_context>

<pallas_src>
import functools

import jax
import jax.numpy as jnp
import numpy as np
from jax.experimental import pallas as pl
from jax.experimental.pallas import tpu as pltpu


def _vq_kernel(x_ref, emb_ref, enorm_ref, q_ref, idx_ref, sse_ref, *,
               use_bf16_matmul):
    tm, d = x_ref.shape
    n_codes_pad = emb_ref.shape[0]
    rows = idx_ref.shape[0]          # == tm // 128

    x = x_ref[...].astype(jnp.float32)          # (tm, D)
    e = emb_ref[...].astype(jnp.float32)        # (n_codes_pad, D), zero-padded rows
    e_norm = enorm_ref[...]                     # (1, n_codes_pad), f32, padded = huge

    # Distance scores. argmin_j ||x_i - e_j|| == argmin_j (||e_j||^2 - 2 x_i.e_j):
    # the per-row ||x_i||^2 term and the sqrt are monotone/constant per row, so they
    # do not affect the argmin (and we avoid NaN from tiny negative fp residue).
    if use_bf16_matmul:
        xe = jnp.dot(x.astype(jnp.bfloat16), e.astype(jnp.bfloat16).T,
                     preferred_element_type=jnp.float32)
    else:
        xe = jnp.dot(x, e.T, preferred_element_type=jnp.float32)
    scores = e_norm - 2.0 * xe                                  # (tm, n_codes_pad)

    idx = jnp.argmin(scores, axis=1).astype(jnp.int32)          # (tm,)

    # Gather codebook rows via one-hot matmul (MXU-friendly, exact in f32).
    onehot = (idx[:, None]
              == jax.lax.broadcasted_iota(jnp.int32, (tm, n_codes_pad), 1)
              ).astype(jnp.float32)                             # (tm, n_codes_pad)
    q = jnp.dot(onehot, e, preferred_element_type=jnp.float32)  # (tm, D)

    q_ref[...] = q.astype(q_ref.dtype)

    # Lane-dense writebacks: (tm,) -> (tm//128, 128).
    idx_ref[...] = idx.reshape(rows, 128)

    # Per-token SSE partials (reduced to the scalar loss in XLA afterwards).
    diff = q - x
    sse_ref[...] = jnp.sum(diff * diff, axis=1).reshape(rows, 128)


def enhanced_vq_forward(inputs, embeddings, *, tile_m=1024, use_bf16_matmul=False):
    """inputs: (..., D) float32, embeddings: (num_embeddings, D) float32."""
    input_shape = inputs.shape
    d = embeddings.shape[1]
    assert input_shape[-1] == d, "last dim of inputs must equal embedding_dim"
    n_codes = embeddings.shape[0]
    # tile_m must be a multiple of 128; multiples of 1024 give fully (8,128)-aligned
    # index/SSE output blocks.
    assert tile_m % 128 == 0, "tile_m must be a multiple of 128"

    flat = inputs.reshape(-1, d)
    m = flat.shape[0]
    m_pad = pl.cdiv(m, tile_m) * tile_m
    if m_pad != m:
        flat = jnp.pad(flat, ((0, m_pad - m), (0, 0)))   # padded rows discarded below
    num_tiles = m_pad // tile_m
    rows = tile_m // 128

    # Pad the codebook axis to a lane-dense multiple of 128. Padded rows are zero
    # vectors with a huge precomputed "norm" so the argmin can never select them.
    n_codes_pad = pl.cdiv(n_codes, 128) * 128
    emb_f32 = embeddings.astype(jnp.float32)
    e_norm = jnp.sum(emb_f32 ** 2, axis=1)                       # (n_codes,)
    if n_codes_pad != n_codes:
        emb_p = jnp.pad(emb_f32, ((0, n_codes_pad - n_codes), (0, 0)))
        e_norm = jnp.pad(e_norm, (0, n_codes_pad - n_codes),
                         constant_values=jnp.float32(1e30))
    else:
        emb_p = emb_f32
    e_norm = e_norm[None, :]                                     # (1, n_codes_pad)

    kernel = functools.partial(_vq_kernel, use_bf16_matmul=use_bf16_matmul)

    quantized_flat, idx2d, sse2d = pl.pallas_call(
        kernel,
        out_shape=(
            jax.ShapeDtypeStruct((m_pad, d), inputs.dtype),
            jax.ShapeDtypeStruct((m_pad // 128, 128), jnp.int32),
            jax.ShapeDtypeStruct((m_pad // 128, 128), jnp.float32),
        ),
        grid_spec=pltpu.PrefetchScalarGridSpec(
            num_scalar_prefetch=0,
            grid=(num_tiles,),
            in_specs=[
                pl.BlockSpec((tile_m, d), lambda i: (i, 0)),
                # Constant-index codebook / norms blocks (whole codebook resident;
                # Pallas re-uses the same block across grid steps).
                # TODO(synk): for very large codebooks, tile the n_codes axis with an
                # online running-min/argmin to cut VMEM.
                pl.BlockSpec((n_codes_pad, d), lambda i: (0, 0)),
                pl.BlockSpec((1, n_codes_pad), lambda i: (0, 0)),
            ],
            out_specs=[
                pl.BlockSpec((tile_m, d), lambda i: (i, 0)),
                pl.BlockSpec((rows, 128), lambda i: (i, 0)),
                pl.BlockSpec((rows, 128), lambda i: (i, 0)),
            ],
        ),
        compiler_params=pltpu.CompilerParams(
            dimension_semantics=("parallel",),          # no cross-step carry -> megacore OK
            vmem_limit_bytes=32 * 1024 * 1024,
        ),
    )(flat, emb_p, e_norm)

    quantized = quantized_flat[:m].reshape(input_shape)
    encoding_indices = idx2d.reshape(-1)[:m]
    loss = jnp.sum(sse2d.reshape(-1)[:m]) / jnp.float32(m * d)
    # straight-through estimator: forward value equals `quantized`
    quantized_st = inputs + jax.lax.stop_gradient(quantized - inputs)
    return quantized_st, loss, encoding_indices


def _reference(inputs, embeddings):
    d = embeddings.shape[1]
    flat = inputs.reshape(-1, d)
    dist2 = (jnp.sum(flat ** 2, 1, keepdims=True)
             + jnp.sum(embeddings ** 2, 1)[None, :]
             - 2.0 * flat @ embeddings.T)
    idx = jnp.argmin(dist2, axis=1)
    q = embeddings[idx].reshape(inputs.shape)
    loss = jnp.mean((q - inputs) ** 2)
    return q, loss, idx


if __name__ == "__main__":
    key = jax.random.PRNGKey(0)
    k_in, k_emb = jax.random.split(key)

    num_embeddings = 64
    embedding_dim = 32
    # small NHWC input: batch=2, spatial=24x24, channels=embedding_dim
    # (m = 1152 tokens -> exercises both multi-tile grid and ragged-tile padding)
    inputs = jax.random.normal(k_in, (2, 24, 24, embedding_dim), dtype=jnp.float32)
    # deterministic synthetic codebook (stand-in for torch.randn init)
    embeddings = jax.random.normal(
        k_emb, (num_embeddings, embedding_dim), dtype=jnp.float32)

    quantized, loss, idx = enhanced_vq_forward(inputs, embeddings, tile_m=1024)
    jax.block_until_ready((quantized, loss, idx))

    # lightweight correctness check against plain-JAX reference
    q_ref, loss_ref, idx_ref = _reference(inputs, embeddings)
    np.testing.assert_array_equal(np.asarray(idx), np.asarray(idx_ref))
    np.testing.assert_allclose(np.asarray(quantized), np.asarray(q_ref),
                               rtol=1e-5, atol=1e-5)
    np.testing.assert_allclose(float(loss), float(loss_ref), rtol=1e-5, atol=1e-6)

    # TODO(synk): training-mode side effects (EMA codebook update, perplexity EMA,
    # usage_count, total_usage, xm.rendezvous) are stateful buffer mutations, not part
    # of the functional eval forward hot path; omitted here.
    print("KERNEL_OK")
</pallas_src>

<mosaic_0001>
module attributes {stable_mosaic.version = 11 : i64} {
  func.func @_vq_kernel(%arg0: i32, %arg1: memref<1024x32xf32, #tpu.memory_space<vmem>>, %arg2: memref<128x32xf32, #tpu.memory_space<vmem>>, %arg3: memref<1x128xf32, #tpu.memory_space<vmem>>, %arg4: memref<1024x32xf32, #tpu.memory_space<vmem>>, %arg5: memref<8x128xi32, #tpu.memory_space<vmem>>, %arg6: memref<8x128xf32, #tpu.memory_space<vmem>>) attributes {dimension_semantics = [#tpu.dimension_semantics<parallel>], iteration_bounds = array<i64: 2>, scalar_prefetch = 0 : i64, scratch_operands = 0 : i64, tpu.core_type = #tpu.core_type<tc>, window_params = [{transform_indices = @transform_0, window_bounds = array<i64: 1024, 32>}, {pipeline_mode = #tpu.pipeline_mode<synchronous>, transform_indices = @transform_1, window_bounds = array<i64: 128, 32>}, {pipeline_mode = #tpu.pipeline_mode<synchronous>, transform_indices = @transform_2, window_bounds = array<i64: 1, 128>}, {transform_indices = @transform_3, window_bounds = array<i64: 1024, 32>}, {transform_indices = @transform_4, window_bounds = array<i64: 8, 128>}, {transform_indices = @transform_5, window_bounds = array<i64: 8, 128>}]} {
    %c0 = arith.constant 0 : index
    %c0_0 = arith.constant 0 : index
    %0 = vector.load %arg1[%c0, %c0_0] : memref<1024x32xf32, #tpu.memory_space<vmem>>, vector<1024x32xf32>
    %c0_1 = arith.constant 0 : index
    %c0_2 = arith.constant 0 : index
    %1 = vector.load %arg2[%c0_1, %c0_2] : memref<128x32xf32, #tpu.memory_space<vmem>>, vector<128x32xf32>
    %c0_3 = arith.constant 0 : index
    %c0_4 = arith.constant 0 : index
    %2 = vector.load %arg3[%c0_3, %c0_4] : memref<1x128xf32, #tpu.memory_space<vmem>>, vector<1x128xf32>
    %3 = tpu.transpose %1, [1, 0] : vector<128x32xf32> -> vector<32x128xf32>
    %cst = arith.constant dense<0.000000e+00> : vector<1024x128xf32>
    %4 = tpu.matmul %0, %3, %cst {dimension_numbers = #tpu.dot_dimension_numbers<[1], [0], [0], [1], [0, 0, 1, 1], [], []>} : vector<1024x32xf32>, vector<32x128xf32>, vector<1024x128xf32> -> vector<1024x128xf32>
    %cst_5 = arith.constant 2.000000e+00 : f32
    %5 = vector.broadcast %cst_5 : f32 to vector<1024x128xf32>
    %6 = arith.mulf %5, %4 : vector<1024x128xf32>
    %7 = vector.broadcast %2 : vector<1x128xf32> to vector<1024x128xf32>
    %8 = arith.subf %7, %6 : vector<1024x128xf32>
    %9 = tpu.reduce_index %8 {axis = 1 : i32, kind = #tpu.reduction_kind<arg_min>} : vector<1024x128xf32> -> vector<1024xi32>
    %10 = vector.shape_cast %9 : vector<1024xi32> to vector<1024x1xi32>
    %11 = tpu.iota {dimensions = array<i32: 1>} : vector<1024x128xi32>
    %12 = vector.broadcast %10 : vector<1024x1xi32> to vector<1024x128xi32>
    %13 = arith.cmpi eq, %12, %11 : vector<1024x128xi32>
    %14 = arith.extui %13 : vector<1024x128xi1> to vector<1024x128xi32>
    %15 = arith.sitofp %14 : vector<1024x128xi32> to vector<1024x128xf32>
    %cst_6 = arith.constant dense<0.000000e+00> : vector<1024x32xf32>
    %16 = tpu.matmul %15, %1, %cst_6 {dimension_numbers = #tpu.dot_dimension_numbers<[1], [0], [0], [1], [0, 0, 1, 1], [], []>} : vector<1024x128xf32>, vector<128x32xf32>, vector<1024x32xf32> -> vector<1024x32xf32>
    %c0_7 = arith.constant 0 : index
    %c0_8 = arith.constant 0 : index
    %17 = vector.load %arg4[%c0_7, %c0_8] : memref<1024x32xf32, #tpu.memory_space<vmem>>, vector<1024x32xf32>
    tpu.vector_store %arg4[%c0_7, %c0_8], %16 {strides = array<i32>} : memref<1024x32xf32, #tpu.memory_space<vmem>>, vector<1024x32xf32>,
    %18 = vector.shape_cast %9 : vector<1024xi32> to vector<8x128xi32>
    %c0_9 = arith.constant 0 : index
    %c0_10 = arith.constant 0 : index
    %19 = vector.load %arg5[%c0_9, %c0_10] : memref<8x128xi32, #tpu.memory_space<vmem>>, vector<8x128xi32>
    tpu.vector_store %arg5[%c0_9, %c0_10], %18 {strides = array<i32>} : memref<8x128xi32, #tpu.memory_space<vmem>>, vector<8x128xi32>,
    %20 = arith.subf %16, %0 : vector<1024x32xf32>
    %21 = arith.mulf %20, %20 : vector<1024x32xf32>
    %cst_11 = arith.constant dense<0.000000e+00> : vector<1024xf32>
    %22 = vector.multi_reduction <add>, %21, %cst_11 [1] : vector<1024x32xf32> to vector<1024xf32>
    %23 = vector.shape_cast %22 : vector<1024xf32> to vector<8x128xf32>
    %c0_12 = arith.constant 0 : index
    %c0_13 = arith.constant 0 : index
    %24 = vector.load %arg6[%c0_12, %c0_13] : memref<8x128xf32, #tpu.memory_space<vmem>>, vector<8x128xf32>
    tpu.vector_store %arg6[%c0_12, %c0_13], %23 {strides = array<i32>} : memref<8x128xf32, #tpu.memory_space<vmem>>, vector<8x128xf32>,
    return
  }
  func.func @transform_0(%arg0: i32) -> (i32, i32) {
    %c0_i32 = arith.constant 0 : i32
    %c0_i32_0 = arith.constant 0 : i32
    return %arg0, %c0_i32 : i32, i32
  }
  func.func @transform_1(%arg0: i32) -> (i32, i32) {
    %c0_i32 = arith.constant 0 : i32
    %c0_i32_0 = arith.constant 0 : i32
    %c0_i32_1 = arith.constant 0 : i32
    return %c0_i32, %c0_i32_0 : i32, i32
  }
  func.func @transform_2(%arg0: i32) -> (i32, i32) {
    %c0_i32 = arith.constant 0 : i32
    %c0_i32_0 = arith.constant 0 : i32
    %c0_i32_1 = arith.constant 0 : i32
    return %c0_i32, %c0_i32_0 : i32, i32
  }
  func.func @transform_3(%arg0: i32) -> (i32, i32) {
    %c0_i32 = arith.constant 0 : i32
    %c0_i32_0 = arith.constant 0 : i32
    return %arg0, %c0_i32 : i32, i32
  }
  func.func @transform_4(%arg0: i32) -> (i32, i32) {
    %c0_i32 = arith.constant 0 : i32
    %c0_i32_0 = arith.constant 0 : i32
    return %arg0, %c0_i32 : i32, i32
  }
  func.func @transform_5(%arg0: i32) -> (i32, i32) {
    %c0_i32 = arith.constant 0 : i32
    %c0_i32_0 = arith.constant 0 : i32
    return %arg0, %c0_i32 : i32, i32
  }
}

</mosaic_0001>

<llo_original>
// kernel: tpu_custom_call.1
$region0: #{tpu_custom_call.1}
  #allocation0 [shape = 'u32[]', space=smem, size = 0x4, offset = 0x4, fixed_abs, tag = 'smem constant byte address 0x4 - core index']
  #allocation1 [shape = 'u32[72,128]{1,0:T(1,128)}', space=vmem, size = 0x9000, scoped, tag = 'internal scratch']
  %s0 = inlined_call_operand.vmem [shape: f32[2048,32], index: 0, kind: input, shape index: {}]
  %s1 = inlined_call_operand.vmem [shape: f32[128,32], index: 1, kind: input, shape index: {}]
  %s2 = inlined_call_operand.vmem [shape: f32[1,128], index: 2, kind: input, shape index: {}]
  %s3 = inlined_call_operand.vmem [shape: f32[2048,32], index: 3, kind: output, shape index: {0}]
  %s4 = inlined_call_operand.hbm [shape: s32[16,128], index: 4, kind: output, shape index: {1}]
  %s5 = inlined_call_operand.hbm [shape: f32[16,128], index: 5, kind: output, shape index: {2}]
  %6 = xla_tuple %s3, %s4, %s5
  %s7 = sld [smem:[#allocation0]]
  $region61: #{tpu_custom_call.1} parent=0
    _
  %s9 = ssub.s32 1, %s7
  %s10 = scalar_select 0, %s9, %s7
  $region1: #{tpu_custom_call.1} parent=0
    #allocation2 [shape = 'u8[8192]{0}', space=vmem, size = 0x2000, scoped, tag = 'output window, operand 1']
    #allocation3 [shape = 's32[2]{0}', space=sflag, size = 0x8, scoped, tag = 'scoped memory for tpu_custom_call.1']
    #allocation4 [shape = 'u8[8192]{0}', space=vmem, size = 0x2000, scoped, tag = 'output window, operand 2']
    #allocation5 [shape = 's32[2]{0}', space=sflag, size = 0x8, scoped, tag = 'scoped memory for tpu_custom_call.1']
    %11 = vsyncpa [#allocation3], 0
    %s12 = scalar_lea.sflag [#allocation3], 1
    %13 = vsyncpa %s12, 0
    %14 = vsyncpa [#allocation5], 0
    %s15 = scalar_lea.sflag [#allocation5], 1
    %16 = vsyncpa %s15, 0
    loop: start=0, step=1, limit=4
    $region2: #{tpu_custom_call.1} parent=1 // loop_pre_header
      _
    $region3: #{tpu_custom_call.1} parent=1 // loop_header
      %s18 = sphi 0, %s22
      %p19 = scmp.ge.s32.totalorder %s18, 4
      %s28 = sphi 0, %s30
      %s31 = sphi 0, %s28
      %s32 = sphi 0, %s31
      %s48 = sphi 0, %s32
      %s52 = sphi 0, %s52
      %s54 = sphi 0, %s52
      %s55 = sphi 0, %s54
      %s69 = sphi 0, %s55
      %s73 = sphi 0, %s73
      %s75 = sphi 0, %s73
      %s76 = sphi 0, %s75
      %s90 = sphi 0, %s76
      %s96 = sphi 0, %s98
      %s99 = sphi 0, %s96
      %s100 = sphi 0, %s99
      %s116 = sphi 0, %s100
      %s122 = sphi 0, %s124
      %s125 = sphi 0, %s122
      %s126 = sphi 0, %s125
      %s142 = sphi 0, %s126
      %s148 = sphi 0, %s150
      %s151 = sphi 0, %s148
      %s152 = sphi 0, %s151
      %s168 = sphi 0, %s152
    $region4: #{tpu_custom_call.1} parent=1 // loop_header_branch
      %21 = sbr.rel (%p19) target = $region8
    $region5: #{tpu_custom_call.1} parent=1 // loop_body
      %s23 = ssub.s32 %s18, 1
      %s24 = ssub.s32 %s18, 2
      %s25 = sadd.s32 %s18, 1
      %s26 = ssub.s32 %s18, %s25
      %p27 = scmp.eq.s32.totalorder %s26, 0
      %s29 = sadd.s32 %s28, 1
      %s30 = scalar_select %p27, %s28, %s29
      %p33 = pneg %p27
      %p34 = scmp.eq.s32.totalorder %s18, 1
      %p35 = por %p33, %p34
      %p36 = scmp.ne.s32.totalorder %s28, %s31
      %p37 = scmp.eq.s32.totalorder %s18, 0
      %p38 = por %p36, %p37
      %p39 = scmp.ne.s32.totalorder %s28, %s31
      %p40 = scmp.eq.s32.totalorder %s23, 1
      %p41 = por %p39, %p40
      %p42 = scmp.ne.s32.totalorder %s31, %s32
      %p43 = scmp.eq.s32.totalorder %s23, 0
      %p44 = por %p42, %p43
      %p45 = scmp.ne.s32.totalorder %s31, %s32
      %p46 = scmp.eq.s32.totalorder %s24, 1
      %p47 = por %p45, %p46
      %p49 = scmp.ne.s32.totalorder %s32, %s48
      %p50 = scmp.eq.s32.totalorder %s24, 0
      %p51 = por %p49, %p50
      %s53 = sadd.s32 %s52, 1
      %p56 = scmp.eq.s32.totalorder %s18, 1
      %p57 = scmp.ne.s32.totalorder %s52, %s54
      %p58 = scmp.eq.s32.totalorder %s18, 0
      %p59 = por %p57, %p58
      %p60 = scmp.ne.s32.totalorder %s52, %s54
      %p61 = scmp.eq.s32.totalorder %s23, 1
      %p62 = por %p60, %p61
      %p63 = scmp.ne.s32.totalorder %s54, %s55
      %p64 = scmp.eq.s32.totalorder %s23, 0
      %p65 = por %p63, %p64
      %p66 = scmp.ne.s32.totalorder %s54, %s55
      %p67 = scmp.eq.s32.totalorder %s24, 1
      %p68 = por %p66, %p67
      %p70 = scmp.ne.s32.totalorder %s55, %s69
      %p71 = scmp.eq.s32.totalorder %s24, 0
      %p72 = por %p70, %p71
      %s74 = sadd.s32 %s73, 1
      %p77 = scmp.eq.s32.totalorder %s18, 1
      %p78 = scmp.ne.s32.totalorder %s73, %s75
      %p79 = scmp.eq.s32.totalorder %s18, 0
      %p80 = por %p78, %p79
      %p81 = scmp.ne.s32.totalorder %s73, %s75
      %p82 = scmp.eq.s32.totalorder %s23, 1
      %p83 = por %p81, %p82
      %p84 = scmp.ne.s32.totalorder %s75, %s76
      %p85 = scmp.eq.s32.totalorder %s23, 0
      %p86 = por %p84, %p85
      %p87 = scmp.ne.s32.totalorder %s75, %s76
      %p88 = scmp.eq.s32.totalorder %s24, 1
      %p89 = por %p87, %p88
      %p91 = scmp.ne.s32.totalorder %s76, %s90
      %p92 = scmp.eq.s32.totalorder %s24, 0
      %p93 = por %p91, %p92
      %s94 = ssub.s32 %s18, %s25
      %p95 = scmp.eq.s32.totalorder %s94, 0
      %s97 = sadd.s32 %s96, 1
      %s98 = scalar_select %p95, %s96, %s97
      %p101 = pneg %p95
      %p102 = scmp.eq.s32.totalorder %s18, 1
      %p103 = por %p101, %p102
      %p104 = scmp.ne.s32.totalorder %s96, %s99
      %p105 = scmp.eq.s32.totalorder %s18, 0
      %p106 = por %p104, %p105
      %p107 = scmp.ne.s32.totalorder %s96, %s99
      %p108 = scmp.eq.s32.totalorder %s23, 1
      %p109 = por %p107, %p108
      %p110 = scmp.ne.s32.totalorder %s99, %s100
      %p111 = scmp.eq.s32.totalorder %s23, 0
      %p112 = por %p110, %p111
      %p113 = scmp.ne.s32.totalorder %s99, %s100
      %p114 = scmp.eq.s32.totalorder %s24, 1
      %p115 = por %p113, %p114
      %p117 = scmp.ne.s32.totalorder %s100, %s116
      %p118 = scmp.eq.s32.totalorder %s24, 0
      %p119 = por %p117, %p118
      %s120 = ssub.s32 %s18, %s25
      %p121 = scmp.eq.s32.totalorder %s120, 0
      %s123 = sadd.s32 %s122, 1
      %s124 = scalar_select %p121, %s122, %s123
      %p127 = pneg %p121
      %p128 = scmp.eq.s32.totalorder %s18, 1
      %p129 = por %p127, %p128
      %p130 = scmp.ne.s32.totalorder %s122, %s125
      %p131 = scmp.eq.s32.totalorder %s18, 0
      %p132 = por %p130, %p131
      %p133 = scmp.ne.s32.totalorder %s122, %s125
      %p134 = scmp.eq.s32.totalorder %s23, 1
      %p135 = por %p133, %p134
      %p136 = scmp.ne.s32.totalorder %s125, %s126
      %p137 = scmp.eq.s32.totalorder %s23, 0
      %p138 = por %p136, %p137
      %p139 = scmp.ne.s32.totalorder %s125, %s126
      %p140 = scmp.eq.s32.totalorder %s24, 1
      %p141 = por %p139, %p140
      %p143 = scmp.ne.s32.totalorder %s126, %s142
      %p144 = scmp.eq.s32.totalorder %s24, 0
      %p145 = por %p143, %p144
      %s146 = ssub.s32 %s18, %s25
      %p147 = scmp.eq.s32.totalorder %s146, 0
      %s149 = sadd.s32 %s148, 1
      %s150 = scalar_select %p147, %s148, %s149
      %p153 = pneg %p147
      %p154 = scmp.eq.s32.totalorder %s18, 1
      %p155 = por %p153, %p154
      %p156 = scmp.ne.s32.totalorder %s148, %s151
      %p157 = scmp.eq.s32.totalorder %s18, 0
      %p158 = por %p156, %p157
      %p159 = scmp.ne.s32.totalorder %s148, %s151
      %p160 = scmp.eq.s32.totalorder %s23, 1
      %p161 = por %p159, %p160
      %p162 = scmp.ne.s32.totalorder %s151, %s152
      %p163 = scmp.eq.s32.totalorder %s23, 0
      %p164 = por %p162, %p163
      %p165 = scmp.ne.s32.totalorder %s151, %s152
      %p166 = scmp.eq.s32.totalorder %s24, 1
      %p167 = por %p165, %p166
      %p169 = scmp.ne.s32.totalorder %s152, %s168
      %p170 = scmp.eq.s32.totalorder %s24, 0
      %p171 = por %p169, %p170
      %p172 = scmp.le.s32.totalorder 1, %s18
      %p173 = scmp.lt.s32.totalorder %s18, 3
      %p174 = pnand %p172, %p173
      %p175 = pneg %p174
      // Predicated region
      $region9: #{tpu_custom_call.1} parent=5 // pred_check
        _
      $region10: #{tpu_custom_call.1} parent=5 // pred_check_branch
        %177 = sbr.rel (%p174) target = $region12
      $region11: #{tpu_custom_call.1} parent=5 // pred_region
        %s178 = ssub.s32 %s18, 1
        // Predicated region
        $region13: #{tpu_custom_call.1} parent=11 // pred_check
          %p179 = pneg %p65
        $region14: #{tpu_custom_call.1} parent=11 // pred_check_branch
          %181 = sbr.rel (%p179) target = $region16
        $region15: #{tpu_custom_call.1} parent=11 // pred_region
          _
        $region16: #{tpu_custom_call.1} parent=11 // pred_fallthru
          _
        // Predicated region
        $region17: #{tpu_custom_call.1} parent=11 // pred_check
          %p182 = pneg %p86
        $region18: #{tpu_custom_call.1} parent=11 // pred_check_branch
          %184 = sbr.rel (%p182) target = $region20
        $region19: #{tpu_custom_call.1} parent=11 // pred_region
          _
        $region20: #{tpu_custom_call.1} parent=11 // pred_fallthru
          _
      $region12: #{tpu_custom_call.1} parent=5 // pred_fallthru
        _
      %p185 = scmp.lt.s32.totalorder %s18, 2
      // Predicated region
      $region21: #{tpu_custom_call.1} parent=5 // pred_check
        %p186 = pneg %p185
      $region22: #{tpu_custom_call.1} parent=5 // pred_check_branch
        %188 = sbr.rel (%p186) target = $region24
      $region23: #{tpu_custom_call.1} parent=5 // pred_region
        // Predicated region
        $region25: #{tpu_custom_call.1} parent=23 // pred_check
          %p189 = pneg %p38
        $region26: #{tpu_custom_call.1} parent=23 // pred_check_branch
          %191 = sbr.rel (%p189) target = $region28
        $region27: #{tpu_custom_call.1} parent=23 // pred_region
          %s192 = smul.u32 128, %s18
          %p193 = scmp.lt.s32.totalorder %s192, 255
          %s194 = scalar_select %p193, %s192, 255
          %s195 = smul.addr %s194, 8
          %s196 = scalar_lea.vmem %s0, %s195
          %s197 = smul.u32 128, %s18
        $region28: #{tpu_custom_call.1} parent=23 // pred_fallthru
          _
      $region24: #{tpu_custom_call.1} parent=5 // pred_fallthru
        _
      %p198 = scmp.le.s32.totalorder 1, %s18
      %p199 = scmp.lt.s32.totalorder %s18, 3
      %p200 = pnand %p198, %p199
      %p201 = pneg %p200
      // Predicated region
      $region29: #{tpu_custom_call.1} parent=5 // pred_check
        _
      $region30: #{tpu_custom_call.1} parent=5 // pred_check_branch
        %203 = sbr.rel (%p200) target = $region32
      $region31: #{tpu_custom_call.1} parent=5 // pred_region
        %s204 = ssub.s32 %s18, 1
        %s205 = smul.u32 128, %s23
        %p206 = scmp.lt.s32.totalorder %s205, 255
        %s207 = scalar_select %p206, %s205, 255
        %s208 = smul.addr %s207, 8
        %s209 = scalar_lea.vmem %s0, %s208
        %p210 = pneg %p44
        %p211 = pneg %p41
        %p212 = pneg %p65
        %p213 = pneg %p62
        %p214 = pneg %p86
        %p215 = pneg %p83
        %p216 = pneg %p112
        %p217 = pneg %p109
        %s218 = smul.u32 128, %s23
        %p219 = scmp.lt.s32.totalorder %s218, 255
        %s220 = scalar_select %p219, %s218, 255
        %s221 = smul.addr %s220, 8
        %s222 = scalar_lea.vmem %s3, %s221
        %p223 = pneg %p138
        %p224 = pneg %p135
        %s225 = sand.u32 %s125, 1
        %s226 = scalar_lea.sflag [#allocation3], %s225
        %s227 = sand.u32 %s125, 1
        %s228 = smul.addr %s227, 8
        %s229 = scalar_lea.vmem [#allocation2], %s228
        %p230 = pneg %p164
        %p231 = pneg %p161
        %s232 = sand.u32 %s151, 1
        %s233 = scalar_lea.sflag [#allocation5], %s232
        %s234 = sand.u32 %s151, 1
        %s235 = smul.addr %s234, 8
        %s236 = scalar_lea.vmem [#allocation4], %s235
        %s237 = smul.u32 128, %s23
        %p238 = scmp.lt.s32.totalorder %s237, 255
        %s239 = scalar_select %p238, %s237, 255
        %s240 = smul.addr %s239, 8
        %s241 = scalar_lea.vmem %s0, %s240
        %s242 = smul.u32 128, %s23
        %s243 = smul.u32 128, %s23
        %p244 = scmp.lt.s32.totalorder %s243, 255
        %s245 = scalar_select %p244, %s243, 255
        %s246 = smul.addr %s245, 8
        %s247 = scalar_lea.vmem %s3, %s246
        %s248 = smul.u32 128, %s23
        %v249 = vld [vmem:[%s241] sm:$0xff]
        %v250 = vld [vmem:[%s241 + $0x8] sm:$0xff]
        %v251 = vld [vmem:[%s241 + $0x10] sm:$0xff]
        %v252 = vld [vmem:[%s241 + $0x18] sm:$0xff]
        %v253 = vld [vmem:[%s241 + $0x20] sm:$0xff]
        %v254 = vld [vmem:[%s241 + $0x28] sm:$0xff]
        %v255 = vld [vmem:[%s241 + $0x30] sm:$0xff]
        %v256 = vld [vmem:[%s241 + $0x38] sm:$0xff]
        %v257 = vld [vmem:[%s241 + $0x40] sm:$0xff]
        %v258 = vld [vmem:[%s241 + $0x48] sm:$0xff]
        %v259 = vld [vmem:[%s241 + $0x50] sm:$0xff]
        %v260 = vld [vmem:[%s241 + $0x58] sm:$0xff]
        %v261 = vld [vmem:[%s241 + $0x60] sm:$0xff]
        %v262 = vld [vmem:[%s241 + $0x68] sm:$0xff]
        %v263 = vld [vmem:[%s241 + $0x70] sm:$0xff]
        %v264 = vld [vmem:[%s241 + $0x78] sm:$0xff]
        %v265 = vld [vmem:[%s241 + $0x80] sm:$0xff]
        %v266 = vld [vmem:[%s241 + $0x88] sm:$0xff]
        %v267 = vld [vmem:[%s241 + $0x90] sm:$0xff]
        %v268 = vld [vmem:[%s241 + $0x98] sm:$0xff]
        %v269 = vld [vmem:[%s241 + $0xa0] sm:$0xff]
        %v270 = vld [vmem:[%s241 + $0xa8] sm:$0xff]
        %v271 = vld [vmem:[%s241 + $0xb0] sm:$0xff]
        %v272 = vld [vmem:[%s241 + $0xb8] sm:$0xff]
        %v273 = vld [vmem:[%s241 + $0xc0] sm:$0xff]
        %v274 = vld [vmem:[%s241 + $0xc8] sm:$0xff]
        %v275 = vld [vmem:[%s241 + $0xd0] sm:$0xff]
        %v276 = vld [vmem:[%s241 + $0xd8] sm:$0xff]
        %v277 = vld [vmem:[%s241 + $0xe0] sm:$0xff]
        %v278 = vld [vmem:[%s241 + $0xe8] sm:$0xff]
        %v279 = vld [vmem:[%s241 + $0xf0] sm:$0xff]
        %v280 = vld [vmem:[%s241 + $0xf8] sm:$0xff]
        %v281 = vld [vmem:[%s241 + $0x100] sm:$0xff]
        %v282 = vld [vmem:[%s241 + $0x108] sm:$0xff]
        %v283 = vld [vmem:[%s241 + $0x110] sm:$0xff]
        %v284 = vld [vmem:[%s241 + $0x118] sm:$0xff]
        %v285 = vld [vmem:[%s241 + $0x120] sm:$0xff]
        %v286 = vld [vmem:[%s241 + $0x128] sm:$0xff]
        %v287 = vld [vmem:[%s241 + $0x130] sm:$0xff]
        %v288 = vld [vmem:[%s241 + $0x138] sm:$0xff]
        %v289 = vld [vmem:[%s241 + $0x140] sm:$0xff]
        %v290 = vld [vmem:[%s241 + $0x148] sm:$0xff]
        %v291 = vld [vmem:[%s241 + $0x150] sm:$0xff]
        %v292 = vld [vmem:[%s241 + $0x158] sm:$0xff]
        %v293 = vld [vmem:[%s241 + $0x160] sm:$0xff]
        %v294 = vld [vmem:[%s241 + $0x168] sm:$0xff]
        %v295 = vld [vmem:[%s241 + $0x170] sm:$0xff]
        %v296 = vld [vmem:[%s241 + $0x178] sm:$0xff]
        %v297 = vld [vmem:[%s241 + $0x180] sm:$0xff]
        %v298 = vld [vmem:[%s241 + $0x188] sm:$0xff]
        %v299 = vld [vmem:[%s241 + $0x190] sm:$0xff]
        %v300 = vld [vmem:[%s241 + $0x198] sm:$0xff]
        %v301 = vld [vmem:[%s241 + $0x1a0] sm:$0xff]
        %v302 = vld [vmem:[%s241 + $0x1a8] sm:$0xff]
        %v303 = vld [vmem:[%s241 + $0x1b0] sm:$0xff]
        %v304 = vld [vmem:[%s241 + $0x1b8] sm:$0xff]
        %v305 = vld [vmem:[%s241 + $0x1c0] sm:$0xff]
        %v306 = vld [vmem:[%s241 + $0x1c8] sm:$0xff]
        %v307 = vld [vmem:[%s241 + $0x1d0] sm:$0xff]
        %v308 = vld [vmem:[%s241 + $0x1d8] sm:$0xff]
        %v309 = vld [vmem:[%s241 + $0x1e0] sm:$0xff]
        %v310 = vld [vmem:[%s241 + $0x1e8] sm:$0xff]
        %v311 = vld [vmem:[%s241 + $0x1f0] sm:$0xff]
        %v312 = vld [vmem:[%s241 + $0x1f8] sm:$0xff]
        %v313 = vld [vmem:[%s241 + $0x200] sm:$0xff]
        %v314 = vld [vmem:[%s241 + $0x208] sm:$0xff]
        %v315 = vld [vmem:[%s241 + $0x210] sm:$0xff]
        %v316 = vld [vmem:[%s241 + $0x218] sm:$0xff]
        %v317 = vld [vmem:[%s241 + $0x220] sm:$0xff]
        %v318 = vld [vmem:[%s241 + $0x228] sm:$0xff]
        %v319 = vld [vmem:[%s241 + $0x230] sm:$0xff]
        %v320 = vld [vmem:[%s241 + $0x238] sm:$0xff]
        %v321 = vld [vmem:[%s241 + $0x240] sm:$0xff]
        %v322 = vld [vmem:[%s241 + $0x248] sm:$0xff]
        %v323 = vld [vmem:[%s241 + $0x250] sm:$0xff]
        %v324 = vld [vmem:[%s241 + $0x258] sm:$0xff]
        %v325 = vld [vmem:[%s241 + $0x260] sm:$0xff]
        %v326 = vld [vmem:[%s241 + $0x268] sm:$0xff]
        %v327 = vld [vmem:[%s241 + $0x270] sm:$0xff]
        %v328 = vld [vmem:[%s241 + $0x278] sm:$0xff]
        %v329 = vld [vmem:[%s241 + $0x280] sm:$0xff]
        %v330 = vld [vmem:[%s241 + $0x288] sm:$0xff]
        %v331 = vld [vmem:[%s241 + $0x290] sm:$0xff]
        %v332 = vld [vmem:[%s241 + $0x298] sm:$0xff]
        %v333 = vld [vmem:[%s241 + $0x2a0] sm:$0xff]
        %v334 = vld [vmem:[%s241 + $0x2a8] sm:$0xff]
        %v335 = vld [vmem:[%s241 + $0x2b0] sm:$0xff]
        %v336 = vld [vmem:[%s241 + $0x2b8] sm:$0xff]
        %v337 = vld [vmem:[%s241 + $0x2c0] sm:$0xff]
        %v338 = vld [vmem:[%s241 + $0x2c8] sm:$0xff]
        %v339 = vld [vmem:[%s241 + $0x2d0] sm:$0xff]
        %v340 = vld [vmem:[%s241 + $0x2d8] sm:$0xff]
        %v341 = vld [vmem:[%s241 + $0x2e0] sm:$0xff]
        %v342 = vld [vmem:[%s241 + $0x2e8] sm:$0xff]
        %v343 = vld [vmem:[%s241 + $0x2f0] sm:$0xff]
        %v344 = vld [vmem:[%s241 + $0x2f8] sm:$0xff]
        %v345 = vld [vmem:[%s241 + $0x300] sm:$0xff]
        %v346 = vld [vmem:[%s241 + $0x308] sm:$0xff]
        %v347 = vld [vmem:[%s241 + $0x310] sm:$0xff]
        %v348 = vld [vmem:[%s241 + $0x318] sm:$0xff]
        %v349 = vld [vmem:[%s241 + $0x320] sm:$0xff]
        %v350 = vld [vmem:[%s241 + $0x328] sm:$0xff]
        %v351 = vld [vmem:[%s241 + $0x330] sm:$0xff]
        %v352 = vld [vmem:[%s241 + $0x338] sm:$0xff]
        %v353 = vld [vmem:[%s241 + $0x340] sm:$0xff]
        %v354 = vld [vmem:[%s241 + $0x348] sm:$0xff]
        %v355 = vld [vmem:[%s241 + $0x350] sm:$0xff]
        %v356 = vld [vmem:[%s241 + $0x358] sm:$0xff]
        %v357 = vld [vmem:[%s241 + $0x360] sm:$0xff]
        %v358 = vld [vmem:[%s241 + $0x368] sm:$0xff]
        %v359 = vld [vmem:[%s241 + $0x370] sm:$0xff]
        %v360 = vld [vmem:[%s241 + $0x378] sm:$0xff]
        %v361 = vld [vmem:[%s241 + $0x380] sm:$0xff]
        %v362 = vld [vmem:[%s241 + $0x388] sm:$0xff]
        %v363 = vld [vmem:[%s241 + $0x390] sm:$0xff]
        %v364 = vld [vmem:[%s241 + $0x398] sm:$0xff]
        %v365 = vld [vmem:[%s241 + $0x3a0] sm:$0xff]
        %v366 = vld [vmem:[%s241 + $0x3a8] sm:$0xff]
        %v367 = vld [vmem:[%s241 + $0x3b0] sm:$0xff]
        %v368 = vld [vmem:[%s241 + $0x3b8] sm:$0xff]
        %v369 = vld [vmem:[%s241 + $0x3c0] sm:$0xff]
        %v370 = vld [vmem:[%s241 + $0x3c8] sm:$0xff]
        %v371 = vld [vmem:[%s241 + $0x3d0] sm:$0xff]
        %v372 = vld [vmem:[%s241 + $0x3d8] sm:$0xff]
        %v373 = vld [vmem:[%s241 + $0x3e0] sm:$0xff]
        %v374 = vld [vmem:[%s241 + $0x3e8] sm:$0xff]
        %v375 = vld [vmem:[%s241 + $0x3f0] sm:$0xff]
        %v376 = vld [vmem:[%s241 + $0x3f8] sm:$0xff]
        %v377 = vld [vmem:[%s1] sm:$0xff]
        %v378 = vld [vmem:[%s1 + $0x8] sm:$0xff]
        %v379 = vld [vmem:[%s1 + $0x10] sm:$0xff]
        %v380 = vld [vmem:[%s1 + $0x18] sm:$0xff]
        %v381 = vld [vmem:[%s1 + $0x20] sm:$0xff]
        %v382 = vld [vmem:[%s1 + $0x28] sm:$0xff]
        %v383 = vld [vmem:[%s1 + $0x30] sm:$0xff]
        %v384 = vld [vmem:[%s1 + $0x38] sm:$0xff]
        %v385 = vld [vmem:[%s1 + $0x40] sm:$0xff]
        %v386 = vld [vmem:[%s1 + $0x48] sm:$0xff]
        %v387 = vld [vmem:[%s1 + $0x50] sm:$0xff]
        %v388 = vld [vmem:[%s1 + $0x58] sm:$0xff]
        %v389 = vld [vmem:[%s1 + $0x60] sm:$0xff]
        %v390 = vld [vmem:[%s1 + $0x68] sm:$0xff]
        %v391 = vld [vmem:[%s1 + $0x70] sm:$0xff]
        %v392 = vld [vmem:[%s1 + $0x78] sm:$0xff]
        %v393 = vld [vmem:[%s2] sm:$0x1]
        %vm394 = vcmask 261120
        %v396 = vsel %vm394, %v249, 0
        %v399 = vsel %vm394, %v250, 0
        %v402 = vsel %vm394, %v251, 0
        %v405 = vsel %vm394, %v252, 0
        %v408 = vsel %vm394, %v253, 0
        %v411 = vsel %vm394, %v254, 0
        %v414 = vsel %vm394, %v255, 0
        %v417 = vsel %vm394, %v256, 0
        %v420 = vsel %vm394, %v257, 0
        %v423 = vsel %vm394, %v258, 0
        %v426 = vsel %vm394, %v259, 0
        %v429 = vsel %vm394, %v260, 0
        %v432 = vsel %vm394, %v261, 0
        %v435 = vsel %vm394, %v262, 0
        %v438 = vsel %vm394, %v263, 0
        %v441 = vsel %vm394, %v264, 0
        %v444 = vsel %vm394, %v265, 0
        %v447 = vsel %vm394, %v266, 0
        %v450 = vsel %vm394, %v267, 0
        %v453 = vsel %vm394, %v268, 0
        %v456 = vsel %vm394, %v269, 0
        %v459 = vsel %vm394, %v270, 0
        %v462 = vsel %vm394, %v271, 0
        %v465 = vsel %vm394, %v272, 0
        %v468 = vsel %vm394, %v273, 0
        %v471 = vsel %vm394, %v274, 0
        %v474 = vsel %vm394, %v275, 0
        %v477 = vsel %vm394, %v276, 0
        %v480 = vsel %vm394, %v277, 0
        %v483 = vsel %vm394, %v278, 0
        %v486 = vsel %vm394, %v279, 0
        %v489 = vsel %vm394, %v280, 0
        %v492 = vsel %vm394, %v281, 0
        %v495 = vsel %vm394, %v282, 0
        %v498 = vsel %vm394, %v283, 0
        %v501 = vsel %vm394, %v284, 0
        %v504 = vsel %vm394, %v285, 0
        %v507 = vsel %vm394, %v286, 0
        %v510 = vsel %vm394, %v287, 0
        %v513 = vsel %vm394, %v288, 0
        %v516 = vsel %vm394, %v289, 0
        %v519 = vsel %vm394, %v290, 0
        %v522 = vsel %vm394, %v291, 0
        %v525 = vsel %vm394, %v292, 0
        %v528 = vsel %vm394, %v293, 0
        %v531 = vsel %vm394, %v294, 0
        %v534 = vsel %vm394, %v295, 0
        %v537 = vsel %vm394, %v296, 0
        %v540 = vsel %vm394, %v297, 0
        %v543 = vsel %vm394, %v298, 0
        %v546 = vsel %vm394, %v299, 0
        %v549 = vsel %vm394, %v300, 0
        %v552 = vsel %vm394, %v301, 0
        %v555 = vsel %vm394, %v302, 0
        %v558 = vsel %vm394, %v303, 0
        %v561 = vsel %vm394, %v304, 0
        %v564 = vsel %vm394, %v305, 0
        %v567 = vsel %vm394, %v306, 0
        %v570 = vsel %vm394, %v307, 0
        %v573 = vsel %vm394, %v308, 0
        %v576 = vsel %vm394, %v309, 0
        %v579 = vsel %vm394, %v310, 0
        %v582 = vsel %vm394, %v311, 0
        %v585 = vsel %vm394, %v312, 0
        %v588 = vsel %vm394, %v313, 0
        %v591 = vsel %vm394, %v314, 0
        %v594 = vsel %vm394, %v315, 0
        %v597 = vsel %vm394, %v316, 0
        %v600 = vsel %vm394, %v317, 0
        %v603 = vsel %vm394, %v318, 0
        %v606 = vsel %vm394, %v319, 0
        %v609 = vsel %vm394, %v320, 0
        %v612 = vsel %vm394, %v321, 0
        %v615 = vsel %vm394, %v322, 0
        %v618 = vsel %vm394, %v323, 0
        %v621 = vsel %vm394, %v324, 0
        %v624 = vsel %vm394, %v325, 0
        %v627 = vsel %vm394, %v326, 0
        %v630 = vsel %vm394, %v327, 0
        %v633 = vsel %vm394, %v328, 0
        %v636 = vsel %vm394, %v329, 0
        %v639 = vsel %vm394, %v330, 0
        %v642 = vsel %vm394, %v331, 0
        %v645 = vsel %vm394, %v332, 0
        %v648 = vsel %vm394, %v333, 0
        %v651 = vsel %vm394, %v334, 0
        %v654 = vsel %vm394, %v335, 0
        %v657 = vsel %vm394, %v336, 0
        %v660 = vsel %vm394, %v337, 0
        %v663 = vsel %vm394, %v338, 0
        %v666 = vsel %vm394, %v339, 0
        %v669 = vsel %vm394, %v340, 0
        %v672 = vsel %vm394, %v341, 0
        %v675 = vsel %vm394, %v342, 0
        %v678 = vsel %vm394, %v343, 0
        %v681 = vsel %vm394, %v344, 0
        %v684 = vsel %vm394, %v345, 0
        %v687 = vsel %vm394, %v346, 0
        %v690 = vsel %vm394, %v347, 0
        %v693 = vsel %vm394, %v348, 0
        %v696 = vsel %vm394, %v349, 0
        %v699 = vsel %vm394, %v350, 0
        %v702 = vsel %vm394, %v351, 0
        %v705 = vsel %vm394, %v352, 0
        %v708 = vsel %vm394, %v353, 0
        %v711 = vsel %vm394, %v354, 0
        %v714 = vsel %vm394, %v355, 0
        %v717 = vsel %vm394, %v356, 0
        %v720 = vsel %vm394, %v357, 0
        %v723 = vsel %vm394, %v358, 0
        %v726 = vsel %vm394, %v359, 0
        %v729 = vsel %vm394, %v360, 0
        %v732 = vsel %vm394, %v361, 0
        %v735 = vsel %vm394, %v362, 0
        %v738 = vsel %vm394, %v363, 0
        %v741 = vsel %vm394, %v364, 0
        %v744 = vsel %vm394, %v365, 0
        %v747 = vsel %vm394, %v366, 0
        %v750 = vsel %vm394, %v367, 0
        %v753 = vsel %vm394, %v368, 0
        %v756 = vsel %vm394, %v369, 0
        %v759 = vsel %vm394, %v370, 0
        %v762 = vsel %vm394, %v371, 0
        %v765 = vsel %vm394, %v372, 0
        %v768 = vsel %vm394, %v373, 0
        %v771 = vsel %vm394, %v374, 0
        %v774 = vsel %vm394, %v375, 0
        %v777 = vsel %vm394, %v376, 0
        %v780 = vsel %vm394, %v377, 0
        %v783 = vsel %vm394, %v378, 0
        %v786 = vsel %vm394, %v379, 0
        %v789 = vsel %vm394, %v380, 0
        %v792 = vsel %vm394, %v381, 0
        %v795 = vsel %vm394, %v382, 0
        %v798 = vsel %vm394, %v383, 0
        %v801 = vsel %vm394, %v384, 0
        %v804 = vsel %vm394, %v385, 0
        %v807 = vsel %vm394, %v386, 0
        %v810 = vsel %vm394, %v387, 0
        %v813 = vsel %vm394, %v388, 0
        %v816 = vsel %vm394, %v389, 0
        %v819 = vsel %vm394, %v390, 0
        %v822 = vsel %vm394, %v391, 0
        %v825 = vsel %vm394, %v392, 0
        %827 = vmatpush.xpose.msra.mxu0 %v825
        %828 = vmatpush.xpose.msra.mxu0 %v822
        %829 = vmatpush.xpose.msra.mxu0 %v819
        %830 = vmatpush.xpose.msra.mxu0 %v816
        %831 = vmatpush.xpose.msra.mxu0 %v813
        %832 = vmatpush.xpose.msra.mxu0 %v810
        %833 = vmatpush.xpose.msra.mxu0 %v807
        %834 = vmatpush.xpose.msra.mxu0 %v804
        %835 = vmatpush.xpose.msra.mxu0 %v801
        %836 = vmatpush.xpose.msra.mxu0 %v798
        %837 = vmatpush.xpose.msra.mxu0 %v795
        %838 = vmatpush.xpose.msra.mxu0 %v792
        %839 = vmatpush.xpose.msra.mxu0 %v789
        %840 = vmatpush.xpose.msra.mxu0 %v786
        %841 = vmatpush.xpose.msra.mxu0 %v783
        %842 = vmatpush.xpose.msra.mxu0 %v780
        %843 = vmatmul.f32.gmra.mxu0 %v396
        %v844 = vpop.f32.mrf.mxu0
        %v845 = vadd.f32 0.0, %v844
        %846 = vmatmul.f32.gmra.mxu0 %v399
        %v847 = vpop.f32.mrf.mxu0
        %v848 = vadd.f32 0.0, %v847
        %849 = vmatmul.f32.gmra.mxu0 %v402
        %v850 = vpop.f32.mrf.mxu0
        %v851 = vadd.f32 0.0, %v850
        %852 = vmatmul.f32.gmra.mxu0 %v405
        %v853 = vpop.f32.mrf.mxu0
        %v854 = vadd.f32 0.0, %v853
        %855 = vmatmul.f32.gmra.mxu0 %v408
        %v856 = vpop.f32.mrf.mxu0
        %v857 = vadd.f32 0.0, %v856
        %858 = vmatmul.f32.gmra.mxu0 %v411
        %v859 = vpop.f32.mrf.mxu0
        %v860 = vadd.f32 0.0, %v859
        %861 = vmatmul.f32.gmra.mxu0 %v414
        %v862 = vpop.f32.mrf.mxu0
        %v863 = vadd.f32 0.0, %v862
        %864 = vmatmul.f32.gmra.mxu0 %v417
        %v865 = vpop.f32.mrf.mxu0
        %v866 = vadd.f32 0.0, %v865
        %867 = vmatmul.f32.gmra.mxu0 %v420
        %v868 = vpop.f32.mrf.mxu0
        %v869 = vadd.f32 0.0, %v868
        %870 = vmatmul.f32.gmra.mxu0 %v423
        %v871 = vpop.f32.mrf.mxu0
        %v872 = vadd.f32 0.0, %v871
        %873 = vmatmul.f32.gmra.mxu0 %v426
        %v874 = vpop.f32.mrf.mxu0
        %v875 = vadd.f32 0.0, %v874
        %876 = vmatmul.f32.gmra.mxu0 %v429
        %v877 = vpop.f32.mrf.mxu0
        %v878 = vadd.f32 0.0, %v877
        %879 = vmatmul.f32.gmra.mxu0 %v432
        %v880 = vpop.f32.mrf.mxu0
        %v881 = vadd.f32 0.0, %v880
        %882 = vmatmul.f32.gmra.mxu0 %v435
        %v883 = vpop.f32.mrf.mxu0
        %v884 = vadd.f32 0.0, %v883
        %885 = vmatmul.f32.gmra.mxu0 %v438
        %v886 = vpop.f32.mrf.mxu0
        %v887 = vadd.f32 0.0, %v886
        %888 = vmatmul.f32.gmra.mxu0 %v441
        %v889 = vpop.f32.mrf.mxu0
        %v890 = vadd.f32 0.0, %v889
        %891 = vmatmul.f32.gmra.mxu0 %v444
        %v892 = vpop.f32.mrf.mxu0
        %v893 = vadd.f32 0.0, %v892
        %894 = vmatmul.f32.gmra.mxu0 %v447
        %v895 = vpop.f32.mrf.mxu0
        %v896 = vadd.f32 0.0, %v895
        %897 = vmatmul.f32.gmra.mxu0 %v450
        %v898 = vpop.f32.mrf.mxu0
        %v899 = vadd.f32 0.0, %v898
        %900 = vmatmul.f32.gmra.mxu0 %v453
        %v901 = vpop.f32.mrf.mxu0
        %v902 = vadd.f32 0.0, %v901
        %903 = vmatmul.f32.gmra.mxu0 %v456
        %v904 = vpop.f32.mrf.mxu0
        %v905 = vadd.f32 0.0, %v904
        %906 = vmatmul.f32.gmra.mxu0 %v459
        %v907 = vpop.f32.mrf.mxu0
        %v908 = vadd.f32 0.0, %v907
        %909 = vmatmul.f32.gmra.mxu0 %v462
        %v910 = vpop.f32.mrf.mxu0
        %v911 = vadd.f32 0.0, %v910
        %912 = vmatmul.f32.gmra.mxu0 %v465
        %v913 = vpop.f32.mrf.mxu0
        %v914 = vadd.f32 0.0, %v913
        %915 = vmatmul.f32.gmra.mxu0 %v468
        %v916 = vpop.f32.mrf.mxu0
        %v917 = vadd.f32 0.0, %v916
        %918 = vmatmul.f32.gmra.mxu0 %v471
        %v919 = vpop.f32.mrf.mxu0
        %v920 = vadd.f32 0.0, %v919
        %921 = vmatmul.f32.gmra.mxu0 %v474
        %v922 = vpop.f32.mrf.mxu0
        %v923 = vadd.f32 0.0, %v922
        %924 = vmatmul.f32.gmra.mxu0 %v477
        %v925 = vpop.f32.mrf.mxu0
        %v926 = vadd.f32 0.0, %v925
        %927 = vmatmul.f32.gmra.mxu0 %v480
        %v928 = vpop.f32.mrf.mxu0
        %v929 = vadd.f32 0.0, %v928
        %930 = vmatmul.f32.gmra.mxu0 %v483
        %v931 = vpop.f32.mrf.mxu0
        %v932 = vadd.f32 0.0, %v931
        %933 = vmatmul.f32.gmra.mxu0 %v486
        %v934 = vpop.f32.mrf.mxu0
        %v935 = vadd.f32 0.0, %v934
        %936 = vmatmul.f32.gmra.mxu0 %v489
        %v937 = vpop.f32.mrf.mxu0
        %v938 = vadd.f32 0.0, %v937
        %939 = vmatmul.f32.gmra.mxu0 %v492
        %v940 = vpop.f32.mrf.mxu0
        %v941 = vadd.f32 0.0, %v940
        %942 = vmatmul.f32.gmra.mxu0 %v495
        %v943 = vpop.f32.mrf.mxu0
        %v944 = vadd.f32 0.0, %v943
        %945 = vmatmul.f32.gmra.mxu0 %v498
        %v946 = vpop.f32.mrf.mxu0
        %v947 = vadd.f32 0.0, %v946
        %948 = vmatmul.f32.gmra.mxu0 %v501
        %v949 = vpop.f32.mrf.mxu0
        %v950 = vadd.f32 0.0, %v949
        %951 = vmatmul.f32.gmra.mxu0 %v504
        %v952 = vpop.f32.mrf.mxu0
        %v953 = vadd.f32 0.0, %v952
        %954 = vmatmul.f32.gmra.mxu0 %v507
        %v955 = vpop.f32.mrf.mxu0
        %v956 = vadd.f32 0.0, %v955
        %957 = vmatmul.f32.gmra.mxu0 %v510
        %v958 = vpop.f32.mrf.mxu0
        %v959 = vadd.f32 0.0, %v958
        %960 = vmatmul.f32.gmra.mxu0 %v513
        %v961 = vpop.f32.mrf.mxu0
        %v962 = vadd.f32 0.0, %v961
        %963 = vmatmul.f32.gmra.mxu0 %v516
        %v964 = vpop.f32.mrf.mxu0
        %v965 = vadd.f32 0.0, %v964
        %966 = vmatmul.f32.gmra.mxu0 %v519
        %v967 = vpop.f32.mrf.mxu0
        %v968 = vadd.f32 0.0, %v967
        %969 = vmatmul.f32.gmra.mxu0 %v522
        %v970 = vpop.f32.mrf.mxu0
        %v971 = vadd.f32 0.0, %v970
        %972 = vmatmul.f32.gmra.mxu0 %v525
        %v973 = vpop.f32.mrf.mxu0
        %v974 = vadd.f32 0.0, %v973
        %975 = vmatmul.f32.gmra.mxu0 %v528
        %v976 = vpop.f32.mrf.mxu0
        %v977 = vadd.f32 0.0, %v976
        %978 = vmatmul.f32.gmra.mxu0 %v531
        %v979 = vpop.f32.mrf.mxu0
        %v980 = vadd.f32 0.0, %v979
        %981 = vmatmul.f32.gmra.mxu0 %v534
        %v982 = vpop.f32.mrf.mxu0
        %v983 = vadd.f32 0.0, %v982
        %984 = vmatmul.f32.gmra.mxu0 %v537
        %v985 = vpop.f32.mrf.mxu0
        %v986 = vadd.f32 0.0, %v985
        %987 = vmatmul.f32.gmra.mxu0 %v540
        %v988 = vpop.f32.mrf.mxu0
        %v989 = vadd.f32 0.0, %v988
        %990 = vmatmul.f32.gmra.mxu0 %v543
        %v991 = vpop.f32.mrf.mxu0
        %v992 = vadd.f32 0.0, %v991
        %993 = vmatmul.f32.gmra.mxu0 %v546
        %v994 = vpop.f32.mrf.mxu0
        %v995 = vadd.f32 0.0, %v994
        %996 = vmatmul.f32.gmra.mxu0 %v549
        %v997 = vpop.f32.mrf.mxu0
        %v998 = vadd.f32 0.0, %v997
        %999 = vmatmul.f32.gmra.mxu0 %v552
        %v1000 = vpop.f32.mrf.mxu0
        %v1001 = vadd.f32 0.0, %v1000
        %1002 = vmatmul.f32.gmra.mxu0 %v555
        %v1003 = vpop.f32.mrf.mxu0
        %v1004 = vadd.f32 0.0, %v1003
        %1005 = vmatmul.f32.gmra.mxu0 %v558
        %v1006 = vpop.f32.mrf.mxu0
        %v1007 = vadd.f32 0.0, %v1006
        %1008 = vmatmul.f32.gmra.mxu0 %v561
        %v1009 = vpop.f32.mrf.mxu0
        %v1010 = vadd.f32 0.0, %v1009
        %1011 = vmatmul.f32.gmra.mxu0 %v564
        %v1012 = vpop.f32.mrf.mxu0
        %v1013 = vadd.f32 0.0, %v1012
        %1014 = vmatmul.f32.gmra.mxu0 %v567
        %v1015 = vpop.f32.mrf.mxu0
        %v1016 = vadd.f32 0.0, %v1015
        %1017 = vmatmul.f32.gmra.mxu0 %v570
        %v1018 = vpop.f32.mrf.mxu0
        %v1019 = vadd.f32 0.0, %v1018
        %1020 = vmatmul.f32.gmra.mxu0 %v573
        %v1021 = vpop.f32.mrf.mxu0
        %v1022 = vadd.f32 0.0, %v1021
        %1023 = vmatmul.f32.gmra.mxu0 %v576
        %v1024 = vpop.f32.mrf.mxu0
        %v1025 = vadd.f32 0.0, %v1024
        %1026 = vmatmul.f32.gmra.mxu0 %v579
        %v1027 = vpop.f32.mrf.mxu0
        %v1028 = vadd.f32 0.0, %v1027
        %1029 = vmatmul.f32.gmra.mxu0 %v582
        %v1030 = vpop.f32.mrf.mxu0
        %v1031 = vadd.f32 0.0, %v1030
        %1032 = vmatmul.f32.gmra.mxu0 %v585
        %v1033 = vpop.f32.mrf.mxu0
        %v1034 = vadd.f32 0.0, %v1033
        %1035 = vmatmul.f32.gmra.mxu0 %v588
        %v1036 = vpop.f32.mrf.mxu0
        %v1037 = vadd.f32 0.0, %v1036
        %1038 = vmatmul.f32.gmra.mxu0 %v591
        %v1039 = vpop.f32.mrf.mxu0
        %v1040 = vadd.f32 0.0, %v1039
        %1041 = vmatmul.f32.gmra.mxu0 %v594
        %v1042 = vpop.f32.mrf.mxu0
        %v1043 = vadd.f32 0.0, %v1042
        %1044 = vmatmul.f32.gmra.mxu0 %v597
        %v1045 = vpop.f32.mrf.mxu0
        %v1046 = vadd.f32 0.0, %v1045
        %1047 = vmatmul.f32.gmra.mxu0 %v600
        %v1048 = vpop.f32.mrf.mxu0
        %v1049 = vadd.f32 0.0, %v1048
        %1050 = vmatmul.f32.gmra.mxu0 %v603
        %v1051 = vpop.f32.mrf.mxu0
        %v1052 = vadd.f32 0.0, %v1051
        %1053 = vmatmul.f32.gmra.mxu0 %v606
        %v1054 = vpop.f32.mrf.mxu0
        %v1055 = vadd.f32 0.0, %v1054
        %1056 = vmatmul.f32.gmra.mxu0 %v609
        %v1057 = vpop.f32.mrf.mxu0
        %v1058 = vadd.f32 0.0, %v1057
        %1059 = vmatmul.f32.gmra.mxu0 %v612
        %v1060 = vpop.f32.mrf.mxu0
        %v1061 = vadd.f32 0.0, %v1060
        %1062 = vmatmul.f32.gmra.mxu0 %v615
        %v1063 = vpop.f32.mrf.mxu0
        %v1064 = vadd.f32 0.0, %v1063
        %1065 = vmatmul.f32.gmra.mxu0 %v618
        %v1066 = vpop.f32.mrf.mxu0
        %v1067 = vadd.f32 0.0, %v1066
        %1068 = vmatmul.f32.gmra.mxu0 %v621
        %v1069 = vpop.f32.mrf.mxu0
        %v1070 = vadd.f32 0.0, %v1069
        %1071 = vmatmul.f32.gmra.mxu0 %v624
        %v1072 = vpop.f32.mrf.mxu0
        %v1073 = vadd.f32 0.0, %v1072
        %1074 = vmatmul.f32.gmra.mxu0 %v627
        %v1075 = vpop.f32.mrf.mxu0
        %v1076 = vadd.f32 0.0, %v1075
        %1077 = vmatmul.f32.gmra.mxu0 %v630
        %v1078 = vpop.f32.mrf.mxu0
        %v1079 = vadd.f32 0.0, %v1078
        %1080 = vmatmul.f32.gmra.mxu0 %v633
        %v1081 = vpop.f32.mrf.mxu0
        %v1082 = vadd.f32 0.0, %v1081
        %1083 = vmatmul.f32.gmra.mxu0 %v636
        %v1084 = vpop.f32.mrf.mxu0
        %v1085 = vadd.f32 0.0, %v1084
        %1086 = vmatmul.f32.gmra.mxu0 %v639
        %v1087 = vpop.f32.mrf.mxu0
        %v1088 = vadd.f32 0.0, %v1087
        %1089 = vmatmul.f32.gmra.mxu0 %v642
        %v1090 = vpop.f32.mrf.mxu0
        %v1091 = vadd.f32 0.0, %v1090
        %1092 = vmatmul.f32.gmra.mxu0 %v645
        %v1093 = vpop.f32.mrf.mxu0
        %v1094 = vadd.f32 0.0, %v1093
        %1095 = vmatmul.f32.gmra.mxu0 %v648
        %v1096 = vpop.f32.mrf.mxu0
        %v1097 = vadd.f32 0.0, %v1096
        %1098 = vmatmul.f32.gmra.mxu0 %v651
        %v1099 = vpop.f32.mrf.mxu0
        %v1100 = vadd.f32 0.0, %v1099
        %1101 = vmatmul.f32.gmra.mxu0 %v654
        %v1102 = vpop.f32.mrf.mxu0
        %v1103 = vadd.f32 0.0, %v1102
        %1104 = vmatmul.f32.gmra.mxu0 %v657
        %v1105 = vpop.f32.mrf.mxu0
        %v1106 = vadd.f32 0.0, %v1105
        %1107 = vmatmul.f32.gmra.mxu0 %v660
        %v1108 = vpop.f32.mrf.mxu0
        %v1109 = vadd.f32 0.0, %v1108
        %1110 = vmatmul.f32.gmra.mxu0 %v663
        %v1111 = vpop.f32.mrf.mxu0
        %v1112 = vadd.f32 0.0, %v1111
        %1113 = vmatmul.f32.gmra.mxu0 %v666
        %v1114 = vpop.f32.mrf.mxu0
        %v1115 = vadd.f32 0.0, %v1114
        %1116 = vmatmul.f32.gmra.mxu0 %v669
        %v1117 = vpop.f32.mrf.mxu0
        %v1118 = vadd.f32 0.0, %v1117
        %1119 = vmatmul.f32.gmra.mxu0 %v672
        %v1120 = vpop.f32.mrf.mxu0
        %v1121 = vadd.f32 0.0, %v1120
        %1122 = vmatmul.f32.gmra.mxu0 %v675
        %v1123 = vpop.f32.mrf.mxu0
        %v1124 = vadd.f32 0.0, %v1123
        %1125 = vmatmul.f32.gmra.mxu0 %v678
        %v1126 = vpop.f32.mrf.mxu0
        %v1127 = vadd.f32 0.0, %v1126
        %1128 = vmatmul.f32.gmra.mxu0 %v681
        %v1129 = vpop.f32.mrf.mxu0
        %v1130 = vadd.f32 0.0, %v1129
        %1131 = vmatmul.f32.gmra.mxu0 %v684
        %v1132 = vpop.f32.mrf.mxu0
        %v1133 = vadd.f32 0.0, %v1132
        %1134 = vmatmul.f32.gmra.mxu0 %v687
        %v1135 = vpop.f32.mrf.mxu0
        %v1136 = vadd.f32 0.0, %v1135
        %1137 = vmatmul.f32.gmra.mxu0 %v690
        %v1138 = vpop.f32.mrf.mxu0
        %v1139 = vadd.f32 0.0, %v1138
        %1140 = vmatmul.f32.gmra.mxu0 %v693
        %v1141 = vpop.f32.mrf.mxu0
        %v1142 = vadd.f32 0.0, %v1141
        %1143 = vmatmul.f32.gmra.mxu0 %v696
        %v1144 = vpop.f32.mrf.mxu0
        %v1145 = vadd.f32 0.0, %v1144
        %1146 = vmatmul.f32.gmra.mxu0 %v699
        %v1147 = vpop.f32.mrf.mxu0
        %v1148 = vadd.f32 0.0, %v1147
        %1149 = vmatmul.f32.gmra.mxu0 %v702
        %v1150 = vpop.f32.mrf.mxu0
        %v1151 = vadd.f32 0.0, %v1150
        %1152 = vmatmul.f32.gmra.mxu0 %v705
        %v1153 = vpop.f32.mrf.mxu0
        %v1154 = vadd.f32 0.0, %v1153
        %1155 = vmatmul.f32.gmra.mxu0 %v708
        %v1156 = vpop.f32.mrf.mxu0
        %v1157 = vadd.f32 0.0, %v1156
        %1158 = vmatmul.f32.gmra.mxu0 %v711
        %v1159 = vpop.f32.mrf.mxu0
        %v1160 = vadd.f32 0.0, %v1159
        %1161 = vmatmul.f32.gmra.mxu0 %v714
        %v1162 = vpop.f32.mrf.mxu0
        %v1163 = vadd.f32 0.0, %v1162
        %1164 = vmatmul.f32.gmra.mxu0 %v717
        %v1165 = vpop.f32.mrf.mxu0
        %v1166 = vadd.f32 0.0, %v1165
        %1167 = vmatmul.f32.gmra.mxu0 %v720
        %v1168 = vpop.f32.mrf.mxu0
        %v1169 = vadd.f32 0.0, %v1168
        %1170 = vmatmul.f32.gmra.mxu0 %v723
        %v1171 = vpop.f32.mrf.mxu0
        %v1172 = vadd.f32 0.0, %v1171
        %1173 = vmatmul.f32.gmra.mxu0 %v726
        %v1174 = vpop.f32.mrf.mxu0
        %v1175 = vadd.f32 0.0, %v1174
        %1176 = vmatmul.f32.gmra.mxu0 %v729
        %v1177 = vpop.f32.mrf.mxu0
        %v1178 = vadd.f32 0.0, %v1177
        %1179 = vmatmul.f32.gmra.mxu0 %v732
        %v1180 = vpop.f32.mrf.mxu0
        %v1181 = vadd.f32 0.0, %v1180
        %1182 = vmatmul.f32.gmra.mxu0 %v735
        %v1183 = vpop.f32.mrf.mxu0
        %v1184 = vadd.f32 0.0, %v1183
        %1185 = vmatmul.f32.gmra.mxu0 %v738
        %v1186 = vpop.f32.mrf.mxu0
        %v1187 = vadd.f32 0.0, %v1186
        %1188 = vmatmul.f32.gmra.mxu0 %v741
        %v1189 = vpop.f32.mrf.mxu0
        %v1190 = vadd.f32 0.0, %v1189
        %1191 = vmatmul.f32.gmra.mxu0 %v744
        %v1192 = vpop.f32.mrf.mxu0
        %v1193 = vadd.f32 0.0, %v1192
        %1194 = vmatmul.f32.gmra.mxu0 %v747
        %v1195 = vpop.f32.mrf.mxu0
        %v1196 = vadd.f32 0.0, %v1195
        %1197 = vmatmul.f32.gmra.mxu0 %v750
        %v1198 = vpop.f32.mrf.mxu0
        %v1199 = vadd.f32 0.0, %v1198
        %1200 = vmatmul.f32.gmra.mxu0 %v753
        %v1201 = vpop.f32.mrf.mxu0
        %v1202 = vadd.f32 0.0, %v1201
        %1203 = vmatmul.f32.gmra.mxu0 %v756
        %v1204 = vpop.f32.mrf.mxu0
        %v1205 = vadd.f32 0.0, %v1204
        %1206 = vmatmul.f32.gmra.mxu0 %v759
        %v1207 = vpop.f32.mrf.mxu0
        %v1208 = vadd.f32 0.0, %v1207
        %1209 = vmatmul.f32.gmra.mxu0 %v762
        %v1210 = vpop.f32.mrf.mxu0
        %v1211 = vadd.f32 0.0, %v1210
        %1212 = vmatmul.f32.gmra.mxu0 %v765
        %v1213 = vpop.f32.mrf.mxu0
        %v1214 = vadd.f32 0.0, %v1213
        %1215 = vmatmul.f32.gmra.mxu0 %v768
        %v1216 = vpop.f32.mrf.mxu0
        %v1217 = vadd.f32 0.0, %v1216
        %1218 = vmatmul.f32.gmra.mxu0 %v771
        %v1219 = vpop.f32.mrf.mxu0
        %v1220 = vadd.f32 0.0, %v1219
        %1221 = vmatmul.f32.gmra.mxu0 %v774
        %v1222 = vpop.f32.mrf.mxu0
        %v1223 = vadd.f32 0.0, %v1222
        %1224 = vmatmul.f32.gmra.mxu0 %v777
        %v1225 = vpop.f32.mrf.mxu0
        %v1226 = vadd.f32 0.0, %v1225
        %1227 = vdwg.mxu0
        %v1228 = vmul.f32 %v845, 2.0
        %v1229 = vmul.f32 %v848, 2.0
        %v1230 = vmul.f32 %v851, 2.0
        %v1231 = vmul.f32 %v854, 2.0
        %v1232 = vmul.f32 %v857, 2.0
        %v1233 = vmul.f32 %v860, 2.0
        %v1234 = vmul.f32 %v863, 2.0
        %v1235 = vmul.f32 %v866, 2.0
        %v1236 = vmul.f32 %v869, 2.0
        %v1237 = vmul.f32 %v872, 2.0
        %v1238 = vmul.f32 %v875, 2.0
        %v1239 = vmul.f32 %v878, 2.0
        %v1240 = vmul.f32 %v881, 2.0
        %v1241 = vmul.f32 %v884, 2.0
        %v1242 = vmul.f32 %v887, 2.0
        %v1243 = vmul.f32 %v890, 2.0
        %v1244 = vmul.f32 %v893, 2.0
        %v1245 = vmul.f32 %v896, 2.0
        %v1246 = vmul.f32 %v899, 2.0
        %v1247 = vmul.f32 %v902, 2.0
        %v1248 = vmul.f32 %v905, 2.0
        %v1249 = vmul.f32 %v908, 2.0
        %v1250 = vmul.f32 %v911, 2.0
        %v1251 = vmul.f32 %v914, 2.0
        %v1252 = vmul.f32 %v917, 2.0
        %v1253 = vmul.f32 %v920, 2.0
        %v1254 = vmul.f32 %v923, 2.0
        %v1255 = vmul.f32 %v926, 2.0
        %v1256 = vmul.f32 %v929, 2.0
        %v1257 = vmul.f32 %v932, 2.0
        %v1258 = vmul.f32 %v935, 2.0
        %v1259 = vmul.f32 %v938, 2.0
        %v1260 = vmul.f32 %v941, 2.0
        %v1261 = vmul.f32 %v944, 2.0
        %v1262 = vmul.f32 %v947, 2.0
        %v1263 = vmul.f32 %v950, 2.0
        %v1264 = vmul.f32 %v953, 2.0
        %v1265 = vmul.f32 %v956, 2.0
        %v1266 = vmul.f32 %v959, 2.0
        %v1267 = vmul.f32 %v962, 2.0
        %v1268 = vmul.f32 %v965, 2.0
        %v1269 = vmul.f32 %v968, 2.0
        %v1270 = vmul.f32 %v971, 2.0
        %v1271 = vmul.f32 %v974, 2.0
        %v1272 = vmul.f32 %v977, 2.0
        %v1273 = vmul.f32 %v980, 2.0
        %v1274 = vmul.f32 %v983, 2.0
        %v1275 = vmul.f32 %v986, 2.0
        %v1276 = vmul.f32 %v989, 2.0
        %v1277 = vmul.f32 %v992, 2.0
        %v1278 = vmul.f32 %v995, 2.0
        %v1279 = vmul.f32 %v998, 2.0
        %v1280 = vmul.f32 %v1001, 2.0
        %v1281 = vmul.f32 %v1004, 2.0
        %v1282 = vmul.f32 %v1007, 2.0
        %v1283 = vmul.f32 %v1010, 2.0
        %v1284 = vmul.f32 %v1013, 2.0
        %v1285 = vmul.f32 %v1016, 2.0
        %v1286 = vmul.f32 %v1019, 2.0
        %v1287 = vmul.f32 %v1022, 2.0
        %v1288 = vmul.f32 %v1025, 2.0
        %v1289 = vmul.f32 %v1028, 2.0
        %v1290 = vmul.f32 %v1031, 2.0
        %v1291 = vmul.f32 %v1034, 2.0
        %v1292 = vmul.f32 %v1037, 2.0
        %v1293 = vmul.f32 %v1040, 2.0
        %v1294 = vmul.f32 %v1043, 2.0
        %v1295 = vmul.f32 %v1046, 2.0
        %v1296 = vmul.f32 %v1049, 2.0
        %v1297 = vmul.f32 %v1052, 2.0
        %v1298 = vmul.f32 %v1055, 2.0
        %v1299 = vmul.f32 %v1058, 2.0
        %v1300 = vmul.f32 %v1061, 2.0
        %v1301 = vmul.f32 %v1064, 2.0
        %v1302 = vmul.f32 %v1067, 2.0
        %v1303 = vmul.f32 %v1070, 2.0
        %v1304 = vmul.f32 %v1073, 2.0
        %v1305 = vmul.f32 %v1076, 2.0
        %v1306 = vmul.f32 %v1079, 2.0
        %v1307 = vmul.f32 %v1082, 2.0
        %v1308 = vmul.f32 %v1085, 2.0
        %v1309 = vmul.f32 %v1088, 2.0
        %v1310 = vmul.f32 %v1091, 2.0
        %v1311 = vmul.f32 %v1094, 2.0
        %v1312 = vmul.f32 %v1097, 2.0
        %v1313 = vmul.f32 %v1100, 2.0
        %v1314 = vmul.f32 %v1103, 2.0
        %v1315 = vmul.f32 %v1106, 2.0
        %v1316 = vmul.f32 %v1109, 2.0
        %v1317 = vmul.f32 %v1112, 2.0
        %v1318 = vmul.f32 %v1115, 2.0
        %v1319 = vmul.f32 %v1118, 2.0
        %v1320 = vmul.f32 %v1121, 2.0
        %v1321 = vmul.f32 %v1124, 2.0
        %v1322 = vmul.f32 %v1127, 2.0
        %v1323 = vmul.f32 %v1130, 2.0
        %v1324 = vmul.f32 %v1133, 2.0
        %v1325 = vmul.f32 %v1136, 2.0
        %v1326 = vmul.f32 %v1139, 2.0
        %v1327 = vmul.f32 %v1142, 2.0
        %v1328 = vmul.f32 %v1145, 2.0
        %v1329 = vmul.f32 %v1148, 2.0
        %v1330 = vmul.f32 %v1151, 2.0
        %v1331 = vmul.f32 %v1154, 2.0
        %v1332 = vmul.f32 %v1157, 2.0
        %v1333 = vmul.f32 %v1160, 2.0
        %v1334 = vmul.f32 %v1163, 2.0
        %v1335 = vmul.f32 %v1166, 2.0
        %v1336 = vmul.f32 %v1169, 2.0
        %v1337 = vmul.f32 %v1172, 2.0
        %v1338 = vmul.f32 %v1175, 2.0
        %v1339 = vmul.f32 %v1178, 2.0
        %v1340 = vmul.f32 %v1181, 2.0
        %v1341 = vmul.f32 %v1184, 2.0
        %v1342 = vmul.f32 %v1187, 2.0
        %v1343 = vmul.f32 %v1190, 2.0
        %v1344 = vmul.f32 %v1193, 2.0
        %v1345 = vmul.f32 %v1196, 2.0
        %v1346 = vmul.f32 %v1199, 2.0
        %v1347 = vmul.f32 %v1202, 2.0
        %v1348 = vmul.f32 %v1205, 2.0
        %v1349 = vmul.f32 %v1208, 2.0
        %v1350 = vmul.f32 %v1211, 2.0
        %v1351 = vmul.f32 %v1214, 2.0
        %v1352 = vmul.f32 %v1217, 2.0
        %v1353 = vmul.f32 %v1220, 2.0
        %v1354 = vmul.f32 %v1223, 2.0
        %v1355 = vmul.f32 %v1226, 2.0
        %v1357 = vperm.slane %v393, 0
        %v1359 = vsub.f32 %v1357, %v1228
        %v1360 = vsub.f32 %v1357, %v1229
        %v1361 = vsub.f32 %v1357, %v1230
        %v1362 = vsub.f32 %v1357, %v1231
        %v1363 = vsub.f32 %v1357, %v1232
        %v1364 = vsub.f32 %v1357, %v1233
        %v1365 = vsub.f32 %v1357, %v1234
        %v1366 = vsub.f32 %v1357, %v1235
        %v1367 = vsub.f32 %v1357, %v1236
        %v1368 = vsub.f32 %v1357, %v1237
        %v1369 = vsub.f32 %v1357, %v1238
        %v1370 = vsub.f32 %v1357, %v1239
        %v1371 = vsub.f32 %v1357, %v1240
        %v1372 = vsub.f32 %v1357, %v1241
        %v1373 = vsub.f32 %v1357, %v1242
        %v1374 = vsub.f32 %v1357, %v1243
        %v1375 = vsub.f32 %v1357, %v1244
        %v1376 = vsub.f32 %v1357, %v1245
        %v1377 = vsub.f32 %v1357, %v1246
        %v1378 = vsub.f32 %v1357, %v1247
        %v1379 = vsub.f32 %v1357, %v1248
        %v1380 = vsub.f32 %v1357, %v1249
        %v1381 = vsub.f32 %v1357, %v1250
        %v1382 = vsub.f32 %v1357, %v1251
        %v1383 = vsub.f32 %v1357, %v1252
        %v1384 = vsub.f32 %v1357, %v1253
        %v1385 = vsub.f32 %v1357, %v1254
        %v1386 = vsub.f32 %v1357, %v1255
        %v1387 = vsub.f32 %v1357, %v1256
        %v1388 = vsub.f32 %v1357, %v1257
        %v1389 = vsub.f32 %v1357, %v1258
        %v1390 = vsub.f32 %v1357, %v1259
        %v1391 = vsub.f32 %v1357, %v1260
        %v1392 = vsub.f32 %v1357, %v1261
        %v1393 = vsub.f32 %v1357, %v1262
        %v1394 = vsub.f32 %v1357, %v1263
        %v1395 = vsub.f32 %v1357, %v1264
        %v1396 = vsub.f32 %v1357, %v1265
        %v1397 = vsub.f32 %v1357, %v1266
        %v1398 = vsub.f32 %v1357, %v1267
        %v1399 = vsub.f32 %v1357, %v1268
        %v1400 = vsub.f32 %v1357, %v1269
        %v1401 = vsub.f32 %v1357, %v1270
        %v1402 = vsub.f32 %v1357, %v1271
        %v1403 = vsub.f32 %v1357, %v1272
        %v1404 = vsub.f32 %v1357, %v1273
        %v1405 = vsub.f32 %v1357, %v1274
        %v1406 = vsub.f32 %v1357, %v1275
        %v1407 = vsub.f32 %v1357, %v1276
        %v1408 = vsub.f32 %v1357, %v1277
        %v1409 = vsub.f32 %v1357, %v1278
        %v1410 = vsub.f32 %v1357, %v1279
        %v1411 = vsub.f32 %v1357, %v1280
        %v1412 = vsub.f32 %v1357, %v1281
        %v1413 = vsub.f32 %v1357, %v1282
        %v1414 = vsub.f32 %v1357, %v1283
        %v1415 = vsub.f32 %v1357, %v1284
        %v1416 = vsub.f32 %v1357, %v1285
        %v1417 = vsub.f32 %v1357, %v1286
        %v1418 = vsub.f32 %v1357, %v1287
        %v1419 = vsub.f32 %v1357, %v1288
        %v1420 = vsub.f32 %v1357, %v1289
        %v1421 = vsub.f32 %v1357, %v1290
        %v1422 = vsub.f32 %v1357, %v1291
        %v1423 = vsub.f32 %v1357, %v1292
        %v1424 = vsub.f32 %v1357, %v1293
        %v1425 = vsub.f32 %v1357, %v1294
        %v1426 = vsub.f32 %v1357, %v1295
        %v1427 = vsub.f32 %v1357, %v1296
        %v1428 = vsub.f32 %v1357, %v1297
        %v1429 = vsub.f32 %v1357, %v1298
        %v1430 = vsub.f32 %v1357, %v1299
        %v1431 = vsub.f32 %v1357, %v1300
        %v1432 = vsub.f32 %v1357, %v1301
        %v1433 = vsub.f32 %v1357, %v1302
        %v1434 = vsub.f32 %v1357, %v1303
        %v1435 = vsub.f32 %v1357, %v1304
        %v1436 = vsub.f32 %v1357, %v1305
        %v1437 = vsub.f32 %v1357, %v1306
        %v1438 = vsub.f32 %v1357, %v1307
        %v1439 = vsub.f32 %v1357, %v1308
        %v1440 = vsub.f32 %v1357, %v1309
        %v1441 = vsub.f32 %v1357, %v1310
        %v1442 = vsub.f32 %v1357, %v1311
        %v1443 = vsub.f32 %v1357, %v1312
        %v1444 = vsub.f32 %v1357, %v1313
        %v1445 = vsub.f32 %v1357, %v1314
        %v1446 = vsub.f32 %v1357, %v1315
        %v1447 = vsub.f32 %v1357, %v1316
        %v1448 = vsub.f32 %v1357, %v1317
        %v1449 = vsub.f32 %v1357, %v1318
        %v1450 = vsub.f32 %v1357, %v1319
        %v1451 = vsub.f32 %v1357, %v1320
        %v1452 = vsub.f32 %v1357, %v1321
        %v1453 = vsub.f32 %v1357, %v1322
        %v1454 = vsub.f32 %v1357, %v1323
        %v1455 = vsub.f32 %v1357, %v1324
        %v1456 = vsub.f32 %v1357, %v1325
        %v1457 = vsub.f32 %v1357, %v1326
        %v1458 = vsub.f32 %v1357, %v1327
        %v1459 = vsub.f32 %v1357, %v1328
        %v1460 = vsub.f32 %v1357, %v1329
        %v1461 = vsub.f32 %v1357, %v1330
        %v1462 = vsub.f32 %v1357, %v1331
        %v1463 = vsub.f32 %v1357, %v1332
        %v1464 = vsub.f32 %v1357, %v1333
        %v1465 = vsub.f32 %v1357, %v1334
        %v1466 = vsub.f32 %v1357, %v1335
        %v1467 = vsub.f32 %v1357, %v1336
        %v1468 = vsub.f32 %v1357, %v1337
        %v1469 = vsub.f32 %v1357, %v1338
        %v1470 = vsub.f32 %v1357, %v1339
        %v1471 = vsub.f32 %v1357, %v1340
        %v1472 = vsub.f32 %v1357, %v1341
        %v1473 = vsub.f32 %v1357, %v1342
        %v1474 = vsub.f32 %v1357, %v1343
        %v1475 = vsub.f32 %v1357, %v1344
        %v1476 = vsub.f32 %v1357, %v1345
        %v1477 = vsub.f32 %v1357, %v1346
        %v1478 = vsub.f32 %v1357, %v1347
        %v1479 = vsub.f32 %v1357, %v1348
        %v1480 = vsub.f32 %v1357, %v1349
        %v1481 = vsub.f32 %v1357, %v1350
        %v1482 = vsub.f32 %v1357, %v1351
        %v1483 = vsub.f32 %v1357, %v1352
        %v1484 = vsub.f32 %v1357, %v1353
        %v1485 = vsub.f32 %v1357, %v1354
        %v1486 = vsub.f32 %v1357, %v1355
        %1487 = vmin.index.xlane.f32.xlu0 %v1359
        %v1488 = vpop.xlane.xlu0 %1487
        %1489 = vmin.index.xlane.f32.xlu0 %v1360
        %v1490 = vpop.xlane.xlu0 %1489
        %1491 = vmin.index.xlane.f32.xlu0 %v1361
        %v1492 = vpop.xlane.xlu0 %1491
        %1493 = vmin.index.xlane.f32.xlu0 %v1362
        %v1494 = vpop.xlane.xlu0 %1493
        %1495 = vmin.index.xlane.f32.xlu0 %v1363
        %v1496 = vpop.xlane.xlu0 %1495
        %1497 = vmin.index.xlane.f32.xlu0 %v1364
        %v1498 = vpop.xlane.xlu0 %1497
        %1499 = vmin.index.xlane.f32.xlu0 %v1365
        %v1500 = vpop.xlane.xlu0 %1499
        %1501 = vmin.index.xlane.f32.xlu0 %v1366
        %v1502 = vpop.xlane.xlu0 %1501
        %1503 = vmin.index.xlane.f32.xlu0 %v1367
        %v1504 = vpop.xlane.xlu0 %1503
        %1505 = vmin.index.xlane.f32.xlu0 %v1368
        %v1506 = vpop.xlane.xlu0 %1505
        %1507 = vmin.index.xlane.f32.xlu0 %v1369
        %v1508 = vpop.xlane.xlu0 %1507
        %1509 = vmin.index.xlane.f32.xlu0 %v1370
        %v1510 = vpop.xlane.xlu0 %1509
        %1511 = vmin.index.xlane.f32.xlu0 %v1371
        %v1512 = vpop.xlane.xlu0 %1511
        %1513 = vmin.index.xlane.f32.xlu0 %v1372
        %v1514 = vpop.xlane.xlu0 %1513
        %1515 = vmin.index.xlane.f32.xlu0 %v1373
        %v1516 = vpop.xlane.xlu0 %1515
        %1517 = vmin.index.xlane.f32.xlu0 %v1374
        %v1518 = vpop.xlane.xlu0 %1517
        %1519 = vmin.index.xlane.f32.xlu0 %v1375
        %v1520 = vpop.xlane.xlu0 %1519
        %1521 = vmin.index.xlane.f32.xlu0 %v1376
        %v1522 = vpop.xlane.xlu0 %1521
        %1523 = vmin.index.xlane.f32.xlu0 %v1377
        %v1524 = vpop.xlane.xlu0 %1523
        %1525 = vmin.index.xlane.f32.xlu0 %v1378
        %v1526 = vpop.xlane.xlu0 %1525
        %1527 = vmin.index.xlane.f32.xlu0 %v1379
        %v1528 = vpop.xlane.xlu0 %1527
        %1529 = vmin.index.xlane.f32.xlu0 %v1380
        %v1530 = vpop.xlane.xlu0 %1529
        %1531 = vmin.index.xlane.f32.xlu0 %v1381
        %v1532 = vpop.xlane.xlu0 %1531
        %1533 = vmin.index.xlane.f32.xlu0 %v1382
        %v1534 = vpop.xlane.xlu0 %1533
        %1535 = vmin.index.xlane.f32.xlu0 %v1383
        %v1536 = vpop.xlane.xlu0 %1535
        %1537 = vmin.index.xlane.f32.xlu0 %v1384
        %v1538 = vpop.xlane.xlu0 %1537
        %1539 = vmin.index.xlane.f32.xlu0 %v1385
        %v1540 = vpop.xlane.xlu0 %1539
        %1541 = vmin.index.xlane.f32.xlu0 %v1386
        %v1542 = vpop.xlane.xlu0 %1541
        %1543 = vmin.index.xlane.f32.xlu0 %v1387
        %v1544 = vpop.xlane.xlu0 %1543
        %1545 = vmin.index.xlane.f32.xlu0 %v1388
        %v1546 = vpop.xlane.xlu0 %1545
        %1547 = vmin.index.xlane.f32.xlu0 %v1389
        %v1548 = vpop.xlane.xlu0 %1547
        %1549 = vmin.index.xlane.f32.xlu0 %v1390
        %v1550 = vpop.xlane.xlu0 %1549
        %1551 = vmin.index.xlane.f32.xlu0 %v1391
        %v1552 = vpop.xlane.xlu0 %1551
        %1553 = vmin.index.xlane.f32.xlu0 %v1392
        %v1554 = vpop.xlane.xlu0 %1553
        %1555 = vmin.index.xlane.f32.xlu0 %v1393
        %v1556 = vpop.xlane.xlu0 %1555
        %1557 = vmin.index.xlane.f32.xlu0 %v1394
        %v1558 = vpop.xlane.xlu0 %1557
        %1559 = vmin.index.xlane.f32.xlu0 %v1395
        %v1560 = vpop.xlane.xlu0 %1559
        %1561 = vmin.index.xlane.f32.xlu0 %v1396
        %v1562 = vpop.xlane.xlu0 %1561
        %1563 = vmin.index.xlane.f32.xlu0 %v1397
        %v1564 = vpop.xlane.xlu0 %1563
        %1565 = vmin.index.xlane.f32.xlu0 %v1398
        %v1566 = vpop.xlane.xlu0 %1565
        %1567 = vmin.index.xlane.f32.xlu0 %v1399
        %v1568 = vpop.xlane.xlu0 %1567
        %1569 = vmin.index.xlane.f32.xlu0 %v1400
        %v1570 = vpop.xlane.xlu0 %1569
        %1571 = vmin.index.xlane.f32.xlu0 %v1401
        %v1572 = vpop.xlane.xlu0 %1571
        %1573 = vmin.index.xlane.f32.xlu0 %v1402
        %v1574 = vpop.xlane.xlu0 %1573
        %1575 = vmin.index.xlane.f32.xlu0 %v1403
        %v1576 = vpop.xlane.xlu0 %1575
        %1577 = vmin.index.xlane.f32.xlu0 %v1404
        %v1578 = vpop.xlane.xlu0 %1577
        %1579 = vmin.index.xlane.f32.xlu0 %v1405
        %v1580 = vpop.xlane.xlu0 %1579
        %1581 = vmin.index.xlane.f32.xlu0 %v1406
        %v1582 = vpop.xlane.xlu0 %1581
        %1583 = vmin.index.xlane.f32.xlu0 %v1407
        %v1584 = vpop.xlane.xlu0 %1583
        %1585 = vmin.index.xlane.f32.xlu0 %v1408
        %v1586 = vpop.xlane.xlu0 %1585
        %1587 = vmin.index.xlane.f32.xlu0 %v1409
        %v1588 = vpop.xlane.xlu0 %1587
        %1589 = vmin.index.xlane.f32.xlu0 %v1410
        %v1590 = vpop.xlane.xlu0 %1589
        %1591 = vmin.index.xlane.f32.xlu0 %v1411
        %v1592 = vpop.xlane.xlu0 %1591
        %1593 = vmin.index.xlane.f32.xlu0 %v1412
        %v1594 = vpop.xlane.xlu0 %1593
        %1595 = vmin.index.xlane.f32.xlu0 %v1413
        %v1596 = vpop.xlane.xlu0 %1595
        %1597 = vmin.index.xlane.f32.xlu0 %v1414
        %v1598 = vpop.xlane.xlu0 %1597
        %1599 = vmin.index.xlane.f32.xlu0 %v1415
        %v1600 = vpop.xlane.xlu0 %1599
        %1601 = vmin.index.xlane.f32.xlu0 %v1416
        %v1602 = vpop.xlane.xlu0 %1601
        %1603 = vmin.index.xlane.f32.xlu0 %v1417
        %v1604 = vpop.xlane.xlu0 %1603
        %1605 = vmin.index.xlane.f32.xlu0 %v1418
        %v1606 = vpop.xlane.xlu0 %1605
        %1607 = vmin.index.xlane.f32.xlu0 %v1419
        %v1608 = vpop.xlane.xlu0 %1607
        %1609 = vmin.index.xlane.f32.xlu0 %v1420
        %v1610 = vpop.xlane.xlu0 %1609
        %1611 = vmin.index.xlane.f32.xlu0 %v1421
        %v1612 = vpop.xlane.xlu0 %1611
        %1613 = vmin.index.xlane.f32.xlu0 %v1422
        %v1614 = vpop.xlane.xlu0 %1613
        %1615 = vmin.index.xlane.f32.xlu0 %v1423
        %v1616 = vpop.xlane.xlu0 %1615
        %1617 = vmin.index.xlane.f32.xlu0 %v1424
        %v1618 = vpop.xlane.xlu0 %1617
        %1619 = vmin.index.xlane.f32.xlu0 %v1425
        %v1620 = vpop.xlane.xlu0 %1619
        %1621 = vmin.index.xlane.f32.xlu0 %v1426
        %v1622 = vpop.xlane.xlu0 %1621
        %1623 = vmin.index.xlane.f32.xlu0 %v1427
        %v1624 = vpop.xlane.xlu0 %1623
        %1625 = vmin.index.xlane.f32.xlu0 %v1428
        %v1626 = vpop.xlane.xlu0 %1625
        %1627 = vmin.index.xlane.f32.xlu0 %v1429
        %v1628 = vpop.xlane.xlu0 %1627
        %1629 = vmin.index.xlane.f32.xlu0 %v1430
        %v1630 = vpop.xlane.xlu0 %1629
        %1631 = vmin.index.xlane.f32.xlu0 %v1431
        %v1632 = vpop.xlane.xlu0 %1631
        %1633 = vmin.index.xlane.f32.xlu0 %v1432
        %v1634 = vpop.xlane.xlu0 %1633
        %1635 = vmin.index.xlane.f32.xlu0 %v1433
        %v1636 = vpop.xlane.xlu0 %1635
        %1637 = vmin.index.xlane.f32.xlu0 %v1434
        %v1638 = vpop.xlane.xlu0 %1637
        %1639 = vmin.index.xlane.f32.xlu0 %v1435
        %v1640 = vpop.xlane.xlu0 %1639
        %1641 = vmin.index.xlane.f32.xlu0 %v1436
        %v1642 = vpop.xlane.xlu0 %1641
        %1643 = vmin.index.xlane.f32.xlu0 %v1437
        %v1644 = vpop.xlane.xlu0 %1643
        %1645 = vmin.index.xlane.f32.xlu0 %v1438
        %v1646 = vpop.xlane.xlu0 %1645
        %1647 = vmin.index.xlane.f32.xlu0 %v1439
        %v1648 = vpop.xlane.xlu0 %1647
        %1649 = vmin.index.xlane.f32.xlu0 %v1440
        %v1650 = vpop.xlane.xlu0 %1649
        %1651 = vmin.index.xlane.f32.xlu0 %v1441
        %v1652 = vpop.xlane.xlu0 %1651
        %1653 = vmin.index.xlane.f32.xlu0 %v1442
        %v1654 = vpop.xlane.xlu0 %1653
        %1655 = vmin.index.xlane.f32.xlu0 %v1443
        %v1656 = vpop.xlane.xlu0 %1655
        %1657 = vmin.index.xlane.f32.xlu0 %v1444
        %v1658 = vpop.xlane.xlu0 %1657
        %1659 = vmin.index.xlane.f32.xlu0 %v1445
        %v1660 = vpop.xlane.xlu0 %1659
        %1661 = vmin.index.xlane.f32.xlu0 %v1446
        %v1662 = vpop.xlane.xlu0 %1661
        %1663 = vmin.index.xlane.f32.xlu0 %v1447
        %v1664 = vpop.xlane.xlu0 %1663
        %1665 = vmin.index.xlane.f32.xlu0 %v1448
        %v1666 = vpop.xlane.xlu0 %1665
        %1667 = vmin.index.xlane.f32.xlu0 %v1449
        %v1668 = vpop.xlane.xlu0 %1667
        %1669 = vmin.index.xlane.f32.xlu0 %v1450
        %v1670 = vpop.xlane.xlu0 %1669
        %1671 = vmin.index.xlane.f32.xlu0 %v1451
        %v1672 = vpop.xlane.xlu0 %1671
        %1673 = vmin.index.xlane.f32.xlu0 %v1452
        %v1674 = vpop.xlane.xlu0 %1673
        %1675 = vmin.index.xlane.f32.xlu0 %v1453
        %v1676 = vpop.xlane.xlu0 %1675
        %1677 = vmin.index.xlane.f32.xlu0 %v1454
        %v1678 = vpop.xlane.xlu0 %1677
        %1679 = vmin.index.xlane.f32.xlu0 %v1455
        %v1680 = vpop.xlane.xlu0 %1679
        %1681 = vmin.index.xlane.f32.xlu0 %v1456
        %v1682 = vpop.xlane.xlu0 %1681
        %1683 = vmin.index.xlane.f32.xlu0 %v1457
        %v1684 = vpop.xlane.xlu0 %1683
        %1685 = vmin.index.xlane.f32.xlu0 %v1458
        %v1686 = vpop.xlane.xlu0 %1685
        %1687 = vmin.index.xlane.f32.xlu0 %v1459
        %v1688 = vpop.xlane.xlu0 %1687
        %1689 = vmin.index.xlane.f32.xlu0 %v1460
        %v1690 = vpop.xlane.xlu0 %1689
        %1691 = vmin.index.xlane.f32.xlu0 %v1461
        %v1692 = vpop.xlane.xlu0 %1691
        %1693 = vmin.index.xlane.f32.xlu0 %v1462
        %v1694 = vpop.xlane.xlu0 %1693
        %1695 = vmin.index.xlane.f32.xlu0 %v1463
        %v1696 = vpop.xlane.xlu0 %1695
        %1697 = vmin.index.xlane.f32.xlu0 %v1464
        %v1698 = vpop.xlane.xlu0 %1697
        %1699 = vmin.index.xlane.f32.xlu0 %v1465
        %v1700 = vpop.xlane.xlu0 %1699
        %1701 = vmin.index.xlane.f32.xlu0 %v1466
        %v1702 = vpop.xlane.xlu0 %1701
        %1703 = vmin.index.xlane.f32.xlu0 %v1467
        %v1704 = vpop.xlane.xlu0 %1703
        %1705 = vmin.index.xlane.f32.xlu0 %v1468
        %v1706 = vpop.xlane.xlu0 %1705
        %1707 = vmin.index.xlane.f32.xlu0 %v1469
        %v1708 = vpop.xlane.xlu0 %1707
        %1709 = vmin.index.xlane.f32.xlu0 %v1470
        %v1710 = vpop.xlane.xlu0 %1709
        %1711 = vmin.index.xlane.f32.xlu0 %v1471
        %v1712 = vpop.xlane.xlu0 %1711
        %1713 = vmin.index.xlane.f32.xlu0 %v1472
        %v1714 = vpop.xlane.xlu0 %1713
        %1715 = vmin.index.xlane.f32.xlu0 %v1473
        %v1716 = vpop.xlane.xlu0 %1715
        %1717 = vmin.index.xlane.f32.xlu0 %v1474
        %v1718 = vpop.xlane.xlu0 %1717
        %1719 = vmin.index.xlane.f32.xlu0 %v1475
        %v1720 = vpop.xlane.xlu0 %1719
        %1721 = vmin.index.xlane.f32.xlu0 %v1476
        %v1722 = vpop.xlane.xlu0 %1721
        %1723 = vmin.index.xlane.f32.xlu0 %v1477
        %v1724 = vpop.xlane.xlu0 %1723
        %1725 = vmin.index.xlane.f32.xlu0 %v1478
        %v1726 = vpop.xlane.xlu0 %1725
        %1727 = vmin.index.xlane.f32.xlu0 %v1479
        %v1728 = vpop.xlane.xlu0 %1727
        %1729 = vmin.index.xlane.f32.xlu0 %v1480
        %v1730 = vpop.xlane.xlu0 %1729
        %1731 = vmin.index.xlane.f32.xlu0 %v1481
        %v1732 = vpop.xlane.xlu0 %1731
        %1733 = vmin.index.xlane.f32.xlu0 %v1482
        %v1734 = vpop.xlane.xlu0 %1733
        %1735 = vmin.index.xlane.f32.xlu0 %v1483
        %v1736 = vpop.xlane.xlu0 %1735
        %1737 = vmin.index.xlane.f32.xlu0 %v1484
        %v1738 = vpop.xlane.xlu0 %1737
        %1739 = vmin.index.xlane.f32.xlu0 %v1485
        %v1740 = vpop.xlane.xlu0 %1739
        %1741 = vmin.index.xlane.f32.xlu0 %v1486
        %v1742 = vpop.xlane.xlu0 %1741
        %v1743 = vlaneseq
        %v1744 = vand.u32 %v1743, 127
        %vm1745 = vcmp.eq.s32.totalorder %v1488, %v1744
        %vm1746 = vcmp.eq.s32.totalorder %v1490, %v1744
        %vm1747 = vcmp.eq.s32.totalorder %v1492, %v1744
        %vm1748 = vcmp.eq.s32.totalorder %v1494, %v1744
        %vm1749 = vcmp.eq.s32.totalorder %v1496, %v1744
        %vm1750 = vcmp.eq.s32.totalorder %v1498, %v1744
        %vm1751 = vcmp.eq.s32.totalorder %v1500, %v1744
        %vm1752 = vcmp.eq.s32.totalorder %v1502, %v1744
        %vm1753 = vcmp.eq.s32.totalorder %v1504, %v1744
        %vm1754 = vcmp.eq.s32.totalorder %v1506, %v1744
        %vm1755 = vcmp.eq.s32.totalorder %v1508, %v1744
        %vm1756 = vcmp.eq.s32.totalorder %v1510, %v1744
        %vm1757 = vcmp.eq.s32.totalorder %v1512, %v1744
        %vm1758 = vcmp.eq.s32.totalorder %v1514, %v1744
        %vm1759 = vcmp.eq.s32.totalorder %v1516, %v1744
        %vm1760 = vcmp.eq.s32.totalorder %v1518, %v1744
        %vm1761 = vcmp.eq.s32.totalorder %v1520, %v1744
        %vm1762 = vcmp.eq.s32.totalorder %v1522, %v1744
        %vm1763 = vcmp.eq.s32.totalorder %v1524, %v1744
        %vm1764 = vcmp.eq.s32.totalorder %v1526, %v1744
        %vm1765 = vcmp.eq.s32.totalorder %v1528, %v1744
        %vm1766 = vcmp.eq.s32.totalorder %v1530, %v1744
        %vm1767 = vcmp.eq.s32.totalorder %v1532, %v1744
        %vm1768 = vcmp.eq.s32.totalorder %v1534, %v1744
        %vm1769 = vcmp.eq.s32.totalorder %v1536, %v1744
        %vm1770 = vcmp.eq.s32.totalorder %v1538, %v1744
        %vm1771 = vcmp.eq.s32.totalorder %v1540, %v1744
        %vm1772 = vcmp.eq.s32.totalorder %v1542, %v1744
        %vm1773 = vcmp.eq.s32.totalorder %v1544, %v1744
        %vm1774 = vcmp.eq.s32.totalorder %v1546, %v1744
        %vm1775 = vcmp.eq.s32.totalorder %v1548, %v1744
        %vm1776 = vcmp.eq.s32.totalorder %v1550, %v1744
        %vm1777 = vcmp.eq.s32.totalorder %v1552, %v1744
        %vm1778 = vcmp.eq.s32.totalorder %v1554, %v1744
        %vm1779 = vcmp.eq.s32.totalorder %v1556, %v1744
        %vm1780 = vcmp.eq.s32.totalorder %v1558, %v1744
        %vm1781 = vcmp.eq.s32.totalorder %v1560, %v1744
        %vm1782 = vcmp.eq.s32.totalorder %v1562, %v1744
        %vm1783 = vcmp.eq.s32.totalorder %v1564, %v1744
        %vm1784 = vcmp.eq.s32.totalorder %v1566, %v1744
        %vm1785 = vcmp.eq.s32.totalorder %v1568, %v1744
        %vm1786 = vcmp.eq.s32.totalorder %v1570, %v1744
        %vm1787 = vcmp.eq.s32.totalorder %v1572, %v1744
        %vm1788 = vcmp.eq.s32.totalorder %v1574, %v1744
        %vm1789 = vcmp.eq.s32.totalorder %v1576, %v1744
        %vm1790 = vcmp.eq.s32.totalorder %v1578, %v1744
        %vm1791 = vcmp.eq.s32.totalorder %v1580, %v1744
        %vm1792 = vcmp.eq.s32.totalorder %v1582, %v1744
        %vm1793 = vcmp.eq.s32.totalorder %v1584, %v1744
        %vm1794 = vcmp.eq.s32.totalorder %v1586, %v1744
        %vm1795 = vcmp.eq.s32.totalorder %v1588, %v1744
        %vm1796 = vcmp.eq.s32.totalorder %v1590, %v1744
        %vm1797 = vcmp.eq.s32.totalorder %v1592, %v1744
        %vm1798 = vcmp.eq.s32.totalorder %v1594, %v1744
        %vm1799 = vcmp.eq.s32.totalorder %v1596, %v1744
        %vm1800 = vcmp.eq.s32.totalorder %v1598, %v1744
        %vm1801 = vcmp.eq.s32.totalorder %v1600, %v1744
        %vm1802 = vcmp.eq.s32.totalorder %v1602, %v1744
        %vm1803 = vcmp.eq.s32.totalorder %v1604, %v1744
        %vm1804 = vcmp.eq.s32.totalorder %v1606, %v1744
        %vm1805 = vcmp.eq.s32.totalorder %v1608, %v1744
        %vm1806 = vcmp.eq.s32.totalorder %v1610, %v1744
        %vm1807 = vcmp.eq.s32.totalorder %v1612, %v1744
        %vm1808 = vcmp.eq.s32.totalorder %v1614, %v1744
        %vm1809 = vcmp.eq.s32.totalorder %v1616, %v1744
        %vm1810 = vcmp.eq.s32.totalorder %v1618, %v1744
        %vm1811 = vcmp.eq.s32.totalorder %v1620, %v1744
        %vm1812 = vcmp.eq.s32.totalorder %v1622, %v1744
        %vm1813 = vcmp.eq.s32.totalorder %v1624, %v1744
        %vm1814 = vcmp.eq.s32.totalorder %v1626, %v1744
        %vm1815 = vcmp.eq.s32.totalorder %v1628, %v1744
        %vm1816 = vcmp.eq.s32.totalorder %v1630, %v1744
        %vm1817 = vcmp.eq.s32.totalorder %v1632, %v1744
        %vm1818 = vcmp.eq.s32.totalorder %v1634, %v1744
        %vm1819 = vcmp.eq.s32.totalorder %v1636, %v1744
        %vm1820 = vcmp.eq.s32.totalorder %v1638, %v1744
        %vm1821 = vcmp.eq.s32.totalorder %v1640, %v1744
        %vm1822 = vcmp.eq.s32.totalorder %v1642, %v1744
        %vm1823 = vcmp.eq.s32.totalorder %v1644, %v1744
        %vm1824 = vcmp.eq.s32.totalorder %v1646, %v1744
        %vm1825 = vcmp.eq.s32.totalorder %v1648, %v1744
        %vm1826 = vcmp.eq.s32.totalorder %v1650, %v1744
        %vm1827 = vcmp.eq.s32.totalorder %v1652, %v1744
        %vm1828 = vcmp.eq.s32.totalorder %v1654, %v1744
        %vm1829 = vcmp.eq.s32.totalorder %v1656, %v1744
        %vm1830 = vcmp.eq.s32.totalorder %v1658, %v1744
        %vm1831 = vcmp.eq.s32.totalorder %v1660, %v1744
        %vm1832 = vcmp.eq.s32.totalorder %v1662, %v1744
        %vm1833 = vcmp.eq.s32.totalorder %v1664, %v1744
        %vm1834 = vcmp.eq.s32.totalorder %v1666, %v1744
        %vm1835 = vcmp.eq.s32.totalorder %v1668, %v1744
        %vm1836 = vcmp.eq.s32.totalorder %v1670, %v1744
        %vm1837 = vcmp.eq.s32.totalorder %v1672, %v1744
        %vm1838 = vcmp.eq.s32.totalorder %v1674, %v1744
        %vm1839 = vcmp.eq.s32.totalorder %v1676, %v1744
        %vm1840 = vcmp.eq.s32.totalorder %v1678, %v1744
        %vm1841 = vcmp.eq.s32.totalorder %v1680, %v1744
        %vm1842 = vcmp.eq.s32.totalorder %v1682, %v1744
        %vm1843 = vcmp.eq.s32.totalorder %v1684, %v1744
        %vm1844 = vcmp.eq.s32.totalorder %v1686, %v1744
        %vm1845 = vcmp.eq.s32.totalorder %v1688, %v1744
        %vm1846 = vcmp.eq.s32.totalorder %v1690, %v1744
        %vm1847 = vcmp.eq.s32.totalorder %v1692, %v1744
        %vm1848 = vcmp.eq.s32.totalorder %v1694, %v1744
        %vm1849 = vcmp.eq.s32.totalorder %v1696, %v1744
        %vm1850 = vcmp.eq.s32.totalorder %v1698, %v1744
        %vm1851 = vcmp.eq.s32.totalorder %v1700, %v1744
        %vm1852 = vcmp.eq.s32.totalorder %v1702, %v1744
        %vm1853 = vcmp.eq.s32.totalorder %v1704, %v1744
        %vm1854 = vcmp.eq.s32.totalorder %v1706, %v1744
        %vm1855 = vcmp.eq.s32.totalorder %v1708, %v1744
        %vm1856 = vcmp.eq.s32.totalorder %v1710, %v1744
        %vm1857 = vcmp.eq.s32.totalorder %v1712, %v1744
        %vm1858 = vcmp.eq.s32.totalorder %v1714, %v1744
        %vm1859 = vcmp.eq.s32.totalorder %v1716, %v1744
        %vm1860 = vcmp.eq.s32.totalorder %v1718, %v1744
        %vm1861 = vcmp.eq.s32.totalorder %v1720, %v1744
        %vm1862 = vcmp.eq.s32.totalorder %v1722, %v1744
        %vm1863 = vcmp.eq.s32.totalorder %v1724, %v1744
        %vm1864 = vcmp.eq.s32.totalorder %v1726, %v1744
        %vm1865 = vcmp.eq.s32.totalorder %v1728, %v1744
        %vm1866 = vcmp.eq.s32.totalorder %v1730, %v1744
        %vm1867 = vcmp.eq.s32.totalorder %v1732, %v1744
        %vm1868 = vcmp.eq.s32.totalorder %v1734, %v1744
        %vm1869 = vcmp.eq.s32.totalorder %v1736, %v1744
        %vm1870 = vcmp.eq.s32.totalorder %v1738, %v1744
        %vm1871 = vcmp.eq.s32.totalorder %v1740, %v1744
        %vm1872 = vcmp.eq.s32.totalorder %v1742, %v1744
        %v1873 = vsel %vm1745, 1, 0
        %v1874 = vsel %vm1746, 1, 0
        %v1875 = vsel %vm1747, 1, 0
        %v1876 = vsel %vm1748, 1, 0
        %v1877 = vsel %vm1749, 1, 0
        %v1878 = vsel %vm1750, 1, 0
        %v1879 = vsel %vm1751, 1, 0
        %v1880 = vsel %vm1752, 1, 0
        %v1881 = vsel %vm1753, 1, 0
        %v1882 = vsel %vm1754, 1, 0
        %v1883 = vsel %vm1755, 1, 0
        %v1884 = vsel %vm1756, 1, 0
        %v1885 = vsel %vm1757, 1, 0
        %v1886 = vsel %vm1758, 1, 0
        %v1887 = vsel %vm1759, 1, 0
        %v1888 = vsel %vm1760, 1, 0
        %v1889 = vsel %vm1761, 1, 0
        %v1890 = vsel %vm1762, 1, 0
        %v1891 = vsel %vm1763, 1, 0
        %v1892 = vsel %vm1764, 1, 0
        %v1893 = vsel %vm1765, 1, 0
        %v1894 = vsel %vm1766, 1, 0
        %v1895 = vsel %vm1767, 1, 0
        %v1896 = vsel %vm1768, 1, 0
        %v1897 = vsel %vm1769, 1, 0
        %v1898 = vsel %vm1770, 1, 0
        %v1899 = vsel %vm1771, 1, 0
        %v1900 = vsel %vm1772, 1, 0
        %v1901 = vsel %vm1773, 1, 0
        %v1902 = vsel %vm1774, 1, 0
        %v1903 = vsel %vm1775, 1, 0
        %v1904 = vsel %vm1776, 1, 0
        %v1905 = vsel %vm1777, 1, 0
        %v1906 = vsel %vm1778, 1, 0
        %v1907 = vsel %vm1779, 1, 0
        %v1908 = vsel %vm1780, 1, 0
        %v1909 = vsel %vm1781, 1, 0
        %v1910 = vsel %vm1782, 1, 0
        %v1911 = vsel %vm1783, 1, 0
        %v1912 = vsel %vm1784, 1, 0
        %v1913 = vsel %vm1785, 1, 0
        %v1914 = vsel %vm1786, 1, 0
        %v1915 = vsel %vm1787, 1, 0
        %v1916 = vsel %vm1788, 1, 0
        %v1917 = vsel %vm1789, 1, 0
        %v1918 = vsel %vm1790, 1, 0
        %v1919 = vsel %vm1791, 1, 0
        %v1920 = vsel %vm1792, 1, 0
        %v1921 = vsel %vm1793, 1, 0
        %v1922 = vsel %vm1794, 1, 0
        %v1923 = vsel %vm1795, 1, 0
        %v1924 = vsel %vm1796, 1, 0
        %v1925 = vsel %vm1797, 1, 0
        %v1926 = vsel %vm1798, 1, 0
        %v1927 = vsel %vm1799, 1, 0
        %v1928 = vsel %vm1800, 1, 0
        %v1929 = vsel %vm1801, 1, 0
        %v1930 = vsel %vm1802, 1, 0
        %v1931 = vsel %vm1803, 1, 0
        %v1932 = vsel %vm1804, 1, 0
        %v1933 = vsel %vm1805, 1, 0
        %v1934 = vsel %vm1806, 1, 0
        %v1935 = vsel %vm1807, 1, 0
        %v1936 = vsel %vm1808, 1, 0
        %v1937 = vsel %vm1809, 1, 0
        %v1938 = vsel %vm1810, 1, 0
        %v1939 = vsel %vm1811, 1, 0
        %v1940 = vsel %vm1812, 1, 0
        %v1941 = vsel %vm1813, 1, 0
        %v1942 = vsel %vm1814, 1, 0
        %v1943 = vsel %vm1815, 1, 0
        %v1944 = vsel %vm1816, 1, 0
        %v1945 = vsel %vm1817, 1, 0
        %v1946 = vsel %vm1818, 1, 0
        %v1947 = vsel %vm1819, 1, 0
        %v1948 = vsel %vm1820, 1, 0
        %v1949 = vsel %vm1821, 1, 0
        %v1950 = vsel %vm1822, 1, 0
        %v1951 = vsel %vm1823, 1, 0
        %v1952 = vsel %vm1824, 1, 0
        %v1953 = vsel %vm1825, 1, 0
        %v1954 = vsel %vm1826, 1, 0
        %v1955 = vsel %vm1827, 1, 0
        %v1956 = vsel %vm1828, 1, 0
        %v1957 = vsel %vm1829, 1, 0
        %v1958 = vsel %vm1830, 1, 0
        %v1959 = vsel %vm1831, 1, 0
        %v1960 = vsel %vm1832, 1, 0
        %v1961 = vsel %vm1833, 1, 0
        %v1962 = vsel %vm1834, 1, 0
        %v1963 = vsel %vm1835, 1, 0
        %v1964 = vsel %vm1836, 1, 0
        %v1965 = vsel %vm1837, 1, 0
        %v1966 = vsel %vm1838, 1, 0
        %v1967 = vsel %vm1839, 1, 0
        %v1968 = vsel %vm1840, 1, 0
        %v1969 = vsel %vm1841, 1, 0
        %v1970 = vsel %vm1842, 1, 0
        %v1971 = vsel %vm1843, 1, 0
        %v1972 = vsel %vm1844, 1, 0
        %v1973 = vsel %vm1845, 1, 0
        %v1974 = vsel %vm1846, 1, 0
        %v1975 = vsel %vm1847, 1, 0
        %v1976 = vsel %vm1848, 1, 0
        %v1977 = vsel %vm1849, 1, 0
        %v1978 = vsel %vm1850, 1, 0
        %v1979 = vsel %vm1851, 1, 0
        %v1980 = vsel %vm1852, 1, 0
        %v1981 = vsel %vm1853, 1, 0
        %v1982 = vsel %vm1854, 1, 0
        %v1983 = vsel %vm1855, 1, 0
        %v1984 = vsel %vm1856, 1, 0
        %v1985 = vsel %vm1857, 1, 0
        %v1986 = vsel %vm1858, 1, 0
        %v1987 = vsel %vm1859, 1, 0
        %v1988 = vsel %vm1860, 1, 0
        %v1989 = vsel %vm1861, 1, 0
        %v1990 = vsel %vm1862, 1, 0
        %v1991 = vsel %vm1863, 1, 0
        %v1992 = vsel %vm1864, 1, 0
        %v1993 = vsel %vm1865, 1, 0
        %v1994 = vsel %vm1866, 1, 0
        %v1995 = vsel %vm1867, 1, 0
        %v1996 = vsel %vm1868, 1, 0
        %v1997 = vsel %vm1869, 1, 0
        %v1998 = vsel %vm1870, 1, 0
        %v1999 = vsel %vm1871, 1, 0
        %v2000 = vsel %vm1872, 1, 0
        %v2001 = vcvt.s32.f32 %v1873
        %v2002 = vcvt.s32.f32 %v1874
        %v2003 = vcvt.s32.f32 %v1875
        %v2004 = vcvt.s32.f32 %v1876
        %v2005 = vcvt.s32.f32 %v1877
        %v2006 = vcvt.s32.f32 %v1878
        %v2007 = vcvt.s32.f32 %v1879
        %v2008 = vcvt.s32.f32 %v1880
        %v2009 = vcvt.s32.f32 %v1881
        %v2010 = vcvt.s32.f32 %v1882
        %v2011 = vcvt.s32.f32 %v1883
        %v2012 = vcvt.s32.f32 %v1884
        %v2013 = vcvt.s32.f32 %v1885
        %v2014 = vcvt.s32.f32 %v1886
        %v2015 = vcvt.s32.f32 %v1887
        %v2016 = vcvt.s32.f32 %v1888
        %v2017 = vcvt.s32.f32 %v1889
        %v2018 = vcvt.s32.f32 %v1890
        %v2019 = vcvt.s32.f32 %v1891
        %v2020 = vcvt.s32.f32 %v1892
        %v2021 = vcvt.s32.f32 %v1893
        %v2022 = vcvt.s32.f32 %v1894
        %v2023 = vcvt.s32.f32 %v1895
        %v2024 = vcvt.s32.f32 %v1896
        %v2025 = vcvt.s32.f32 %v1897
        %v2026 = vcvt.s32.f32 %v1898
        %v2027 = vcvt.s32.f32 %v1899
        %v2028 = vcvt.s32.f32 %v1900
        %v2029 = vcvt.s32.f32 %v1901
        %v2030 = vcvt.s32.f32 %v1902
        %v2031 = vcvt.s32.f32 %v1903
        %v2032 = vcvt.s32.f32 %v1904
        %v2033 = vcvt.s32.f32 %v1905
        %v2034 = vcvt.s32.f32 %v1906
        %v2035 = vcvt.s32.f32 %v1907
        %v2036 = vcvt.s32.f32 %v1908
        %v2037 = vcvt.s32.f32 %v1909
        %v2038 = vcvt.s32.f32 %v1910
        %v2039 = vcvt.s32.f32 %v1911
        %v2040 = vcvt.s32.f32 %v1912
        %v2041 = vcvt.s32.f32 %v1913
        %v2042 = vcvt.s32.f32 %v1914
        %v2043 = vcvt.s32.f32 %v1915
        %v2044 = vcvt.s32.f32 %v1916
        %v2045 = vcvt.s32.f32 %v1917
        %v2046 = vcvt.s32.f32 %v1918
        %v2047 = vcvt.s32.f32 %v1919
        %v2048 = vcvt.s32.f32 %v1920
        %v2049 = vcvt.s32.f32 %v1921
        %v2050 = vcvt.s32.f32 %v1922
        %v2051 = vcvt.s32.f32 %v1923
        %v2052 = vcvt.s32.f32 %v1924
        %v2053 = vcvt.s32.f32 %v1925
        %v2054 = vcvt.s32.f32 %v1926
        %v2055 = vcvt.s32.f32 %v1927
        %v2056 = vcvt.s32.f32 %v1928
        %v2057 = vcvt.s32.f32 %v1929
        %v2058 = vcvt.s32.f32 %v1930
        %v2059 = vcvt.s32.f32 %v1931
        %v2060 = vcvt.s32.f32 %v1932
        %v2061 = vcvt.s32.f32 %v1933
        %v2062 = vcvt.s32.f32 %v1934
        %v2063 = vcvt.s32.f32 %v1935
        %v2064 = vcvt.s32.f32 %v1936
        %v2065 = vcvt.s32.f32 %v1937
        %v2066 = vcvt.s32.f32 %v1938
        %v2067 = vcvt.s32.f32 %v1939
        %v2068 = vcvt.s32.f32 %v1940
        %v2069 = vcvt.s32.f32 %v1941
        %v2070 = vcvt.s32.f32 %v1942
        %v2071 = vcvt.s32.f32 %v1943
        %v2072 = vcvt.s32.f32 %v1944
        %v2073 = vcvt.s32.f32 %v1945
        %v2074 = vcvt.s32.f32 %v1946
        %v2075 = vcvt.s32.f32 %v1947
        %v2076 = vcvt.s32.f32 %v1948
        %v2077 = vcvt.s32.f32 %v1949
        %v2078 = vcvt.s32.f32 %v1950
        %v2079 = vcvt.s32.f32 %v1951
        %v2080 = vcvt.s32.f32 %v1952
        %v2081 = vcvt.s32.f32 %v1953
        %v2082 = vcvt.s32.f32 %v1954
        %v2083 = vcvt.s32.f32 %v1955
        %v2084 = vcvt.s32.f32 %v1956
        %v2085 = vcvt.s32.f32 %v1957
        %v2086 = vcvt.s32.f32 %v1958
        %v2087 = vcvt.s32.f32 %v1959
        %v2088 = vcvt.s32.f32 %v1960
        %v2089 = vcvt.s32.f32 %v1961
        %v2090 = vcvt.s32.f32 %v1962
        %v2091 = vcvt.s32.f32 %v1963
        %v2092 = vcvt.s32.f32 %v1964
        %v2093 = vcvt.s32.f32 %v1965
        %v2094 = vcvt.s32.f32 %v1966
        %v2095 = vcvt.s32.f32 %v1967
        %v2096 = vcvt.s32.f32 %v1968
        %v2097 = vcvt.s32.f32 %v1969
        %v2098 = vcvt.s32.f32 %v1970
        %v2099 = vcvt.s32.f32 %v1971
        %v2100 = vcvt.s32.f32 %v1972
        %v2101 = vcvt.s32.f32 %v1973
        %v2102 = vcvt.s32.f32 %v1974
        %v2103 = vcvt.s32.f32 %v1975
        %v2104 = vcvt.s32.f32 %v1976
        %v2105 = vcvt.s32.f32 %v1977
        %v2106 = vcvt.s32.f32 %v1978
        %v2107 = vcvt.s32.f32 %v1979
        %v2108 = vcvt.s32.f32 %v1980
        %v2109 = vcvt.s32.f32 %v1981
        %v2110 = vcvt.s32.f32 %v1982
        %v2111 = vcvt.s32.f32 %v1983
        %v2112 = vcvt.s32.f32 %v1984
        %v2113 = vcvt.s32.f32 %v1985
        %v2114 = vcvt.s32.f32 %v1986
        %v2115 = vcvt.s32.f32 %v1987
        %v2116 = vcvt.s32.f32 %v1988
        %v2117 = vcvt.s32.f32 %v1989
        %v2118 = vcvt.s32.f32 %v1990
        %v2119 = vcvt.s32.f32 %v1991
        %v2120 = vcvt.s32.f32 %v1992
        %v2121 = vcvt.s32.f32 %v1993
        %v2122 = vcvt.s32.f32 %v1994
        %v2123 = vcvt.s32.f32 %v1995
        %v2124 = vcvt.s32.f32 %v1996
        %v2125 = vcvt.s32.f32 %v1997
        %v2126 = vcvt.s32.f32 %v1998
        %v2127 = vcvt.s32.f32 %v1999
        %v2128 = vcvt.s32.f32 %v2000
        %2129 = vmatpush.msra.mxu0 %v392
        %2130 = vmatpush.msra.mxu0 %v391
        %2131 = vmatpush.msra.mxu0 %v390
        %2132 = vmatpush.msra.mxu0 %v389
        %2133 = vmatpush.msra.mxu0 %v388
        %2134 = vmatpush.msra.mxu0 %v387
        %2135 = vmatpush.msra.mxu0 %v386
        %2136 = vmatpush.msra.mxu0 %v385
        %2137 = vmatpush.msra.mxu0 %v384
        %2138 = vmatpush.msra.mxu0 %v383
        %2139 = vmatpush.msra.mxu0 %v382
        %2140 = vmatpush.msra.mxu0 %v381
        %2141 = vmatpush.msra.mxu0 %v380
        %2142 = vmatpush.msra.mxu0 %v379
        %2143 = vmatpush.msra.mxu0 %v378
        %2144 = vmatpush.msra.mxu0 %v377
        %2145 = vmatmul.f32.gmra.mxu0 %v2001
        %v2146 = vpop.f32.mrf.mxu0
        %v2147 = vadd.f32 0.0, %v2146
        %2148 = vmatmul.f32.gmra.mxu0 %v2002
        %v2149 = vpop.f32.mrf.mxu0
        %v2150 = vadd.f32 0.0, %v2149
        %2151 = vmatmul.f32.gmra.mxu0 %v2003
        %v2152 = vpop.f32.mrf.mxu0
        %v2153 = vadd.f32 0.0, %v2152
        %2154 = vmatmul.f32.gmra.mxu0 %v2004
        %v2155 = vpop.f32.mrf.mxu0
        %v2156 = vadd.f32 0.0, %v2155
        %2157 = vmatmul.f32.gmra.mxu0 %v2005
        %v2158 = vpop.f32.mrf.mxu0
        %v2159 = vadd.f32 0.0, %v2158
        %2160 = vmatmul.f32.gmra.mxu0 %v2006
        %v2161 = vpop.f32.mrf.mxu0
        %v2162 = vadd.f32 0.0, %v2161
        %2163 = vmatmul.f32.gmra.mxu0 %v2007
        %v2164 = vpop.f32.mrf.mxu0
        %v2165 = vadd.f32 0.0, %v2164
        %2166 = vmatmul.f32.gmra.mxu0 %v2008
        %v2167 = vpop.f32.mrf.mxu0
        %v2168 = vadd.f32 0.0, %v2167
        %2169 = vmatmul.f32.gmra.mxu0 %v2009
        %v2170 = vpop.f32.mrf.mxu0
        %v2171 = vadd.f32 0.0, %v2170
        %2172 = vmatmul.f32.gmra.mxu0 %v2010
        %v2173 = vpop.f32.mrf.mxu0
        %v2174 = vadd.f32 0.0, %v2173
        %2175 = vmatmul.f32.gmra.mxu0 %v2011
        %v2176 = vpop.f32.mrf.mxu0
        %v2177 = vadd.f32 0.0, %v2176
        %2178 = vmatmul.f32.gmra.mxu0 %v2012
        %v2179 = vpop.f32.mrf.mxu0
        %v2180 = vadd.f32 0.0, %v2179
        %2181 = vmatmul.f32.gmra.mxu0 %v2013
        %v2182 = vpop.f32.mrf.mxu0
        %v2183 = vadd.f32 0.0, %v2182
        %2184 = vmatmul.f32.gmra.mxu0 %v2014
        %v2185 = vpop.f32.mrf.mxu0
        %v2186 = vadd.f32 0.0, %v2185
        %2187 = vmatmul.f32.gmra.mxu0 %v2015
        %v2188 = vpop.f32.mrf.mxu0
        %v2189 = vadd.f32 0.0, %v2188
        %2190 = vmatmul.f32.gmra.mxu0 %v2016
        %v2191 = vpop.f32.mrf.mxu0
        %v2192 = vadd.f32 0.0, %v2191
        %2193 = vmatmul.f32.gmra.mxu0 %v2017
        %v2194 = vpop.f32.mrf.mxu0
        %v2195 = vadd.f32 0.0, %v2194
        %2196 = vmatmul.f32.gmra.mxu0 %v2018
        %v2197 = vpop.f32.mrf.mxu0
        %v2198 = vadd.f32 0.0, %v2197
        %2199 = vmatmul.f32.gmra.mxu0 %v2019
        %v2200 = vpop.f32.mrf.mxu0
        %v2201 = vadd.f32 0.0, %v2200
        %2202 = vmatmul.f32.gmra.mxu0 %v2020
        %v2203 = vpop.f32.mrf.mxu0
        %v2204 = vadd.f32 0.0, %v2203
        %2205 = vmatmul.f32.gmra.mxu0 %v2021
        %v2206 = vpop.f32.mrf.mxu0
        %v2207 = vadd.f32 0.0, %v2206
        %2208 = vmatmul.f32.gmra.mxu0 %v2022
        %v2209 = vpop.f32.mrf.mxu0
        %v2210 = vadd.f32 0.0, %v2209
        %2211 = vmatmul.f32.gmra.mxu0 %v2023
        %v2212 = vpop.f32.mrf.mxu0
        %v2213 = vadd.f32 0.0, %v2212
        %2214 = vmatmul.f32.gmra.mxu0 %v2024
        %v2215 = vpop.f32.mrf.mxu0
        %v2216 = vadd.f32 0.0, %v2215
        %2217 = vmatmul.f32.gmra.mxu0 %v2025
        %v2218 = vpop.f32.mrf.mxu0
        %v2219 = vadd.f32 0.0, %v2218
        %2220 = vmatmul.f32.gmra.mxu0 %v2026
        %v2221 = vpop.f32.mrf.mxu0
        %v2222 = vadd.f32 0.0, %v2221
        %2223 = vmatmul.f32.gmra.mxu0 %v2027
        %v2224 = vpop.f32.mrf.mxu0
        %v2225 = vadd.f32 0.0, %v2224
        %2226 = vmatmul.f32.gmra.mxu0 %v2028
        %v2227 = vpop.f32.mrf.mxu0
        %v2228 = vadd.f32 0.0, %v2227
        %2229 = vmatmul.f32.gmra.mxu0 %v2029
        %v2230 = vpop.f32.mrf.mxu0
        %v2231 = vadd.f32 0.0, %v2230
        %2232 = vmatmul.f32.gmra.mxu0 %v2030
        %v2233 = vpop.f32.mrf.mxu0
        %v2234 = vadd.f32 0.0, %v2233
        %2235 = vmatmul.f32.gmra.mxu0 %v2031
        %v2236 = vpop.f32.mrf.mxu0
        %v2237 = vadd.f32 0.0, %v2236
        %2238 = vmatmul.f32.gmra.mxu0 %v2032
        %v2239 = vpop.f32.mrf.mxu0
        %v2240 = vadd.f32 0.0, %v2239
        %2241 = vmatmul.f32.gmra.mxu0 %v2033
        %v2242 = vpop.f32.mrf.mxu0
        %v2243 = vadd.f32 0.0, %v2242
        %2244 = vmatmul.f32.gmra.mxu0 %v2034
        %v2245 = vpop.f32.mrf.mxu0
        %v2246 = vadd.f32 0.0, %v2245
        %2247 = vmatmul.f32.gmra.mxu0 %v2035
        %v2248 = vpop.f32.mrf.mxu0
        %v2249 = vadd.f32 0.0, %v2248
        %2250 = vmatmul.f32.gmra.mxu0 %v2036
        %v2251 = vpop.f32.mrf.mxu0
        %v2252 = vadd.f32 0.0, %v2251
        %2253 = vmatmul.f32.gmra.mxu0 %v2037
        %v2254 = vpop.f32.mrf.mxu0
        %v2255 = vadd.f32 0.0, %v2254
        %2256 = vmatmul.f32.gmra.mxu0 %v2038
        %v2257 = vpop.f32.mrf.mxu0
        %v2258 = vadd.f32 0.0, %v2257
        %2259 = vmatmul.f32.gmra.mxu0 %v2039
        %v2260 = vpop.f32.mrf.mxu0
        %v2261 = vadd.f32 0.0, %v2260
        %2262 = vmatmul.f32.gmra.mxu0 %v2040
        %v2263 = vpop.f32.mrf.mxu0
        %v2264 = vadd.f32 0.0, %v2263
        %2265 = vmatmul.f32.gmra.mxu0 %v2041
        %v2266 = vpop.f32.mrf.mxu0
        %v2267 = vadd.f32 0.0, %v2266
        %2268 = vmatmul.f32.gmra.mxu0 %v2042
        %v2269 = vpop.f32.mrf.mxu0
        %v2270 = vadd.f32 0.0, %v2269
        %2271 = vmatmul.f32.gmra.mxu0 %v2043
        %v2272 = vpop.f32.mrf.mxu0
        %v2273 = vadd.f32 0.0, %v2272
        %2274 = vmatmul.f32.gmra.mxu0 %v2044
        %v2275 = vpop.f32.mrf.mxu0
        %v2276 = vadd.f32 0.0, %v2275
        %2277 = vmatmul.f32.gmra.mxu0 %v2045
        %v2278 = vpop.f32.mrf.mxu0
        %v2279 = vadd.f32 0.0, %v2278
        %2280 = vmatmul.f32.gmra.mxu0 %v2046
        %v2281 = vpop.f32.mrf.mxu0
        %v2282 = vadd.f32 0.0, %v2281
        %2283 = vmatmul.f32.gmra.mxu0 %v2047
        %v2284 = vpop.f32.mrf.mxu0
        %v2285 = vadd.f32 0.0, %v2284
        %2286 = vmatmul.f32.gmra.mxu0 %v2048
        %v2287 = vpop.f32.mrf.mxu0
        %v2288 = vadd.f32 0.0, %v2287
        %2289 = vmatmul.f32.gmra.mxu0 %v2049
        %v2290 = vpop.f32.mrf.mxu0
        %v2291 = vadd.f32 0.0, %v2290
        %2292 = vmatmul.f32.gmra.mxu0 %v2050
        %v2293 = vpop.f32.mrf.mxu0
        %v2294 = vadd.f32 0.0, %v2293
        %2295 = vmatmul.f32.gmra.mxu0 %v2051
        %v2296 = vpop.f32.mrf.mxu0
        %v2297 = vadd.f32 0.0, %v2296
        %2298 = vmatmul.f32.gmra.mxu0 %v2052
        %v2299 = vpop.f32.mrf.mxu0
        %v2300 = vadd.f32 0.0, %v2299
        %2301 = vmatmul.f32.gmra.mxu0 %v2053
        %v2302 = vpop.f32.mrf.mxu0
        %v2303 = vadd.f32 0.0, %v2302
        %2304 = vmatmul.f32.gmra.mxu0 %v2054
        %v2305 = vpop.f32.mrf.mxu0
        %v2306 = vadd.f32 0.0, %v2305
        %2307 = vmatmul.f32.gmra.mxu0 %v2055
        %v2308 = vpop.f32.mrf.mxu0
        %v2309 = vadd.f32 0.0, %v2308
        %2310 = vmatmul.f32.gmra.mxu0 %v2056
        %v2311 = vpop.f32.mrf.mxu0
        %v2312 = vadd.f32 0.0, %v2311
        %2313 = vmatmul.f32.gmra.mxu0 %v2057
        %v2314 = vpop.f32.mrf.mxu0
        %v2315 = vadd.f32 0.0, %v2314
        %2316 = vmatmul.f32.gmra.mxu0 %v2058
        %v2317 = vpop.f32.mrf.mxu0
        %v2318 = vadd.f32 0.0, %v2317
        %2319 = vmatmul.f32.gmra.mxu0 %v2059
        %v2320 = vpop.f32.mrf.mxu0
        %v2321 = vadd.f32 0.0, %v2320
        %2322 = vmatmul.f32.gmra.mxu0 %v2060
        %v2323 = vpop.f32.mrf.mxu0
        %v2324 = vadd.f32 0.0, %v2323
        %2325 = vmatmul.f32.gmra.mxu0 %v2061
        %v2326 = vpop.f32.mrf.mxu0
        %v2327 = vadd.f32 0.0, %v2326
        %2328 = vmatmul.f32.gmra.mxu0 %v2062
        %v2329 = vpop.f32.mrf.mxu0
        %v2330 = vadd.f32 0.0, %v2329
        %2331 = vmatmul.f32.gmra.mxu0 %v2063
        %v2332 = vpop.f32.mrf.mxu0
        %v2333 = vadd.f32 0.0, %v2332
        %2334 = vmatmul.f32.gmra.mxu0 %v2064
        %v2335 = vpop.f32.mrf.mxu0
        %v2336 = vadd.f32 0.0, %v2335
        %2337 = vmatmul.f32.gmra.mxu0 %v2065
        %v2338 = vpop.f32.mrf.mxu0
        %v2339 = vadd.f32 0.0, %v2338
        %2340 = vmatmul.f32.gmra.mxu0 %v2066
        %v2341 = vpop.f32.mrf.mxu0
        %v2342 = vadd.f32 0.0, %v2341
        %2343 = vmatmul.f32.gmra.mxu0 %v2067
        %v2344 = vpop.f32.mrf.mxu0
        %v2345 = vadd.f32 0.0, %v2344
        %2346 = vmatmul.f32.gmra.mxu0 %v2068
        %v2347 = vpop.f32.mrf.mxu0
        %v2348 = vadd.f32 0.0, %v2347
        %2349 = vmatmul.f32.gmra.mxu0 %v2069
        %v2350 = vpop.f32.mrf.mxu0
        %v2351 = vadd.f32 0.0, %v2350
        %2352 = vmatmul.f32.gmra.mxu0 %v2070
        %v2353 = vpop.f32.mrf.mxu0
        %v2354 = vadd.f32 0.0, %v2353
        %2355 = vmatmul.f32.gmra.mxu0 %v2071
        %v2356 = vpop.f32.mrf.mxu0
        %v2357 = vadd.f32 0.0, %v2356
        %2358 = vmatmul.f32.gmra.mxu0 %v2072
        %v2359 = vpop.f32.mrf.mxu0
        %v2360 = vadd.f32 0.0, %v2359
        %2361 = vmatmul.f32.gmra.mxu0 %v2073
        %v2362 = vpop.f32.mrf.mxu0
        %v2363 = vadd.f32 0.0, %v2362
        %2364 = vmatmul.f32.gmra.mxu0 %v2074
        %v2365 = vpop.f32.mrf.mxu0
        %v2366 = vadd.f32 0.0, %v2365
        %2367 = vmatmul.f32.gmra.mxu0 %v2075
        %v2368 = vpop.f32.mrf.mxu0
        %v2369 = vadd.f32 0.0, %v2368
        %2370 = vmatmul.f32.gmra.mxu0 %v2076
        %v2371 = vpop.f32.mrf.mxu0
        %v2372 = vadd.f32 0.0, %v2371
        %2373 = vmatmul.f32.gmra.mxu0 %v2077
        %v2374 = vpop.f32.mrf.mxu0
        %v2375 = vadd.f32 0.0, %v2374
        %2376 = vmatmul.f32.gmra.mxu0 %v2078
        %v2377 = vpop.f32.mrf.mxu0
        %v2378 = vadd.f32 0.0, %v2377
        %2379 = vmatmul.f32.gmra.mxu0 %v2079
        %v2380 = vpop.f32.mrf.mxu0
        %v2381 = vadd.f32 0.0, %v2380
        %2382 = vmatmul.f32.gmra.mxu0 %v2080
        %v2383 = vpop.f32.mrf.mxu0
        %v2384 = vadd.f32 0.0, %v2383
        %2385 = vmatmul.f32.gmra.mxu0 %v2081
        %v2386 = vpop.f32.mrf.mxu0
        %v2387 = vadd.f32 0.0, %v2386
        %2388 = vmatmul.f32.gmra.mxu0 %v2082
        %v2389 = vpop.f32.mrf.mxu0
        %v2390 = vadd.f32 0.0, %v2389
        %2391 = vmatmul.f32.gmra.mxu0 %v2083
        %v2392 = vpop.f32.mrf.mxu0
        %v2393 = vadd.f32 0.0, %v2392
        %2394 = vmatmul.f32.gmra.mxu0 %v2084
        %v2395 = vpop.f32.mrf.mxu0
        %v2396 = vadd.f32 0.0, %v2395
        %2397 = vmatmul.f32.gmra.mxu0 %v2085
        %v2398 = vpop.f32.mrf.mxu0
        %v2399 = vadd.f32 0.0, %v2398
        %2400 = vmatmul.f32.gmra.mxu0 %v2086
        %v2401 = vpop.f32.mrf.mxu0
        %v2402 = vadd.f32 0.0, %v2401
        %2403 = vmatmul.f32.gmra.mxu0 %v2087
        %v2404 = vpop.f32.mrf.mxu0
        %v2405 = vadd.f32 0.0, %v2404
        %2406 = vmatmul.f32.gmra.mxu0 %v2088
        %v2407 = vpop.f32.mrf.mxu0
        %v2408 = vadd.f32 0.0, %v2407
        %2409 = vmatmul.f32.gmra.mxu0 %v2089
        %v2410 = vpop.f32.mrf.mxu0
        %v2411 = vadd.f32 0.0, %v2410
        %2412 = vmatmul.f32.gmra.mxu0 %v2090
        %v2413 = vpop.f32.mrf.mxu0
        %v2414 = vadd.f32 0.0, %v2413
        %2415 = vmatmul.f32.gmra.mxu0 %v2091
        %v2416 = vpop.f32.mrf.mxu0
        %v2417 = vadd.f32 0.0, %v2416
        %2418 = vmatmul.f32.gmra.mxu0 %v2092
        %v2419 = vpop.f32.mrf.mxu0
        %v2420 = vadd.f32 0.0, %v2419
        %2421 = vmatmul.f32.gmra.mxu0 %v2093
        %v2422 = vpop.f32.mrf.mxu0
        %v2423 = vadd.f32 0.0, %v2422
        %2424 = vmatmul.f32.gmra.mxu0 %v2094
        %v2425 = vpop.f32.mrf.mxu0
        %v2426 = vadd.f32 0.0, %v2425
        %2427 = vmatmul.f32.gmra.mxu0 %v2095
        %v2428 = vpop.f32.mrf.mxu0
        %v2429 = vadd.f32 0.0, %v2428
        %2430 = vmatmul.f32.gmra.mxu0 %v2096
        %v2431 = vpop.f32.mrf.mxu0
        %v2432 = vadd.f32 0.0, %v2431
        %2433 = vmatmul.f32.gmra.mxu0 %v2097
        %v2434 = vpop.f32.mrf.mxu0
        %v2435 = vadd.f32 0.0, %v2434
        %2436 = vmatmul.f32.gmra.mxu0 %v2098
        %v2437 = vpop.f32.mrf.mxu0
        %v2438 = vadd.f32 0.0, %v2437
        %2439 = vmatmul.f32.gmra.mxu0 %v2099
        %v2440 = vpop.f32.mrf.mxu0
        %v2441 = vadd.f32 0.0, %v2440
        %2442 = vmatmul.f32.gmra.mxu0 %v2100
        %v2443 = vpop.f32.mrf.mxu0
        %v2444 = vadd.f32 0.0, %v2443
        %2445 = vmatmul.f32.gmra.mxu0 %v2101
        %v2446 = vpop.f32.mrf.mxu0
        %v2447 = vadd.f32 0.0, %v2446
        %2448 = vmatmul.f32.gmra.mxu0 %v2102
        %v2449 = vpop.f32.mrf.mxu0
        %v2450 = vadd.f32 0.0, %v2449
        %2451 = vmatmul.f32.gmra.mxu0 %v2103
        %v2452 = vpop.f32.mrf.mxu0
        %v2453 = vadd.f32 0.0, %v2452
        %2454 = vmatmul.f32.gmra.mxu0 %v2104
        %v2455 = vpop.f32.mrf.mxu0
        %v2456 = vadd.f32 0.0, %v2455
        %2457 = vmatmul.f32.gmra.mxu0 %v2105
        %v2458 = vpop.f32.mrf.mxu0
        %v2459 = vadd.f32 0.0, %v2458
        %2460 = vmatmul.f32.gmra.mxu0 %v2106
        %v2461 = vpop.f32.mrf.mxu0
        %v2462 = vadd.f32 0.0, %v2461
        %2463 = vmatmul.f32.gmra.mxu0 %v2107
        %v2464 = vpop.f32.mrf.mxu0
        %v2465 = vadd.f32 0.0, %v2464
        %2466 = vmatmul.f32.gmra.mxu0 %v2108
        %v2467 = vpop.f32.mrf.mxu0
        %v2468 = vadd.f32 0.0, %v2467
        %2469 = vmatmul.f32.gmra.mxu0 %v2109
        %v2470 = vpop.f32.mrf.mxu0
        %v2471 = vadd.f32 0.0, %v2470
        %2472 = vmatmul.f32.gmra.mxu0 %v2110
        %v2473 = vpop.f32.mrf.mxu0
        %v2474 = vadd.f32 0.0, %v2473
        %2475 = vmatmul.f32.gmra.mxu0 %v2111
        %v2476 = vpop.f32.mrf.mxu0
        %v2477 = vadd.f32 0.0, %v2476
        %2478 = vmatmul.f32.gmra.mxu0 %v2112
        %v2479 = vpop.f32.mrf.mxu0
        %v2480 = vadd.f32 0.0, %v2479
        %2481 = vmatmul.f32.gmra.mxu0 %v2113
        %v2482 = vpop.f32.mrf.mxu0
        %v2483 = vadd.f32 0.0, %v2482
        %2484 = vmatmul.f32.gmra.mxu0 %v2114
        %v2485 = vpop.f32.mrf.mxu0
        %v2486 = vadd.f32 0.0, %v2485
        %2487 = vmatmul.f32.gmra.mxu0 %v2115
        %v2488 = vpop.f32.mrf.mxu0
        %v2489 = vadd.f32 0.0, %v2488
        %2490 = vmatmul.f32.gmra.mxu0 %v2116
        %v2491 = vpop.f32.mrf.mxu0
        %v2492 = vadd.f32 0.0, %v2491
        %2493 = vmatmul.f32.gmra.mxu0 %v2117
        %v2494 = vpop.f32.mrf.mxu0
        %v2495 = vadd.f32 0.0, %v2494
        %2496 = vmatmul.f32.gmra.mxu0 %v2118
        %v2497 = vpop.f32.mrf.mxu0
        %v2498 = vadd.f32 0.0, %v2497
        %2499 = vmatmul.f32.gmra.mxu0 %v2119
        %v2500 = vpop.f32.mrf.mxu0
        %v2501 = vadd.f32 0.0, %v2500
        %2502 = vmatmul.f32.gmra.mxu0 %v2120
        %v2503 = vpop.f32.mrf.mxu0
        %v2504 = vadd.f32 0.0, %v2503
        %2505 = vmatmul.f32.gmra.mxu0 %v2121
        %v2506 = vpop.f32.mrf.mxu0
        %v2507 = vadd.f32 0.0, %v2506
        %2508 = vmatmul.f32.gmra.mxu0 %v2122
        %v2509 = vpop.f32.mrf.mxu0
        %v2510 = vadd.f32 0.0, %v2509
        %2511 = vmatmul.f32.gmra.mxu0 %v2123
        %v2512 = vpop.f32.mrf.mxu0
        %v2513 = vadd.f32 0.0, %v2512
        %2514 = vmatmul.f32.gmra.mxu0 %v2124
        %v2515 = vpop.f32.mrf.mxu0
        %v2516 = vadd.f32 0.0, %v2515
        %2517 = vmatmul.f32.gmra.mxu0 %v2125
        %v2518 = vpop.f32.mrf.mxu0
        %v2519 = vadd.f32 0.0, %v2518
        %2520 = vmatmul.f32.gmra.mxu0 %v2126
        %v2521 = vpop.f32.mrf.mxu0
        %v2522 = vadd.f32 0.0, %v2521
        %2523 = vmatmul.f32.gmra.mxu0 %v2127
        %v2524 = vpop.f32.mrf.mxu0
        %v2525 = vadd.f32 0.0, %v2524
        %2526 = vmatmul.f32.gmra.mxu0 %v2128
        %v2527 = vpop.f32.mrf.mxu0
        %v2528 = vadd.f32 0.0, %v2527
        %2529 = vdwg.mxu0
        %2530 = vst.msk [vmem:[%s247] sm:$0xff] %vm394, %v2147
        %2531 = vst.msk [vmem:[%s247 + $0x8] sm:$0xff] %vm394, %v2150
        %2532 = vst.msk [vmem:[%s247 + $0x10] sm:$0xff] %vm394, %v2153
        %2533 = vst.msk [vmem:[%s247 + $0x18] sm:$0xff] %vm394, %v2156
        %2534 = vst.msk [vmem:[%s247 + $0x20] sm:$0xff] %vm394, %v2159
        %2535 = vst.msk [vmem:[%s247 + $0x28] sm:$0xff] %vm394, %v2162
        %2536 = vst.msk [vmem:[%s247 + $0x30] sm:$0xff] %vm394, %v2165
        %2537 = vst.msk [vmem:[%s247 + $0x38] sm:$0xff] %vm394, %v2168
        %2538 = vst.msk [vmem:[%s247 + $0x40] sm:$0xff] %vm394, %v2171
        %2539 = vst.msk [vmem:[%s247 + $0x48] sm:$0xff] %vm394, %v2174
        %2540 = vst.msk [vmem:[%s247 + $0x50] sm:$0xff] %vm394, %v2177
        %2541 = vst.msk [vmem:[%s247 + $0x58] sm:$0xff] %vm394, %v2180
        %2542 = vst.msk [vmem:[%s247 + $0x60] sm:$0xff] %vm394, %v2183
        %2543 = vst.msk [vmem:[%s247 + $0x68] sm:$0xff] %vm394, %v2186
        %2544 = vst.msk [vmem:[%s247 + $0x70] sm:$0xff] %vm394, %v2189
        %2545 = vst.msk [vmem:[%s247 + $0x78] sm:$0xff] %vm394, %v2192
        %2546 = vst.msk [vmem:[%s247 + $0x80] sm:$0xff] %vm394, %v2195
        %2547 = vst.msk [vmem:[%s247 + $0x88] sm:$0xff] %vm394, %v2198
        %2548 = vst.msk [vmem:[%s247 + $0x90] sm:$0xff] %vm394, %v2201
        %2549 = vst.msk [vmem:[%s247 + $0x98] sm:$0xff] %vm394, %v2204
        %2550 = vst.msk [vmem:[%s247 + $0xa0] sm:$0xff] %vm394, %v2207
        %2551 = vst.msk [vmem:[%s247 + $0xa8] sm:$0xff] %vm394, %v2210
        %2552 = vst.msk [vmem:[%s247 + $0xb0] sm:$0xff] %vm394, %v2213
        %2553 = vst.msk [vmem:[%s247 + $0xb8] sm:$0xff] %vm394, %v2216
        %2554 = vst.msk [vmem:[%s247 + $0xc0] sm:$0xff] %vm394, %v2219
        %2555 = vst.msk [vmem:[%s247 + $0xc8] sm:$0xff] %vm394, %v2222
        %2556 = vst.msk [vmem:[%s247 + $0xd0] sm:$0xff] %vm394, %v2225
        %2557 = vst.msk [vmem:[%s247 + $0xd8] sm:$0xff] %vm394, %v2228
        %2558 = vst.msk [vmem:[%s247 + $0xe0] sm:$0xff] %vm394, %v2231
        %2559 = vst.msk [vmem:[%s247 + $0xe8] sm:$0xff] %vm394, %v2234
        %2560 = vst.msk [vmem:[%s247 + $0xf0] sm:$0xff] %vm394, %v2237
        %2561 = vst.msk [vmem:[%s247 + $0xf8] sm:$0xff] %vm394, %v2240
        %2562 = vst.msk [vmem:[%s247 + $0x100] sm:$0xff] %vm394, %v2243
        %2563 = vst.msk [vmem:[%s247 + $0x108] sm:$0xff] %vm394, %v2246
        %2564 = vst.msk [vmem:[%s247 + $0x110] sm:$0xff] %vm394, %v2249
        %2565 = vst.msk [vmem:[%s247 + $0x118] sm:$0xff] %vm394, %v2252
        %2566 = vst.msk [vmem:[%s247 + $0x120] sm:$0xff] %vm394, %v2255
        %2567 = vst.msk [vmem:[%s247 + $0x128] sm:$0xff] %vm394, %v2258
        %2568 = vst.msk [vmem:[%s247 + $0x130] sm:$0xff] %vm394, %v2261
        %2569 = vst.msk [vmem:[%s247 + $0x138] sm:$0xff] %vm394, %v2264
        %2570 = vst.msk [vmem:[%s247 + $0x140] sm:$0xff] %vm394, %v2267
        %2571 = vst.msk [vmem:[%s247 + $0x148] sm:$0xff] %vm394, %v2270
        %2572 = vst.msk [vmem:[%s247 + $0x150] sm:$0xff] %vm394, %v2273
        %2573 = vst.msk [vmem:[%s247 + $0x158] sm:$0xff] %vm394, %v2276
        %2574 = vst.msk [vmem:[%s247 + $0x160] sm:$0xff] %vm394, %v2279
        %2575 = vst.msk [vmem:[%s247 + $0x168] sm:$0xff] %vm394, %v2282
        %2576 = vst.msk [vmem:[%s247 + $0x170] sm:$0xff] %vm394, %v2285
        %2577 = vst.msk [vmem:[%s247 + $0x178] sm:$0xff] %vm394, %v2288
        %2578 = vst.msk [vmem:[%s247 + $0x180] sm:$0xff] %vm394, %v2291
        %2579 = vst.msk [vmem:[%s247 + $0x188] sm:$0xff] %vm394, %v2294
        %2580 = vst.msk [vmem:[%s247 + $0x190] sm:$0xff] %vm394, %v2297
        %2581 = vst.msk [vmem:[%s247 + $0x198] sm:$0xff] %vm394, %v2300
        %2582 = vst.msk [vmem:[%s247 + $0x1a0] sm:$0xff] %vm394, %v2303
        %2583 = vst.msk [vmem:[%s247 + $0x1a8] sm:$0xff] %vm394, %v2306
        %2584 = vst.msk [vmem:[%s247 + $0x1b0] sm:$0xff] %vm394, %v2309
        %2585 = vst.msk [vmem:[%s247 + $0x1b8] sm:$0xff] %vm394, %v2312
        %2586 = vst.msk [vmem:[%s247 + $0x1c0] sm:$0xff] %vm394, %v2315
        %2587 = vst.msk [vmem:[%s247 + $0x1c8] sm:$0xff] %vm394, %v2318
        %2588 = vst.msk [vmem:[%s247 + $0x1d0] sm:$0xff] %vm394, %v2321
        %2589 = vst.msk [vmem:[%s247 + $0x1d8] sm:$0xff] %vm394, %v2324
        %2590 = vst.msk [vmem:[%s247 + $0x1e0] sm:$0xff] %vm394, %v2327
        %2591 = vst.msk [vmem:[%s247 + $0x1e8] sm:$0xff] %vm394, %v2330
        %2592 = vst.msk [vmem:[%s247 + $0x1f0] sm:$0xff] %vm394, %v2333
        %2593 = vst.msk [vmem:[%s247 + $0x1f8] sm:$0xff] %vm394, %v2336
        %2594 = vst.msk [vmem:[%s247 + $0x200] sm:$0xff] %vm394, %v2339
        %2595 = vst.msk [vmem:[%s247 + $0x208] sm:$0xff] %vm394, %v2342
        %2596 = vst.msk [vmem:[%s247 + $0x210] sm:$0xff] %vm394, %v2345
        %2597 = vst.msk [vmem:[%s247 + $0x218] sm:$0xff] %vm394, %v2348
        %2598 = vst.msk [vmem:[%s247 + $0x220] sm:$0xff] %vm394, %v2351
        %2599 = vst.msk [vmem:[%s247 + $0x228] sm:$0xff] %vm394, %v2354
        %2600 = vst.msk [vmem:[%s247 + $0x230] sm:$0xff] %vm394, %v2357
        %2601 = vst.msk [vmem:[%s247 + $0x238] sm:$0xff] %vm394, %v2360
        %2602 = vst.msk [vmem:[%s247 + $0x240] sm:$0xff] %vm394, %v2363
        %2603 = vst.msk [vmem:[%s247 + $0x248] sm:$0xff] %vm394, %v2366
        %2604 = vst.msk [vmem:[%s247 + $0x250] sm:$0xff] %vm394, %v2369
        %2605 = vst.msk [vmem:[%s247 + $0x258] sm:$0xff] %vm394, %v2372
        %2606 = vst.msk [vmem:[%s247 + $0x260] sm:$0xff] %vm394, %v2375
        %2607 = vst.msk [vmem:[%s247 + $0x268] sm:$0xff] %vm394, %v2378
        %2608 = vst.msk [vmem:[%s247 + $0x270] sm:$0xff] %vm394, %v2381
        %2609 = vst.msk [vmem:[%s247 + $0x278] sm:$0xff] %vm394, %v2384
        %2610 = vst.msk [vmem:[%s247 + $0x280] sm:$0xff] %vm394, %v2387
        %2611 = vst.msk [vmem:[%s247 + $0x288] sm:$0xff] %vm394, %v2390
        %2612 = vst.msk [vmem:[%s247 + $0x290] sm:$0xff] %vm394, %v2393
        %2613 = vst.msk [vmem:[%s247 + $0x298] sm:$0xff] %vm394, %v2396
        %2614 = vst.msk [vmem:[%s247 + $0x2a0] sm:$0xff] %vm394, %v2399
        %2615 = vst.msk [vmem:[%s247 + $0x2a8] sm:$0xff] %vm394, %v2402
        %2616 = vst.msk [vmem:[%s247 + $0x2b0] sm:$0xff] %vm394, %v2405
        %2617 = vst.msk [vmem:[%s247 + $0x2b8] sm:$0xff] %vm394, %v2408
        %2618 = vst.msk [vmem:[%s247 + $0x2c0] sm:$0xff] %vm394, %v2411
        %2619 = vst.msk [vmem:[%s247 + $0x2c8] sm:$0xff] %vm394, %v2414
        %2620 = vst.msk [vmem:[%s247 + $0x2d0] sm:$0xff] %vm394, %v2417
        %2621 = vst.msk [vmem:[%s247 + $0x2d8] sm:$0xff] %vm394, %v2420
        %2622 = vst.msk [vmem:[%s247 + $0x2e0] sm:$0xff] %vm394, %v2423
        %2623 = vst.msk [vmem:[%s247 + $0x2e8] sm:$0xff] %vm394, %v2426
        %2624 = vst.msk [vmem:[%s247 + $0x2f0] sm:$0xff] %vm394, %v2429
        %2625 = vst.msk [vmem:[%s247 + $0x2f8] sm:$0xff] %vm394, %v2432
        %2626 = vst.msk [vmem:[%s247 + $0x300] sm:$0xff] %vm394, %v2435
        %2627 = vst.msk [vmem:[%s247 + $0x308] sm:$0xff] %vm394, %v2438
        %2628 = vst.msk [vmem:[%s247 + $0x310] sm:$0xff] %vm394, %v2441
        %2629 = vst.msk [vmem:[%s247 + $0x318] sm:$0xff] %vm394, %v2444
        %2630 = vst.msk [vmem:[%s247 + $0x320] sm:$0xff] %vm394, %v2447
        %2631 = vst.msk [vmem:[%s247 + $0x328] sm:$0xff] %vm394, %v2450
        %2632 = vst.msk [vmem:[%s247 + $0x330] sm:$0xff] %vm394, %v2453
        %2633 = vst.msk [vmem:[%s247 + $0x338] sm:$0xff] %vm394, %v2456
        %2634 = vst.msk [vmem:[%s247 + $0x340] sm:$0xff] %vm394, %v2459
        %2635 = vst.msk [vmem:[%s247 + $0x348] sm:$0xff] %vm394, %v2462
        %2636 = vst.msk [vmem:[%s247 + $0x350] sm:$0xff] %vm394, %v2465
        %2637 = vst.msk [vmem:[%s247 + $0x358] sm:$0xff] %vm394, %v2468
        %2638 = vst.msk [vmem:[%s247 + $0x360] sm:$0xff] %vm394, %v2471
        %2639 = vst.msk [vmem:[%s247 + $0x368] sm:$0xff] %vm394, %v2474
        %2640 = vst.msk [vmem:[%s247 + $0x370] sm:$0xff] %vm394, %v2477
        %2641 = vst.msk [vmem:[%s247 + $0x378] sm:$0xff] %vm394, %v2480
        %2642 = vst.msk [vmem:[%s247 + $0x380] sm:$0xff] %vm394, %v2483
        %2643 = vst.msk [vmem:[%s247 + $0x388] sm:$0xff] %vm394, %v2486
        %2644 = vst.msk [vmem:[%s247 + $0x390] sm:$0xff] %vm394, %v2489
        %2645 = vst.msk [vmem:[%s247 + $0x398] sm:$0xff] %vm394, %v2492
        %2646 = vst.msk [vmem:[%s247 + $0x3a0] sm:$0xff] %vm394, %v2495
        %2647 = vst.msk [vmem:[%s247 + $0x3a8] sm:$0xff] %vm394, %v2498
        %2648 = vst.msk [vmem:[%s247 + $0x3b0] sm:$0xff] %vm394, %v2501
        %2649 = vst.msk [vmem:[%s247 + $0x3b8] sm:$0xff] %vm394, %v2504
        %2650 = vst.msk [vmem:[%s247 + $0x3c0] sm:$0xff] %vm394, %v2507
        %2651 = vst.msk [vmem:[%s247 + $0x3c8] sm:$0xff] %vm394, %v2510
        %2652 = vst.msk [vmem:[%s247 + $0x3d0] sm:$0xff] %vm394, %v2513
        %2653 = vst.msk [vmem:[%s247 + $0x3d8] sm:$0xff] %vm394, %v2516
        %2654 = vst.msk [vmem:[%s247 + $0x3e0] sm:$0xff] %vm394, %v2519
        %2655 = vst.msk [vmem:[%s247 + $0x3e8] sm:$0xff] %vm394, %v2522
        %2656 = vst.msk [vmem:[%s247 + $0x3f0] sm:$0xff] %vm394, %v2525
        %2657 = vst.msk [vmem:[%s247 + $0x3f8] sm:$0xff] %vm394, %v2528
        %v2658 = vperm.slane %v1488, %v1744
        %v2659 = vadd.s32 %v1744, 4294967288
        %v2660 = vperm.slane %v1490, %v2659
        %vm2661 = vcmask 130112
        %v2662 = vsel %vm2661, %v2660, %v2658
        %v2663 = vadd.s32 %v1744, 4294967280
        %v2664 = vperm.slane %v1492, %v2663
        %vm2665 = vcmask 195712
        %v2666 = vsel %vm2665, %v2664, %v2662
        %v2667 = vadd.s32 %v1744, 4294967272
        %v2668 = vperm.slane %v1494, %v2667
        %vm2669 = vcmask 261312
        %v2670 = vsel %vm2669, %v2668, %v2666
        %v2671 = vadd.s32 %v1744, 4294967264
        %v2672 = vperm.slane %v1496, %v2671
        %vm2673 = vcmask 326912
        %v2674 = vsel %vm2673, %v2672, %v2670
        %v2675 = vadd.s32 %v1744, 4294967256
        %v2676 = vperm.slane %v1498, %v2675
        %vm2677 = vcmask 392512
        %v2678 = vsel %vm2677, %v2676, %v2674
        %v2679 = vadd.s32 %v1744, 4294967248
        %v2680 = vperm.slane %v1500, %v2679
        %vm2681 = vcmask 458112
        %v2682 = vsel %vm2681, %v2680, %v2678
        %v2683 = vadd.s32 %v1744, 4294967240
        %v2684 = vperm.slane %v1502, %v2683
        %vm2685 = vcmask 523712
        %v2686 = vsel %vm2685, %v2684, %v2682
        %v2687 = vadd.s32 %v1744, 4294967232
        %v2688 = vperm.slane %v1504, %v2687
        %vm2689 = vcmask 589312
        %v2690 = vsel %vm2689, %v2688, %v2686
        %v2691 = vadd.s32 %v1744, 4294967224
        %v2692 = vperm.slane %v1506, %v2691
        %vm2693 = vcmask 654912
        %v2694 = vsel %vm2693, %v2692, %v2690
        %v2695 = vadd.s32 %v1744, 4294967216
        %v2696 = vperm.slane %v1508, %v2695
        %vm2697 = vcmask 720512
        %v2698 = vsel %vm2697, %v2696, %v2694
        %v2699 = vadd.s32 %v1744, 4294967208
        %v2700 = vperm.slane %v1510, %v2699
        %vm2701 = vcmask 786112
        %v2702 = vsel %vm2701, %v2700, %v2698
        %v2703 = vadd.s32 %v1744, 4294967200
        %v2704 = vperm.slane %v1512, %v2703
        %vm2705 = vcmask 851712
        %v2706 = vsel %vm2705, %v2704, %v2702
        %v2707 = vadd.s32 %v1744, 4294967192
        %v2708 = vperm.slane %v1514, %v2707
        %vm2709 = vcmask 917312
        %v2710 = vsel %vm2709, %v2708, %v2706
        %v2711 = vadd.s32 %v1744, 4294967184
        %v2712 = vperm.slane %v1516, %v2711
        %vm2713 = vcmask 982912
        %v2714 = vsel %vm2713, %v2712, %v2710
        %v2715 = vadd.s32 %v1744, 4294967176
        %v2716 = vperm.slane %v1518, %v2715
        %vm2717 = vcmask 1048512
        %v2718 = vsel %vm2717, %v2716, %v2714
        %2719 = vst [vmem:[%s229] ss:$8 sm:$0x1] %v2718
        %2720 = vst [vmem:[%s229] ss:$8 sm:$0x0] %v2718
        %v2721 = vperm.slane %v1520, %v1744
        %v2722 = vperm.slane %v1522, %v2659
        %v2723 = vsel %vm2661, %v2722, %v2721
        %v2724 = vperm.slane %v1524, %v2663
        %v2725 = vsel %vm2665, %v2724, %v2723
        %v2726 = vperm.slane %v1526, %v2667
        %v2727 = vsel %vm2669, %v2726, %v2725
        %v2728 = vperm.slane %v1528, %v2671
        %v2729 = vsel %vm2673, %v2728, %v2727
        %v2730 = vperm.slane %v1530, %v2675
        %v2731 = vsel %vm2677, %v2730, %v2729
        %v2732 = vperm.slane %v1532, %v2679
        %v2733 = vsel %vm2681, %v2732, %v2731
        %v2734 = vperm.slane %v1534, %v2683
        %v2735 = vsel %vm2685, %v2734, %v2733
        %v2736 = vperm.slane %v1536, %v2687
        %v2737 = vsel %vm2689, %v2736, %v2735
        %v2738 = vperm.slane %v1538, %v2691
        %v2739 = vsel %vm2693, %v2738, %v2737
        %v2740 = vperm.slane %v1540, %v2695
        %v2741 = vsel %vm2697, %v2740, %v2739
        %v2742 = vperm.slane %v1542, %v2699
        %v2743 = vsel %vm2701, %v2742, %v2741
        %v2744 = vperm.slane %v1544, %v2703
        %v2745 = vsel %vm2705, %v2744, %v2743
        %v2746 = vperm.slane %v1546, %v2707
        %v2747 = vsel %vm2709, %v2746, %v2745
        %v2748 = vperm.slane %v1548, %v2711
        %v2749 = vsel %vm2713, %v2748, %v2747
        %v2750 = vperm.slane %v1550, %v2715
        %v2751 = vsel %vm2717, %v2750, %v2749
        %s2752 = scalar_lea.vmem %s229, 1 [#allocation2]
        %2753 = vst [vmem:[%s2752] ss:$8 sm:$0x1] %v2751
        %2754 = vst [vmem:[%s2752] ss:$8 sm:$0x0] %v2751
        %v2755 = vperm.slane %v1552, %v1744
        %v2756 = vperm.slane %v1554, %v2659
        %v2757 = vsel %vm2661, %v2756, %v2755
        %v2758 = vperm.slane %v1556, %v2663
        %v2759 = vsel %vm2665, %v2758, %v2757
        %v2760 = vperm.slane %v1558, %v2667
        %v2761 = vsel %vm2669, %v2760, %v2759
        %v2762 = vperm.slane %v1560, %v2671
        %v2763 = vsel %vm2673, %v2762, %v2761
        %v2764 = vperm.slane %v1562, %v2675
        %v2765 = vsel %vm2677, %v2764, %v2763
        %v2766 = vperm.slane %v1564, %v2679
        %v2767 = vsel %vm2681, %v2766, %v2765
        %v2768 = vperm.slane %v1566, %v2683
        %v2769 = vsel %vm2685, %v2768, %v2767
        %v2770 = vperm.slane %v1568, %v2687
        %v2771 = vsel %vm2689, %v2770, %v2769
        %v2772 = vperm.slane %v1570, %v2691
        %v2773 = vsel %vm2693, %v2772, %v2771
        %v2774 = vperm.slane %v1572, %v2695
        %v2775 = vsel %vm2697, %v2774, %v2773
        %v2776 = vperm.slane %v1574, %v2699
        %v2777 = vsel %vm2701, %v2776, %v2775
        %v2778 = vperm.slane %v1576, %v2703
        %v2779 = vsel %vm2705, %v2778, %v2777
        %v2780 = vperm.slane %v1578, %v2707
        %v2781 = vsel %vm2709, %v2780, %v2779
        %v2782 = vperm.slane %v1580, %v2711
        %v2783 = vsel %vm2713, %v2782, %v2781
        %v2784 = vperm.slane %v1582, %v2715
        %v2785 = vsel %vm2717, %v2784, %v2783
        %s2786 = scalar_lea.vmem %s229, 2 [#allocation2]
        %2787 = vst [vmem:[%s2786] ss:$8 sm:$0x1] %v2785
        %2788 = vst [vmem:[%s2786] ss:$8 sm:$0x0] %v2785
        %v2789 = vperm.slane %v1584, %v1744
        %v2790 = vperm.slane %v1586, %v2659
        %v2791 = vsel %vm2661, %v2790, %v2789
        %v2792 = vperm.slane %v1588, %v2663
        %v2793 = vsel %vm2665, %v2792, %v2791
        %v2794 = vperm.slane %v1590, %v2667
        %v2795 = vsel %vm2669, %v2794, %v2793
        %v2796 = vperm.slane %v1592, %v2671
        %v2797 = vsel %vm2673, %v2796, %v2795
        %v2798 = vperm.slane %v1594, %v2675
        %v2799 = vsel %vm2677, %v2798, %v2797
        %v2800 = vperm.slane %v1596, %v2679
        %v2801 = vsel %vm2681, %v2800, %v2799
        %v2802 = vperm.slane %v1598, %v2683
        %v2803 = vsel %vm2685, %v2802, %v2801
        %v2804 = vperm.slane %v1600, %v2687
        %v2805 = vsel %vm2689, %v2804, %v2803
        %v2806 = vperm.slane %v1602, %v2691
        %v2807 = vsel %vm2693, %v2806, %v2805
        %v2808 = vperm.slane %v1604, %v2695
        %v2809 = vsel %vm2697, %v2808, %v2807
        %v2810 = vperm.slane %v1606, %v2699
        %v2811 = vsel %vm2701, %v2810, %v2809
        %v2812 = vperm.slane %v1608, %v2703
        %v2813 = vsel %vm2705, %v2812, %v2811
        %v2814 = vperm.slane %v1610, %v2707
        %v2815 = vsel %vm2709, %v2814, %v2813
        %v2816 = vperm.slane %v1612, %v2711
        %v2817 = vsel %vm2713, %v2816, %v2815
        %v2818 = vperm.slane %v1614, %v2715
        %v2819 = vsel %vm2717, %v2818, %v2817
        %s2820 = scalar_lea.vmem %s229, 3 [#allocation2]
        %2821 = vst [vmem:[%s2820] ss:$8 sm:$0x1] %v2819
        %2822 = vst [vmem:[%s2820] ss:$8 sm:$0x0] %v2819
        %v2823 = vperm.slane %v1616, %v1744
        %v2824 = vperm.slane %v1618, %v2659
        %v2825 = vsel %vm2661, %v2824, %v2823
        %v2826 = vperm.slane %v1620, %v2663
        %v2827 = vsel %vm2665, %v2826, %v2825
        %v2828 = vperm.slane %v1622, %v2667
        %v2829 = vsel %vm2669, %v2828, %v2827
        %v2830 = vperm.slane %v1624, %v2671
        %v2831 = vsel %vm2673, %v2830, %v2829
        %v2832 = vperm.slane %v1626, %v2675
        %v2833 = vsel %vm2677, %v2832, %v2831
        %v2834 = vperm.slane %v1628, %v2679
        %v2835 = vsel %vm2681, %v2834, %v2833
        %v2836 = vperm.slane %v1630, %v2683
        %v2837 = vsel %vm2685, %v2836, %v2835
        %v2838 = vperm.slane %v1632, %v2687
        %v2839 = vsel %vm2689, %v2838, %v2837
        %v2840 = vperm.slane %v1634, %v2691
        %v2841 = vsel %vm2693, %v2840, %v2839
        %v2842 = vperm.slane %v1636, %v2695
        %v2843 = vsel %vm2697, %v2842, %v2841
        %v2844 = vperm.slane %v1638, %v2699
        %v2845 = vsel %vm2701, %v2844, %v2843
        %v2846 = vperm.slane %v1640, %v2703
        %v2847 = vsel %vm2705, %v2846, %v2845
        %v2848 = vperm.slane %v1642, %v2707
        %v2849 = vsel %vm2709, %v2848, %v2847
        %v2850 = vperm.slane %v1644, %v2711
        %v2851 = vsel %vm2713, %v2850, %v2849
        %v2852 = vperm.slane %v1646, %v2715
        %v2853 = vsel %vm2717, %v2852, %v2851
        %s2854 = scalar_lea.vmem %s229, 4 [#allocation2]
        %2855 = vst [vmem:[%s2854] ss:$8 sm:$0x1] %v2853
        %2856 = vst [vmem:[%s2854] ss:$8 sm:$0x0] %v2853
        %v2857 = vperm.slane %v1648, %v1744
        %v2858 = vperm.slane %v1650, %v2659
        %v2859 = vsel %vm2661, %v2858, %v2857
        %v2860 = vperm.slane %v1652, %v2663
        %v2861 = vsel %vm2665, %v2860, %v2859
        %v2862 = vperm.slane %v1654, %v2667
        %v2863 = vsel %vm2669, %v2862, %v2861
        %v2864 = vperm.slane %v1656, %v2671
        %v2865 = vsel %vm2673, %v2864, %v2863
        %v2866 = vperm.slane %v1658, %v2675
        %v2867 = vsel %vm2677, %v2866, %v2865
        %v2868 = vperm.slane %v1660, %v2679
        %v2869 = vsel %vm2681, %v2868, %v2867
        %v2870 = vperm.slane %v1662, %v2683
        %v2871 = vsel %vm2685, %v2870, %v2869
        %v2872 = vperm.slane %v1664, %v2687
        %v2873 = vsel %vm2689, %v2872, %v2871
        %v2874 = vperm.slane %v1666, %v2691
        %v2875 = vsel %vm2693, %v2874, %v2873
        %v2876 = vperm.slane %v1668, %v2695
        %v2877 = vsel %vm2697, %v2876, %v2875
        %v2878 = vperm.slane %v1670, %v2699
        %v2879 = vsel %vm2701, %v2878, %v2877
        %v2880 = vperm.slane %v1672, %v2703
        %v2881 = vsel %vm2705, %v2880, %v2879
        %v2882 = vperm.slane %v1674, %v2707
        %v2883 = vsel %vm2709, %v2882, %v2881
        %v2884 = vperm.slane %v1676, %v2711
        %v2885 = vsel %vm2713, %v2884, %v2883
        %v2886 = vperm.slane %v1678, %v2715
        %v2887 = vsel %vm2717, %v2886, %v2885
        %s2888 = scalar_lea.vmem %s229, 5 [#allocation2]
        %2889 = vst [vmem:[%s2888] ss:$8 sm:$0x1] %v2887
        %2890 = vst [vmem:[%s2888] ss:$8 sm:$0x0] %v2887
        %v2891 = vperm.slane %v1680, %v1744
        %v2892 = vperm.slane %v1682, %v2659
        %v2893 = vsel %vm2661, %v2892, %v2891
        %v2894 = vperm.slane %v1684, %v2663
        %v2895 = vsel %vm2665, %v2894, %v2893
        %v2896 = vperm.slane %v1686, %v2667
        %v2897 = vsel %vm2669, %v2896, %v2895
        %v2898 = vperm.slane %v1688, %v2671
        %v2899 = vsel %vm2673, %v2898, %v2897
        %v2900 = vperm.slane %v1690, %v2675
        %v2901 = vsel %vm2677, %v2900, %v2899
        %v2902 = vperm.slane %v1692, %v2679
        %v2903 = vsel %vm2681, %v2902, %v2901
        %v2904 = vperm.slane %v1694, %v2683
        %v2905 = vsel %vm2685, %v2904, %v2903
        %v2906 = vperm.slane %v1696, %v2687
        %v2907 = vsel %vm2689, %v2906, %v2905
        %v2908 = vperm.slane %v1698, %v2691
        %v2909 = vsel %vm2693, %v2908, %v2907
        %v2910 = vperm.slane %v1700, %v2695
        %v2911 = vsel %vm2697, %v2910, %v2909
        %v2912 = vperm.slane %v1702, %v2699
        %v2913 = vsel %vm2701, %v2912, %v2911
        %v2914 = vperm.slane %v1704, %v2703
        %v2915 = vsel %vm2705, %v2914, %v2913
        %v2916 = vperm.slane %v1706, %v2707
        %v2917 = vsel %vm2709, %v2916, %v2915
        %v2918 = vperm.slane %v1708, %v2711
        %v2919 = vsel %vm2713, %v2918, %v2917
        %v2920 = vperm.slane %v1710, %v2715
        %v2921 = vsel %vm2717, %v2920, %v2919
        %s2922 = scalar_lea.vmem %s229, 6 [#allocation2]
        %2923 = vst [vmem:[%s2922] ss:$8 sm:$0x1] %v2921
        %2924 = vst [vmem:[%s2922] ss:$8 sm:$0x0] %v2921
        %v2925 = vperm.slane %v1712, %v1744
        %v2926 = vperm.slane %v1714, %v2659
        %v2927 = vsel %vm2661, %v2926, %v2925
        %v2928 = vperm.slane %v1716, %v2663
        %v2929 = vsel %vm2665, %v2928, %v2927
        %v2930 = vperm.slane %v1718, %v2667
        %v2931 = vsel %vm2669, %v2930, %v2929
        %v2932 = vperm.slane %v1720, %v2671
        %v2933 = vsel %vm2673, %v2932, %v2931
        %v2934 = vperm.slane %v1722, %v2675
        %v2935 = vsel %vm2677, %v2934, %v2933
        %v2936 = vperm.slane %v1724, %v2679
        %v2937 = vsel %vm2681, %v2936, %v2935
        %v2938 = vperm.slane %v1726, %v2683
        %v2939 = vsel %vm2685, %v2938, %v2937
        %v2940 = vperm.slane %v1728, %v2687
        %v2941 = vsel %vm2689, %v2940, %v2939
        %v2942 = vperm.slane %v1730, %v2691
        %v2943 = vsel %vm2693, %v2942, %v2941
        %v2944 = vperm.slane %v1732, %v2695
        %v2945 = vsel %vm2697, %v2944, %v2943
        %v2946 = vperm.slane %v1734, %v2699
        %v2947 = vsel %vm2701, %v2946, %v2945
        %v2948 = vperm.slane %v1736, %v2703
        %v2949 = vsel %vm2705, %v2948, %v2947
        %v2950 = vperm.slane %v1738, %v2707
        %v2951 = vsel %vm2709, %v2950, %v2949
        %v2952 = vperm.slane %v1740, %v2711
        %v2953 = vsel %vm2713, %v2952, %v2951
        %v2954 = vperm.slane %v1742, %v2715
        %v2955 = vsel %vm2717, %v2954, %v2953
        %s2956 = scalar_lea.vmem %s229, 7 [#allocation2]
        %2957 = vst [vmem:[%s2956] ss:$8 sm:$0x1] %v2955
        %2958 = vst [vmem:[%s2956] ss:$8 sm:$0x0] %v2955
        %v2959 = vsub.f32 %v2147, %v249
        %v2960 = vsub.f32 %v2150, %v250
        %v2961 = vsub.f32 %v2153, %v251
        %v2962 = vsub.f32 %v2156, %v252
        %v2963 = vsub.f32 %v2159, %v253
        %v2964 = vsub.f32 %v2162, %v254
        %v2965 = vsub.f32 %v2165, %v255
        %v2966 = vsub.f32 %v2168, %v256
        %v2967 = vsub.f32 %v2171, %v257
        %v2968 = vsub.f32 %v2174, %v258
        %v2969 = vsub.f32 %v2177, %v259
        %v2970 = vsub.f32 %v2180, %v260
        %v2971 = vsub.f32 %v2183, %v261
        %v2972 = vsub.f32 %v2186, %v262
        %v2973 = vsub.f32 %v2189, %v263
        %v2974 = vsub.f32 %v2192, %v264
        %v2975 = vsub.f32 %v2195, %v265
        %v2976 = vsub.f32 %v2198, %v266
        %v2977 = vsub.f32 %v2201, %v267
        %v2978 = vsub.f32 %v2204, %v268
        %v2979 = vsub.f32 %v2207, %v269
        %v2980 = vsub.f32 %v2210, %v270
        %v2981 = vsub.f32 %v2213, %v271
        %v2982 = vsub.f32 %v2216, %v272
        %v2983 = vsub.f32 %v2219, %v273
        %v2984 = vsub.f32 %v2222, %v274
        %v2985 = vsub.f32 %v2225, %v275
        %v2986 = vsub.f32 %v2228, %v276
        %v2987 = vsub.f32 %v2231, %v277
        %v2988 = vsub.f32 %v2234, %v278
        %v2989 = vsub.f32 %v2237, %v279
        %v2990 = vsub.f32 %v2240, %v280
        %v2991 = vsub.f32 %v2243, %v281
        %v2992 = vsub.f32 %v2246, %v282
        %v2993 = vsub.f32 %v2249, %v283
        %v2994 = vsub.f32 %v2252, %v284
        %v2995 = vsub.f32 %v2255, %v285
        %v2996 = vsub.f32 %v2258, %v286
        %v2997 = vsub.f32 %v2261, %v287
        %v2998 = vsub.f32 %v2264, %v288
        %v2999 = vsub.f32 %v2267, %v289
        %v3000 = vsub.f32 %v2270, %v290
        %v3001 = vsub.f32 %v2273, %v291
        %v3002 = vsub.f32 %v2276, %v292
        %v3003 = vsub.f32 %v2279, %v293
        %v3004 = vsub.f32 %v2282, %v294
        %v3005 = vsub.f32 %v2285, %v295
        %v3006 = vsub.f32 %v2288, %v296
        %v3007 = vsub.f32 %v2291, %v297
        %v3008 = vsub.f32 %v2294, %v298
        %v3009 = vsub.f32 %v2297, %v299
        %v3010 = vsub.f32 %v2300, %v300
        %v3011 = vsub.f32 %v2303, %v301
        %v3012 = vsub.f32 %v2306, %v302
        %v3013 = vsub.f32 %v2309, %v303
        %v3014 = vsub.f32 %v2312, %v304
        %v3015 = vsub.f32 %v2315, %v305
        %v3016 = vsub.f32 %v2318, %v306
        %v3017 = vsub.f32 %v2321, %v307
        %v3018 = vsub.f32 %v2324, %v308
        %v3019 = vsub.f32 %v2327, %v309
        %v3020 = vsub.f32 %v2330, %v310
        %v3021 = vsub.f32 %v2333, %v311
        %v3022 = vsub.f32 %v2336, %v312
        %v3023 = vsub.f32 %v2339, %v313
        %v3024 = vsub.f32 %v2342, %v314
        %v3025 = vsub.f32 %v2345, %v315
        %v3026 = vsub.f32 %v2348, %v316
        %v3027 = vsub.f32 %v2351, %v317
        %v3028 = vsub.f32 %v2354, %v318
        %v3029 = vsub.f32 %v2357, %v319
        %v3030 = vsub.f32 %v2360, %v320
        %v3031 = vsub.f32 %v2363, %v321
        %v3032 = vsub.f32 %v2366, %v322
        %v3033 = vsub.f32 %v2369, %v323
        %v3034 = vsub.f32 %v2372, %v324
        %v3035 = vsub.f32 %v2375, %v325
        %v3036 = vsub.f32 %v2378, %v326
        %v3037 = vsub.f32 %v2381, %v327
        %v3038 = vsub.f32 %v2384, %v328
        %v3039 = vsub.f32 %v2387, %v329
        %v3040 = vsub.f32 %v2390, %v330
        %v3041 = vsub.f32 %v2393, %v331
        %v3042 = vsub.f32 %v2396, %v332
        %v3043 = vsub.f32 %v2399, %v333
        %v3044 = vsub.f32 %v2402, %v334
        %v3045 = vsub.f32 %v2405, %v335
        %v3046 = vsub.f32 %v2408, %v336
        %v3047 = vsub.f32 %v2411, %v337
        %v3048 = vsub.f32 %v2414, %v338
        %v3049 = vsub.f32 %v2417, %v339
        %v3050 = vsub.f32 %v2420, %v340
        %v3051 = vsub.f32 %v2423, %v341
        %v3052 = vsub.f32 %v2426, %v342
        %v3053 = vsub.f32 %v2429, %v343
        %v3054 = vsub.f32 %v2432, %v344
        %v3055 = vsub.f32 %v2435, %v345
        %v3056 = vsub.f32 %v2438, %v346
        %v3057 = vsub.f32 %v2441, %v347
        %v3058 = vsub.f32 %v2444, %v348
        %v3059 = vsub.f32 %v2447, %v349
        %v3060 = vsub.f32 %v2450, %v350
        %v3061 = vsub.f32 %v2453, %v351
        %v3062 = vsub.f32 %v2456, %v352
        %v3063 = vsub.f32 %v2459, %v353
        %v3064 = vsub.f32 %v2462, %v354
        %v3065 = vsub.f32 %v2465, %v355
        %v3066 = vsub.f32 %v2468, %v356
        %v3067 = vsub.f32 %v2471, %v357
        %v3068 = vsub.f32 %v2474, %v358
        %v3069 = vsub.f32 %v2477, %v359
        %v3070 = vsub.f32 %v2480, %v360
        %v3071 = vsub.f32 %v2483, %v361
        %v3072 = vsub.f32 %v2486, %v362
        %v3073 = vsub.f32 %v2489, %v363
        %v3074 = vsub.f32 %v2492, %v364
        %v3075 = vsub.f32 %v2495, %v365
        %v3076 = vsub.f32 %v2498, %v366
        %v3077 = vsub.f32 %v2501, %v367
        %v3078 = vsub.f32 %v2504, %v368
        %v3079 = vsub.f32 %v2507, %v369
        %v3080 = vsub.f32 %v2510, %v370
        %v3081 = vsub.f32 %v2513, %v371
        %v3082 = vsub.f32 %v2516, %v372
        %v3083 = vsub.f32 %v2519, %v373
        %v3084 = vsub.f32 %v2522, %v374
        %v3085 = vsub.f32 %v2525, %v375
        %v3086 = vsub.f32 %v2528, %v376
        %v3087 = vmul.f32 %v2959, %v2959
        %v3088 = vmul.f32 %v2960, %v2960
        %v3089 = vmul.f32 %v2961, %v2961
        %v3090 = vmul.f32 %v2962, %v2962
        %v3091 = vmul.f32 %v2963, %v2963
        %v3092 = vmul.f32 %v2964, %v2964
        %v3093 = vmul.f32 %v2965, %v2965
        %v3094 = vmul.f32 %v2966, %v2966
        %v3095 = vmul.f32 %v2967, %v2967
        %v3096 = vmul.f32 %v2968, %v2968
        %v3097 = vmul.f32 %v2969, %v2969
        %v3098 = vmul.f32 %v2970, %v2970
        %v3099 = vmul.f32 %v2971, %v2971
        %v3100 = vmul.f32 %v2972, %v2972
        %v3101 = vmul.f32 %v2973, %v2973
        %v3102 = vmul.f32 %v2974, %v2974
        %v3103 = vmul.f32 %v2975, %v2975
        %v3104 = vmul.f32 %v2976, %v2976
        %v3105 = vmul.f32 %v2977, %v2977
        %v3106 = vmul.f32 %v2978, %v2978
        %v3107 = vmul.f32 %v2979, %v2979
        %v3108 = vmul.f32 %v2980, %v2980
        %v3109 = vmul.f32 %v2981, %v2981
        %v3110 = vmul.f32 %v2982, %v2982
        %v3111 = vmul.f32 %v2983, %v2983
        %v3112 = vmul.f32 %v2984, %v2984
        %v3113 = vmul.f32 %v2985, %v2985
        %v3114 = vmul.f32 %v2986, %v2986
        %v3115 = vmul.f32 %v2987, %v2987
        %v3116 = vmul.f32 %v2988, %v2988
        %v3117 = vmul.f32 %v2989, %v2989
        %v3118 = vmul.f32 %v2990, %v2990
        %v3119 = vmul.f32 %v2991, %v2991
        %v3120 = vmul.f32 %v2992, %v2992
        %v3121 = vmul.f32 %v2993, %v2993
        %v3122 = vmul.f32 %v2994, %v2994
        %v3123 = vmul.f32 %v2995, %v2995
        %v3124 = vmul.f32 %v2996, %v2996
        %v3125 = vmul.f32 %v2997, %v2997
        %v3126 = vmul.f32 %v2998, %v2998
        %v3127 = vmul.f32 %v2999, %v2999
        %v3128 = vmul.f32 %v3000, %v3000
        %v3129 = vmul.f32 %v3001, %v3001
        %v3130 = vmul.f32 %v3002, %v3002
        %v3131 = vmul.f32 %v3003, %v3003
        %v3132 = vmul.f32 %v3004, %v3004
        %v3133 = vmul.f32 %v3005, %v3005
        %v3134 = vmul.f32 %v3006, %v3006
        %v3135 = vmul.f32 %v3007, %v3007
        %v3136 = vmul.f32 %v3008, %v3008
        %v3137 = vmul.f32 %v3009, %v3009
        %v3138 = vmul.f32 %v3010, %v3010
        %v3139 = vmul.f32 %v3011, %v3011
        %v3140 = vmul.f32 %v3012, %v3012
        %v3141 = vmul.f32 %v3013, %v3013
        %v3142 = vmul.f32 %v3014, %v3014
        %v3143 = vmul.f32 %v3015, %v3015
        %v3144 = vmul.f32 %v3016, %v3016
        %v3145 = vmul.f32 %v3017, %v3017
        %v3146 = vmul.f32 %v3018, %v3018
        %v3147 = vmul.f32 %v3019, %v3019
        %v3148 = vmul.f32 %v3020, %v3020
        %v3149 = vmul.f32 %v3021, %v3021
        %v3150 = vmul.f32 %v3022, %v3022
        %v3151 = vmul.f32 %v3023, %v3023
        %v3152 = vmul.f32 %v3024, %v3024
        %v3153 = vmul.f32 %v3025, %v3025
        %v3154 = vmul.f32 %v3026, %v3026
        %v3155 = vmul.f32 %v3027, %v3027
        %v3156 = vmul.f32 %v3028, %v3028
        %v3157 = vmul.f32 %v3029, %v3029
        %v3158 = vmul.f32 %v3030, %v3030
        %v3159 = vmul.f32 %v3031, %v3031
        %v3160 = vmul.f32 %v3032, %v3032
        %v3161 = vmul.f32 %v3033, %v3033
        %v3162 = vmul.f32 %v3034, %v3034
        %v3163 = vmul.f32 %v3035, %v3035
        %v3164 = vmul.f32 %v3036, %v3036
        %v3165 = vmul.f32 %v3037, %v3037
        %v3166 = vmul.f32 %v3038, %v3038
        %v3167 = vmul.f32 %v3039, %v3039
        %v3168 = vmul.f32 %v3040, %v3040
        %v3169 = vmul.f32 %v3041, %v3041
        %v3170 = vmul.f32 %v3042, %v3042
        %v3171 = vmul.f32 %v3043, %v3043
        %v3172 = vmul.f32 %v3044, %v3044
        %v3173 = vmul.f32 %v3045, %v3045
        %v3174 = vmul.f32 %v3046, %v3046
        %v3175 = vmul.f32 %v3047, %v3047
        %v3176 = vmul.f32 %v3048, %v3048
        %v3177 = vmul.f32 %v3049, %v3049
        %v3178 = vmul.f32 %v3050, %v3050
        %v3179 = vmul.f32 %v3051, %v3051
        %v3180 = vmul.f32 %v3052, %v3052
        %v3181 = vmul.f32 %v3053, %v3053
        %v3182 = vmul.f32 %v3054, %v3054
        %v3183 = vmul.f32 %v3055, %v3055
        %v3184 = vmul.f32 %v3056, %v3056
        %v3185 = vmul.f32 %v3057, %v3057
        %v3186 = vmul.f32 %v3058, %v3058
        %v3187 = vmul.f32 %v3059, %v3059
        %v3188 = vmul.f32 %v3060, %v3060
        %v3189 = vmul.f32 %v3061, %v3061
        %v3190 = vmul.f32 %v3062, %v3062
        %v3191 = vmul.f32 %v3063, %v3063
        %v3192 = vmul.f32 %v3064, %v3064
        %v3193 = vmul.f32 %v3065, %v3065
        %v3194 = vmul.f32 %v3066, %v3066
        %v3195 = vmul.f32 %v3067, %v3067
        %v3196 = vmul.f32 %v3068, %v3068
        %v3197 = vmul.f32 %v3069, %v3069
        %v3198 = vmul.f32 %v3070, %v3070
        %v3199 = vmul.f32 %v3071, %v3071
        %v3200 = vmul.f32 %v3072, %v3072
        %v3201 = vmul.f32 %v3073, %v3073
        %v3202 = vmul.f32 %v3074, %v3074
        %v3203 = vmul.f32 %v3075, %v3075
        %v3204 = vmul.f32 %v3076, %v3076
        %v3205 = vmul.f32 %v3077, %v3077
        %v3206 = vmul.f32 %v3078, %v3078
        %v3207 = vmul.f32 %v3079, %v3079
        %v3208 = vmul.f32 %v3080, %v3080
        %v3209 = vmul.f32 %v3081, %v3081
        %v3210 = vmul.f32 %v3082, %v3082
        %v3211 = vmul.f32 %v3083, %v3083
        %v3212 = vmul.f32 %v3084, %v3084
        %v3213 = vmul.f32 %v3085, %v3085
        %v3214 = vmul.f32 %v3086, %v3086
        %v3215 = vsel %vm394, %v3087, 0.0
        %3216 = vadd.xlane.f32.xlu0 %v3215
        %v3217 = vpop.xlane.xlu0 %3216
        %v3218 = vsel %vm394, %v3088, 0.0
        %3219 = vadd.xlane.f32.xlu0 %v3218
        %v3220 = vpop.xlane.xlu0 %3219
        %v3221 = vsel %vm394, %v3089, 0.0
        %3222 = vadd.xlane.f32.xlu0 %v3221
        %v3223 = vpop.xlane.xlu0 %3222
        %v3224 = vsel %vm394, %v3090, 0.0
        %3225 = vadd.xlane.f32.xlu0 %v3224
        %v3226 = vpop.xlane.xlu0 %3225
        %v3227 = vsel %vm394, %v3091, 0.0
        %3228 = vadd.xlane.f32.xlu0 %v3227
        %v3229 = vpop.xlane.xlu0 %3228
        %v3230 = vsel %vm394, %v3092, 0.0
        %3231 = vadd.xlane.f32.xlu0 %v3230
        %v3232 = vpop.xlane.xlu0 %3231
        %v3233 = vsel %vm394, %v3093, 0.0
        %3234 = vadd.xlane.f32.xlu0 %v3233
        %v3235 = vpop.xlane.xlu0 %3234
        %v3236 = vsel %vm394, %v3094, 0.0
        %3237 = vadd.xlane.f32.xlu0 %v3236
        %v3238 = vpop.xlane.xlu0 %3237
        %v3239 = vsel %vm394, %v3095, 0.0
        %3240 = vadd.xlane.f32.xlu0 %v3239
        %v3241 = vpop.xlane.xlu0 %3240
        %v3242 = vsel %vm394, %v3096, 0.0
        %3243 = vadd.xlane.f32.xlu0 %v3242
        %v3244 = vpop.xlane.xlu0 %3243
        %v3245 = vsel %vm394, %v3097, 0.0
        %3246 = vadd.xlane.f32.xlu0 %v3245
        %v3247 = vpop.xlane.xlu0 %3246
        %v3248 = vsel %vm394, %v3098, 0.0
        %3249 = vadd.xlane.f32.xlu0 %v3248
        %v3250 = vpop.xlane.xlu0 %3249
        %v3251 = vsel %vm394, %v3099, 0.0
        %3252 = vadd.xlane.f32.xlu0 %v3251
        %v3253 = vpop.xlane.xlu0 %3252
        %v3254 = vsel %vm394, %v3100, 0.0
        %3255 = vadd.xlane.f32.xlu0 %v3254
        %v3256 = vpop.xlane.xlu0 %3255
        %v3257 = vsel %vm394, %v3101, 0.0
        %3258 = vadd.xlane.f32.xlu0 %v3257
        %v3259 = vpop.xlane.xlu0 %3258
        %v3260 = vsel %vm394, %v3102, 0.0
        %3261 = vadd.xlane.f32.xlu0 %v3260
        %v3262 = vpop.xlane.xlu0 %3261
        %v3263 = vsel %vm394, %v3103, 0.0
        %3264 = vadd.xlane.f32.xlu0 %v3263
        %v3265 = vpop.xlane.xlu0 %3264
        %v3266 = vsel %vm394, %v3104, 0.0
        %3267 = vadd.xlane.f32.xlu0 %v3266
        %v3268 = vpop.xlane.xlu0 %3267
        %v3269 = vsel %vm394, %v3105, 0.0
        %3270 = vadd.xlane.f32.xlu0 %v3269
        %v3271 = vpop.xlane.xlu0 %3270
        %v3272 = vsel %vm394, %v3106, 0.0
        %3273 = vadd.xlane.f32.xlu0 %v3272
        %v3274 = vpop.xlane.xlu0 %3273
        %v3275 = vsel %vm394, %v3107, 0.0
        %3276 = vadd.xlane.f32.xlu0 %v3275
        %v3277 = vpop.xlane.xlu0 %3276
        %v3278 = vsel %vm394, %v3108, 0.0
        %3279 = vadd.xlane.f32.xlu0 %v3278
        %v3280 = vpop.xlane.xlu0 %3279
        %v3281 = vsel %vm394, %v3109, 0.0
        %3282 = vadd.xlane.f32.xlu0 %v3281
        %v3283 = vpop.xlane.xlu0 %3282
        %v3284 = vsel %vm394, %v3110, 0.0
        %3285 = vadd.xlane.f32.xlu0 %v3284
        %v3286 = vpop.xlane.xlu0 %3285
        %v3287 = vsel %vm394, %v3111, 0.0
        %3288 = vadd.xlane.f32.xlu0 %v3287
        %v3289 = vpop.xlane.xlu0 %3288
        %v3290 = vsel %vm394, %v3112, 0.0
        %3291 = vadd.xlane.f32.xlu0 %v3290
        %v3292 = vpop.xlane.xlu0 %3291
        %v3293 = vsel %vm394, %v3113, 0.0
        %3294 = vadd.xlane.f32.xlu0 %v3293
        %v3295 = vpop.xlane.xlu0 %3294
        %v3296 = vsel %vm394, %v3114, 0.0
        %3297 = vadd.xlane.f32.xlu0 %v3296
        %v3298 = vpop.xlane.xlu0 %3297
        %v3299 = vsel %vm394, %v3115, 0.0
        %3300 = vadd.xlane.f32.xlu0 %v3299
        %v3301 = vpop.xlane.xlu0 %3300
        %v3302 = vsel %vm394, %v3116, 0.0
        %3303 = vadd.xlane.f32.xlu0 %v3302
        %v3304 = vpop.xlane.xlu0 %3303
        %v3305 = vsel %vm394, %v3117, 0.0
        %3306 = vadd.xlane.f32.xlu0 %v3305
        %v3307 = vpop.xlane.xlu0 %3306
        %v3308 = vsel %vm394, %v3118, 0.0
        %3309 = vadd.xlane.f32.xlu0 %v3308
        %v3310 = vpop.xlane.xlu0 %3309
        %v3311 = vsel %vm394, %v3119, 0.0
        %3312 = vadd.xlane.f32.xlu0 %v3311
        %v3313 = vpop.xlane.xlu0 %3312
        %v3314 = vsel %vm394, %v3120, 0.0
        %3315 = vadd.xlane.f32.xlu0 %v3314
        %v3316 = vpop.xlane.xlu0 %3315
        %v3317 = vsel %vm394, %v3121, 0.0
        %3318 = vadd.xlane.f32.xlu0 %v3317
        %v3319 = vpop.xlane.xlu0 %3318
        %v3320 = vsel %vm394, %v3122, 0.0
        %3321 = vadd.xlane.f32.xlu0 %v3320
        %v3322 = vpop.xlane.xlu0 %3321
        %v3323 = vsel %vm394, %v3123, 0.0
        %3324 = vadd.xlane.f32.xlu0 %v3323
        %v3325 = vpop.xlane.xlu0 %3324
        %v3326 = vsel %vm394, %v3124, 0.0
        %3327 = vadd.xlane.f32.xlu0 %v3326
        %v3328 = vpop.xlane.xlu0 %3327
        %v3329 = vsel %vm394, %v3125, 0.0
        %3330 = vadd.xlane.f32.xlu0 %v3329
        %v3331 = vpop.xlane.xlu0 %3330
        %v3332 = vsel %vm394, %v3126, 0.0
        %3333 = vadd.xlane.f32.xlu0 %v3332
        %v3334 = vpop.xlane.xlu0 %3333
        %v3335 = vsel %vm394, %v3127, 0.0
        %3336 = vadd.xlane.f32.xlu0 %v3335
        %v3337 = vpop.xlane.xlu0 %3336
        %v3338 = vsel %vm394, %v3128, 0.0
        %3339 = vadd.xlane.f32.xlu0 %v3338
        %v3340 = vpop.xlane.xlu0 %3339
        %v3341 = vsel %vm394, %v3129, 0.0
        %3342 = vadd.xlane.f32.xlu0 %v3341
        %v3343 = vpop.xlane.xlu0 %3342
        %v3344 = vsel %vm394, %v3130, 0.0
        %3345 = vadd.xlane.f32.xlu0 %v3344
        %v3346 = vpop.xlane.xlu0 %3345
        %v3347 = vsel %vm394, %v3131, 0.0
        %3348 = vadd.xlane.f32.xlu0 %v3347
        %v3349 = vpop.xlane.xlu0 %3348
        %v3350 = vsel %vm394, %v3132, 0.0
        %3351 = vadd.xlane.f32.xlu0 %v3350
        %v3352 = vpop.xlane.xlu0 %3351
        %v3353 = vsel %vm394, %v3133, 0.0
        %3354 = vadd.xlane.f32.xlu0 %v3353
        %v3355 = vpop.xlane.xlu0 %3354
        %v3356 = vsel %vm394, %v3134, 0.0
        %3357 = vadd.xlane.f32.xlu0 %v3356
        %v3358 = vpop.xlane.xlu0 %3357
        %v3359 = vsel %vm394, %v3135, 0.0
        %3360 = vadd.xlane.f32.xlu0 %v3359
        %v3361 = vpop.xlane.xlu0 %3360
        %v3362 = vsel %vm394, %v3136, 0.0
        %3363 = vadd.xlane.f32.xlu0 %v3362
        %v3364 = vpop.xlane.xlu0 %3363
        %v3365 = vsel %vm394, %v3137, 0.0
        %3366 = vadd.xlane.f32.xlu0 %v3365
        %v3367 = vpop.xlane.xlu0 %3366
        %v3368 = vsel %vm394, %v3138, 0.0
        %3369 = vadd.xlane.f32.xlu0 %v3368
        %v3370 = vpop.xlane.xlu0 %3369
        %v3371 = vsel %vm394, %v3139, 0.0
        %3372 = vadd.xlane.f32.xlu0 %v3371
        %v3373 = vpop.xlane.xlu0 %3372
        %v3374 = vsel %vm394, %v3140, 0.0
        %3375 = vadd.xlane.f32.xlu0 %v3374
        %v3376 = vpop.xlane.xlu0 %3375
        %v3377 = vsel %vm394, %v3141, 0.0
        %3378 = vadd.xlane.f32.xlu0 %v3377
        %v3379 = vpop.xlane.xlu0 %3378
        %v3380 = vsel %vm394, %v3142, 0.0
        %3381 = vadd.xlane.f32.xlu0 %v3380
        %v3382 = vpop.xlane.xlu0 %3381
        %v3383 = vsel %vm394, %v3143, 0.0
        %3384 = vadd.xlane.f32.xlu0 %v3383
        %v3385 = vpop.xlane.xlu0 %3384
        %v3386 = vsel %vm394, %v3144, 0.0
        %3387 = vadd.xlane.f32.xlu0 %v3386
        %v3388 = vpop.xlane.xlu0 %3387
        %v3389 = vsel %vm394, %v3145, 0.0
        %3390 = vadd.xlane.f32.xlu0 %v3389
        %v3391 = vpop.xlane.xlu0 %3390
        %v3392 = vsel %vm394, %v3146, 0.0
        %3393 = vadd.xlane.f32.xlu0 %v3392
        %v3394 = vpop.xlane.xlu0 %3393
        %v3395 = vsel %vm394, %v3147, 0.0
        %3396 = vadd.xlane.f32.xlu0 %v3395
        %v3397 = vpop.xlane.xlu0 %3396
        %v3398 = vsel %vm394, %v3148, 0.0
        %3399 = vadd.xlane.f32.xlu0 %v3398
        %v3400 = vpop.xlane.xlu0 %3399
        %v3401 = vsel %vm394, %v3149, 0.0
        %3402 = vadd.xlane.f32.xlu0 %v3401
        %v3403 = vpop.xlane.xlu0 %3402
        %v3404 = vsel %vm394, %v3150, 0.0
        %3405 = vadd.xlane.f32.xlu0 %v3404
        %v3406 = vpop.xlane.xlu0 %3405
        %v3407 = vsel %vm394, %v3151, 0.0
        %3408 = vadd.xlane.f32.xlu0 %v3407
        %v3409 = vpop.xlane.xlu0 %3408
        %v3410 = vsel %vm394, %v3152, 0.0
        %3411 = vadd.xlane.f32.xlu0 %v3410
        %v3412 = vpop.xlane.xlu0 %3411
        %v3413 = vsel %vm394, %v3153, 0.0
        %3414 = vadd.xlane.f32.xlu0 %v3413
        %v3415 = vpop.xlane.xlu0 %3414
        %v3416 = vsel %vm394, %v3154, 0.0
        %3417 = vadd.xlane.f32.xlu0 %v3416
        %v3418 = vpop.xlane.xlu0 %3417
        %v3419 = vsel %vm394, %v3155, 0.0
        %3420 = vadd.xlane.f32.xlu0 %v3419
        %v3421 = vpop.xlane.xlu0 %3420
        %v3422 = vsel %vm394, %v3156, 0.0
        %3423 = vadd.xlane.f32.xlu0 %v3422
        %v3424 = vpop.xlane.xlu0 %3423
        %v3425 = vsel %vm394, %v3157, 0.0
        %3426 = vadd.xlane.f32.xlu0 %v3425
        %v3427 = vpop.xlane.xlu0 %3426
        %v3428 = vsel %vm394, %v3158, 0.0
        %3429 = vadd.xlane.f32.xlu0 %v3428
        %v3430 = vpop.xlane.xlu0 %3429
        %v3431 = vsel %vm394, %v3159, 0.0
        %3432 = vadd.xlane.f32.xlu0 %v3431
        %v3433 = vpop.xlane.xlu0 %3432
        %v3434 = vsel %vm394, %v3160, 0.0
        %3435 = vadd.xlane.f32.xlu0 %v3434
        %v3436 = vpop.xlane.xlu0 %3435
        %v3437 = vsel %vm394, %v3161, 0.0
        %3438 = vadd.xlane.f32.xlu0 %v3437
        %v3439 = vpop.xlane.xlu0 %3438
        %v3440 = vsel %vm394, %v3162, 0.0
        %3441 = vadd.xlane.f32.xlu0 %v3440
        %v3442 = vpop.xlane.xlu0 %3441
        %v3443 = vsel %vm394, %v3163, 0.0
        %3444 = vadd.xlane.f32.xlu0 %v3443
        %v3445 = vpop.xlane.xlu0 %3444
        %v3446 = vsel %vm394, %v3164, 0.0
        %3447 = vadd.xlane.f32.xlu0 %v3446
        %v3448 = vpop.xlane.xlu0 %3447
        %v3449 = vsel %vm394, %v3165, 0.0
        %3450 = vadd.xlane.f32.xlu0 %v3449
        %v3451 = vpop.xlane.xlu0 %3450
        %v3452 = vsel %vm394, %v3166, 0.0
        %3453 = vadd.xlane.f32.xlu0 %v3452
        %v3454 = vpop.xlane.xlu0 %3453
        %v3455 = vsel %vm394, %v3167, 0.0
        %3456 = vadd.xlane.f32.xlu0 %v3455
        %v3457 = vpop.xlane.xlu0 %3456
        %v3458 = vsel %vm394, %v3168, 0.0
        %3459 = vadd.xlane.f32.xlu0 %v3458
        %v3460 = vpop.xlane.xlu0 %3459
        %v3461 = vsel %vm394, %v3169, 0.0
        %3462 = vadd.xlane.f32.xlu0 %v3461
        %v3463 = vpop.xlane.xlu0 %3462
        %v3464 = vsel %vm394, %v3170, 0.0
        %3465 = vadd.xlane.f32.xlu0 %v3464
        %v3466 = vpop.xlane.xlu0 %3465
        %v3467 = vsel %vm394, %v3171, 0.0
        %3468 = vadd.xlane.f32.xlu0 %v3467
        %v3469 = vpop.xlane.xlu0 %3468
        %v3470 = vsel %vm394, %v3172, 0.0
        %3471 = vadd.xlane.f32.xlu0 %v3470
        %v3472 = vpop.xlane.xlu0 %3471
        %v3473 = vsel %vm394, %v3173, 0.0
        %3474 = vadd.xlane.f32.xlu0 %v3473
        %v3475 = vpop.xlane.xlu0 %3474
        %v3476 = vsel %vm394, %v3174, 0.0
        %3477 = vadd.xlane.f32.xlu0 %v3476
        %v3478 = vpop.xlane.xlu0 %3477
        %v3479 = vsel %vm394, %v3175, 0.0
        %3480 = vadd.xlane.f32.xlu0 %v3479
        %v3481 = vpop.xlane.xlu0 %3480
        %v3482 = vsel %vm394, %v3176, 0.0
        %3483 = vadd.xlane.f32.xlu0 %v3482
        %v3484 = vpop.xlane.xlu0 %3483
        %v3485 = vsel %vm394, %v3177, 0.0
        %3486 = vadd.xlane.f32.xlu0 %v3485
        %v3487 = vpop.xlane.xlu0 %3486
        %v3488 = vsel %vm394, %v3178, 0.0
        %3489 = vadd.xlane.f32.xlu0 %v3488
        %v3490 = vpop.xlane.xlu0 %3489
        %v3491 = vsel %vm394, %v3179, 0.0
        %3492 = vadd.xlane.f32.xlu0 %v3491
        %v3493 = vpop.xlane.xlu0 %3492
        %v3494 = vsel %vm394, %v3180, 0.0
        %3495 = vadd.xlane.f32.xlu0 %v3494
        %v3496 = vpop.xlane.xlu0 %3495
        %v3497 = vsel %vm394, %v3181, 0.0
        %3498 = vadd.xlane.f32.xlu0 %v3497
        %v3499 = vpop.xlane.xlu0 %3498
        %v3500 = vsel %vm394, %v3182, 0.0
        %3501 = vadd.xlane.f32.xlu0 %v3500
        %v3502 = vpop.xlane.xlu0 %3501
        %v3503 = vsel %vm394, %v3183, 0.0
        %3504 = vadd.xlane.f32.xlu0 %v3503
        %v3505 = vpop.xlane.xlu0 %3504
        %v3506 = vsel %vm394, %v3184, 0.0
        %3507 = vadd.xlane.f32.xlu0 %v3506
        %v3508 = vpop.xlane.xlu0 %3507
        %v3509 = vsel %vm394, %v3185, 0.0
        %3510 = vadd.xlane.f32.xlu0 %v3509
        %v3511 = vpop.xlane.xlu0 %3510
        %v3512 = vsel %vm394, %v3186, 0.0
        %3513 = vadd.xlane.f32.xlu0 %v3512
        %v3514 = vpop.xlane.xlu0 %3513
        %v3515 = vsel %vm394, %v3187, 0.0
        %3516 = vadd.xlane.f32.xlu0 %v3515
        %v3517 = vpop.xlane.xlu0 %3516
        %v3518 = vsel %vm394, %v3188, 0.0
        %3519 = vadd.xlane.f32.xlu0 %v3518
        %v3520 = vpop.xlane.xlu0 %3519
        %v3521 = vsel %vm394, %v3189, 0.0
        %3522 = vadd.xlane.f32.xlu0 %v3521
        %v3523 = vpop.xlane.xlu0 %3522
        %v3524 = vsel %vm394, %v3190, 0.0
        %3525 = vadd.xlane.f32.xlu0 %v3524
        %v3526 = vpop.xlane.xlu0 %3525
        %v3527 = vsel %vm394, %v3191, 0.0
        %3528 = vadd.xlane.f32.xlu0 %v3527
        %v3529 = vpop.xlane.xlu0 %3528
        %v3530 = vsel %vm394, %v3192, 0.0
        %3531 = vadd.xlane.f32.xlu0 %v3530
        %v3532 = vpop.xlane.xlu0 %3531
        %v3533 = vsel %vm394, %v3193, 0.0
        %3534 = vadd.xlane.f32.xlu0 %v3533
        %v3535 = vpop.xlane.xlu0 %3534
        %v3536 = vsel %vm394, %v3194, 0.0
        %3537 = vadd.xlane.f32.xlu0 %v3536
        %v3538 = vpop.xlane.xlu0 %3537
        %v3539 = vsel %vm394, %v3195, 0.0
        %3540 = vadd.xlane.f32.xlu0 %v3539
        %v3541 = vpop.xlane.xlu0 %3540
        %v3542 = vsel %vm394, %v3196, 0.0
        %3543 = vadd.xlane.f32.xlu0 %v3542
        %v3544 = vpop.xlane.xlu0 %3543
        %v3545 = vsel %vm394, %v3197, 0.0
        %3546 = vadd.xlane.f32.xlu0 %v3545
        %v3547 = vpop.xlane.xlu0 %3546
        %v3548 = vsel %vm394, %v3198, 0.0
        %3549 = vadd.xlane.f32.xlu0 %v3548
        %v3550 = vpop.xlane.xlu0 %3549
        %v3551 = vsel %vm394, %v3199, 0.0
        %3552 = vadd.xlane.f32.xlu0 %v3551
        %v3553 = vpop.xlane.xlu0 %3552
        %v3554 = vsel %vm394, %v3200, 0.0
        %3555 = vadd.xlane.f32.xlu0 %v3554
        %v3556 = vpop.xlane.xlu0 %3555
        %v3557 = vsel %vm394, %v3201, 0.0
        %3558 = vadd.xlane.f32.xlu0 %v3557
        %v3559 = vpop.xlane.xlu0 %3558
        %v3560 = vsel %vm394, %v3202, 0.0
        %3561 = vadd.xlane.f32.xlu0 %v3560
        %v3562 = vpop.xlane.xlu0 %3561
        %v3563 = vsel %vm394, %v3203, 0.0
        %3564 = vadd.xlane.f32.xlu0 %v3563
        %v3565 = vpop.xlane.xlu0 %3564
        %v3566 = vsel %vm394, %v3204, 0.0
        %3567 = vadd.xlane.f32.xlu0 %v3566
        %v3568 = vpop.xlane.xlu0 %3567
        %v3569 = vsel %vm394, %v3205, 0.0
        %3570 = vadd.xlane.f32.xlu0 %v3569
        %v3571 = vpop.xlane.xlu0 %3570
        %v3572 = vsel %vm394, %v3206, 0.0
        %3573 = vadd.xlane.f32.xlu0 %v3572
        %v3574 = vpop.xlane.xlu0 %3573
        %v3575 = vsel %vm394, %v3207, 0.0
        %3576 = vadd.xlane.f32.xlu0 %v3575
        %v3577 = vpop.xlane.xlu0 %3576
        %v3578 = vsel %vm394, %v3208, 0.0
        %3579 = vadd.xlane.f32.xlu0 %v3578
        %v3580 = vpop.xlane.xlu0 %3579
        %v3581 = vsel %vm394, %v3209, 0.0
        %3582 = vadd.xlane.f32.xlu0 %v3581
        %v3583 = vpop.xlane.xlu0 %3582
        %v3584 = vsel %vm394, %v3210, 0.0
        %3585 = vadd.xlane.f32.xlu0 %v3584
        %v3586 = vpop.xlane.xlu0 %3585
        %v3587 = vsel %vm394, %v3211, 0.0
        %3588 = vadd.xlane.f32.xlu0 %v3587
        %v3589 = vpop.xlane.xlu0 %3588
        %v3590 = vsel %vm394, %v3212, 0.0
        %3591 = vadd.xlane.f32.xlu0 %v3590
        %v3592 = vpop.xlane.xlu0 %3591
        %v3593 = vsel %vm394, %v3213, 0.0
        %3594 = vadd.xlane.f32.xlu0 %v3593
        %v3595 = vpop.xlane.xlu0 %3594
        %v3596 = vsel %vm394, %v3214, 0.0
        %3597 = vadd.xlane.f32.xlu0 %v3596
        %v3598 = vpop.xlane.xlu0 %3597
        %v3615 = vperm.slane %v3217, %v1744
        %v3616 = vperm.slane %v3220, %v2659
        %v3617 = vsel %vm2661, %v3616, %v3615
        %v3618 = vperm.slane %v3223, %v2663
        %v3619 = vsel %vm2665, %v3618, %v3617
        %v3620 = vperm.slane %v3226, %v2667
        %v3621 = vsel %vm2669, %v3620, %v3619
        %v3622 = vperm.slane %v3229, %v2671
        %v3623 = vsel %vm2673, %v3622, %v3621
        %v3624 = vperm.slane %v3232, %v2675
        %v3625 = vsel %vm2677, %v3624, %v3623
        %v3626 = vperm.slane %v3235, %v2679
        %v3627 = vsel %vm2681, %v3626, %v3625
        %v3628 = vperm.slane %v3238, %v2683
        %v3629 = vsel %vm2685, %v3628, %v3627
        %v3630 = vperm.slane %v3241, %v2687
        %v3631 = vsel %vm2689, %v3630, %v3629
        %v3632 = vperm.slane %v3244, %v2691
        %v3633 = vsel %vm2693, %v3632, %v3631
        %v3634 = vperm.slane %v3247, %v2695
        %v3635 = vsel %vm2697, %v3634, %v3633
        %v3636 = vperm.slane %v3250, %v2699
        %v3637 = vsel %vm2701, %v3636, %v3635
        %v3638 = vperm.slane %v3253, %v2703
        %v3639 = vsel %vm2705, %v3638, %v3637
        %v3640 = vperm.slane %v3256, %v2707
        %v3641 = vsel %vm2709, %v3640, %v3639
        %v3642 = vperm.slane %v3259, %v2711
        %v3643 = vsel %vm2713, %v3642, %v3641
        %v3644 = vperm.slane %v3262, %v2715
        %v3645 = vsel %vm2717, %v3644, %v3643
        %3646 = vst [vmem:[%s236] ss:$8 sm:$0x1] %v3645
        %3647 = vst [vmem:[%s236] ss:$8 sm:$0x0] %v3645
        %v3664 = vperm.slane %v3265, %v1744
        %v3665 = vperm.slane %v3268, %v2659
        %v3666 = vsel %vm2661, %v3665, %v3664
        %v3667 = vperm.slane %v3271, %v2663
        %v3668 = vsel %vm2665, %v3667, %v3666
        %v3669 = vperm.slane %v3274, %v2667
        %v3670 = vsel %vm2669, %v3669, %v3668
        %v3671 = vperm.slane %v3277, %v2671
        %v3672 = vsel %vm2673, %v3671, %v3670
        %v3673 = vperm.slane %v3280, %v2675
        %v3674 = vsel %vm2677, %v3673, %v3672
        %v3675 = vperm.slane %v3283, %v2679
        %v3676 = vsel %vm2681, %v3675, %v3674
        %v3677 = vperm.slane %v3286, %v2683
        %v3678 = vsel %vm2685, %v3677, %v3676
        %v3679 = vperm.slane %v3289, %v2687
        %v3680 = vsel %vm2689, %v3679, %v3678
        %v3681 = vperm.slane %v3292, %v2691
        %v3682 = vsel %vm2693, %v3681, %v3680
        %v3683 = vperm.slane %v3295, %v2695
        %v3684 = vsel %vm2697, %v3683, %v3682
        %v3685 = vperm.slane %v3298, %v2699
        %v3686 = vsel %vm2701, %v3685, %v3684
        %v3687 = vperm.slane %v3301, %v2703
        %v3688 = vsel %vm2705, %v3687, %v3686
        %v3689 = vperm.slane %v3304, %v2707
        %v3690 = vsel %vm2709, %v3689, %v3688
        %v3691 = vperm.slane %v3307, %v2711
        %v3692 = vsel %vm2713, %v3691, %v3690
        %v3693 = vperm.slane %v3310, %v2715
        %v3694 = vsel %vm2717, %v3693, %v3692
        %s3695 = scalar_lea.vmem %s236, 1 [#allocation4]
        %3696 = vst [vmem:[%s3695] ss:$8 sm:$0x1] %v3694
        %3697 = vst [vmem:[%s3695] ss:$8 sm:$0x0] %v3694
        %v3714 = vperm.slane %v3313, %v1744
        %v3715 = vperm.slane %v3316, %v2659
        %v3716 = vsel %vm2661, %v3715, %v3714
        %v3717 = vperm.slane %v3319, %v2663
        %v3718 = vsel %vm2665, %v3717, %v3716
        %v3719 = vperm.slane %v3322, %v2667
        %v3720 = vsel %vm2669, %v3719, %v3718
        %v3721 = vperm.slane %v3325, %v2671
        %v3722 = vsel %vm2673, %v3721, %v3720
        %v3723 = vperm.slane %v3328, %v2675
        %v3724 = vsel %vm2677, %v3723, %v3722
        %v3725 = vperm.slane %v3331, %v2679
        %v3726 = vsel %vm2681, %v3725, %v3724
        %v3727 = vperm.slane %v3334, %v2683
        %v3728 = vsel %vm2685, %v3727, %v3726
        %v3729 = vperm.slane %v3337, %v2687
        %v3730 = vsel %vm2689, %v3729, %v3728
        %v3731 = vperm.slane %v3340, %v2691
        %v3732 = vsel %vm2693, %v3731, %v3730
        %v3733 = vperm.slane %v3343, %v2695
        %v3734 = vsel %vm2697, %v3733, %v3732
        %v3735 = vperm.slane %v3346, %v2699
        %v3736 = vsel %vm2701, %v3735, %v3734
        %v3737 = vperm.slane %v3349, %v2703
        %v3738 = vsel %vm2705, %v3737, %v3736
        %v3739 = vperm.slane %v3352, %v2707
        %v3740 = vsel %vm2709, %v3739, %v3738
        %v3741 = vperm.slane %v3355, %v2711
        %v3742 = vsel %vm2713, %v3741, %v3740
        %v3743 = vperm.slane %v3358, %v2715
        %v3744 = vsel %vm2717, %v3743, %v3742
        %s3745 = scalar_lea.vmem %s236, 2 [#allocation4]
        %3746 = vst [vmem:[%s3745] ss:$8 sm:$0x1] %v3744
        %3747 = vst [vmem:[%s3745] ss:$8 sm:$0x0] %v3744
        %v3764 = vperm.slane %v3361, %v1744
        %v3765 = vperm.slane %v3364, %v2659
        %v3766 = vsel %vm2661, %v3765, %v3764
        %v3767 = vperm.slane %v3367, %v2663
        %v3768 = vsel %vm2665, %v3767, %v3766
        %v3769 = vperm.slane %v3370, %v2667
        %v3770 = vsel %vm2669, %v3769, %v3768
        %v3771 = vperm.slane %v3373, %v2671
        %v3772 = vsel %vm2673, %v3771, %v3770
        %v3773 = vperm.slane %v3376, %v2675
        %v3774 = vsel %vm2677, %v3773, %v3772
        %v3775 = vperm.slane %v3379, %v2679
        %v3776 = vsel %vm2681, %v3775, %v3774
        %v3777 = vperm.slane %v3382, %v2683
        %v3778 = vsel %vm2685, %v3777, %v3776
        %v3779 = vperm.slane %v3385, %v2687
        %v3780 = vsel %vm2689, %v3779, %v3778
        %v3781 = vperm.slane %v3388, %v2691
        %v3782 = vsel %vm2693, %v3781, %v3780
        %v3783 = vperm.slane %v3391, %v2695
        %v3784 = vsel %vm2697, %v3783, %v3782
        %v3785 = vperm.slane %v3394, %v2699
        %v3786 = vsel %vm2701, %v3785, %v3784
        %v3787 = vperm.slane %v3397, %v2703
        %v3788 = vsel %vm2705, %v3787, %v3786
        %v3789 = vperm.slane %v3400, %v2707
        %v3790 = vsel %vm2709, %v3789, %v3788
        %v3791 = vperm.slane %v3403, %v2711
        %v3792 = vsel %vm2713, %v3791, %v3790
        %v3793 = vperm.slane %v3406, %v2715
        %v3794 = vsel %vm2717, %v3793, %v3792
        %s3795 = scalar_lea.vmem %s236, 3 [#allocation4]
        %3796 = vst [vmem:[%s3795] ss:$8 sm:$0x1] %v3794
        %3797 = vst [vmem:[%s3795] ss:$8 sm:$0x0] %v3794
        %v3814 = vperm.slane %v3409, %v1744
        %v3815 = vperm.slane %v3412, %v2659
        %v3816 = vsel %vm2661, %v3815, %v3814
        %v3817 = vperm.slane %v3415, %v2663
        %v3818 = vsel %vm2665, %v3817, %v3816
        %v3819 = vperm.slane %v3418, %v2667
        %v3820 = vsel %vm2669, %v3819, %v3818
        %v3821 = vperm.slane %v3421, %v2671
        %v3822 = vsel %vm2673, %v3821, %v3820
        %v3823 = vperm.slane %v3424, %v2675
        %v3824 = vsel %vm2677, %v3823, %v3822
        %v3825 = vperm.slane %v3427, %v2679
        %v3826 = vsel %vm2681, %v3825, %v3824
        %v3827 = vperm.slane %v3430, %v2683
        %v3828 = vsel %vm2685, %v3827, %v3826
        %v3829 = vperm.slane %v3433, %v2687
        %v3830 = vsel %vm2689, %v3829, %v3828
        %v3831 = vperm.slane %v3436, %v2691
        %v3832 = vsel %vm2693, %v3831, %v3830
        %v3833 = vperm.slane %v3439, %v2695
        %v3834 = vsel %vm2697, %v3833, %v3832
        %v3835 = vperm.slane %v3442, %v2699
        %v3836 = vsel %vm2701, %v3835, %v3834
        %v3837 = vperm.slane %v3445, %v2703
        %v3838 = vsel %vm2705, %v3837, %v3836
        %v3839 = vperm.slane %v3448, %v2707
        %v3840 = vsel %vm2709, %v3839, %v3838
        %v3841 = vperm.slane %v3451, %v2711
        %v3842 = vsel %vm2713, %v3841, %v3840
        %v3843 = vperm.slane %v3454, %v2715
        %v3844 = vsel %vm2717, %v3843, %v3842
        %s3845 = scalar_lea.vmem %s236, 4 [#allocation4]
        %3846 = vst [vmem:[%s3845] ss:$8 sm:$0x1] %v3844
        %3847 = vst [vmem:[%s3845] ss:$8 sm:$0x0] %v3844
        %v3864 = vperm.slane %v3457, %v1744
        %v3865 = vperm.slane %v3460, %v2659
        %v3866 = vsel %vm2661, %v3865, %v3864
        %v3867 = vperm.slane %v3463, %v2663
        %v3868 = vsel %vm2665, %v3867, %v3866
        %v3869 = vperm.slane %v3466, %v2667
        %v3870 = vsel %vm2669, %v3869, %v3868
        %v3871 = vperm.slane %v3469, %v2671
        %v3872 = vsel %vm2673, %v3871, %v3870
        %v3873 = vperm.slane %v3472, %v2675
        %v3874 = vsel %vm2677, %v3873, %v3872
        %v3875 = vperm.slane %v3475, %v2679
        %v3876 = vsel %vm2681, %v3875, %v3874
        %v3877 = vperm.slane %v3478, %v2683
        %v3878 = vsel %vm2685, %v3877, %v3876
        %v3879 = vperm.slane %v3481, %v2687
        %v3880 = vsel %vm2689, %v3879, %v3878
        %v3881 = vperm.slane %v3484, %v2691
        %v3882 = vsel %vm2693, %v3881, %v3880
        %v3883 = vperm.slane %v3487, %v2695
        %v3884 = vsel %vm2697, %v3883, %v3882
        %v3885 = vperm.slane %v3490, %v2699
        %v3886 = vsel %vm2701, %v3885, %v3884
        %v3887 = vperm.slane %v3493, %v2703
        %v3888 = vsel %vm2705, %v3887, %v3886
        %v3889 = vperm.slane %v3496, %v2707
        %v3890 = vsel %vm2709, %v3889, %v3888
        %v3891 = vperm.slane %v3499, %v2711
        %v3892 = vsel %vm2713, %v3891, %v3890
        %v3893 = vperm.slane %v3502, %v2715
        %v3894 = vsel %vm2717, %v3893, %v3892
        %s3895 = scalar_lea.vmem %s236, 5 [#allocation4]
        %3896 = vst [vmem:[%s3895] ss:$8 sm:$0x1] %v3894
        %3897 = vst [vmem:[%s3895] ss:$8 sm:$0x0] %v3894
        %v3914 = vperm.slane %v3505, %v1744
        %v3915 = vperm.slane %v3508, %v2659
        %v3916 = vsel %vm2661, %v3915, %v3914
        %v3917 = vperm.slane %v3511, %v2663
        %v3918 = vsel %vm2665, %v3917, %v3916
        %v3919 = vperm.slane %v3514, %v2667
        %v3920 = vsel %vm2669, %v3919, %v3918
        %v3921 = vperm.slane %v3517, %v2671
        %v3922 = vsel %vm2673, %v3921, %v3920
        %v3923 = vperm.slane %v3520, %v2675
        %v3924 = vsel %vm2677, %v3923, %v3922
        %v3925 = vperm.slane %v3523, %v2679
        %v3926 = vsel %vm2681, %v3925, %v3924
        %v3927 = vperm.slane %v3526, %v2683
        %v3928 = vsel %vm2685, %v3927, %v3926
        %v3929 = vperm.slane %v3529, %v2687
        %v3930 = vsel %vm2689, %v3929, %v3928
        %v3931 = vperm.slane %v3532, %v2691
        %v3932 = vsel %vm2693, %v3931, %v3930
        %v3933 = vperm.slane %v3535, %v2695
        %v3934 = vsel %vm2697, %v3933, %v3932
        %v3935 = vperm.slane %v3538, %v2699
        %v3936 = vsel %vm2701, %v3935, %v3934
        %v3937 = vperm.slane %v3541, %v2703
        %v3938 = vsel %vm2705, %v3937, %v3936
        %v3939 = vperm.slane %v3544, %v2707
        %v3940 = vsel %vm2709, %v3939, %v3938
        %v3941 = vperm.slane %v3547, %v2711
        %v3942 = vsel %vm2713, %v3941, %v3940
        %v3943 = vperm.slane %v3550, %v2715
        %v3944 = vsel %vm2717, %v3943, %v3942
        %s3945 = scalar_lea.vmem %s236, 6 [#allocation4]
        %3946 = vst [vmem:[%s3945] ss:$8 sm:$0x1] %v3944
        %3947 = vst [vmem:[%s3945] ss:$8 sm:$0x0] %v3944
        %v3964 = vperm.slane %v3553, %v1744
        %v3965 = vperm.slane %v3556, %v2659
        %v3966 = vsel %vm2661, %v3965, %v3964
        %v3967 = vperm.slane %v3559, %v2663
        %v3968 = vsel %vm2665, %v3967, %v3966
        %v3969 = vperm.slane %v3562, %v2667
        %v3970 = vsel %vm2669, %v3969, %v3968
        %v3971 = vperm.slane %v3565, %v2671
        %v3972 = vsel %vm2673, %v3971, %v3970
        %v3973 = vperm.slane %v3568, %v2675
        %v3974 = vsel %vm2677, %v3973, %v3972
        %v3975 = vperm.slane %v3571, %v2679
        %v3976 = vsel %vm2681, %v3975, %v3974
        %v3977 = vperm.slane %v3574, %v2683
        %v3978 = vsel %vm2685, %v3977, %v3976
        %v3979 = vperm.slane %v3577, %v2687
        %v3980 = vsel %vm2689, %v3979, %v3978
        %v3981 = vperm.slane %v3580, %v2691
        %v3982 = vsel %vm2693, %v3981, %v3980
        %v3983 = vperm.slane %v3583, %v2695
        %v3984 = vsel %vm2697, %v3983, %v3982
        %v3985 = vperm.slane %v3586, %v2699
        %v3986 = vsel %vm2701, %v3985, %v3984
        %v3987 = vperm.slane %v3589, %v2703
        %v3988 = vsel %vm2705, %v3987, %v3986
        %v3989 = vperm.slane %v3592, %v2707
        %v3990 = vsel %vm2709, %v3989, %v3988
        %v3991 = vperm.slane %v3595, %v2711
        %v3992 = vsel %vm2713, %v3991, %v3990
        %v3993 = vperm.slane %v3598, %v2715
        %v3994 = vsel %vm2717, %v3993, %v3992
        %s3995 = scalar_lea.vmem %s236, 7 [#allocation4]
        %3996 = vst [vmem:[%s3995] ss:$8 sm:$0x1] %v3994
        %3997 = vst [vmem:[%s3995] ss:$8 sm:$0x0] %v3994
        %s3998 = smul.u32 128, %s23
        %p3999 = scmp.lt.s32.totalorder %s3998, 255
        %s4000 = scalar_select %p3999, %s3998, 255
        %s4001 = smul.addr %s4000, 8
        %s4002 = scalar_lea.vmem %s3, %s4001
        %s4003 = sand.u32 %s125, 1
        %s4004 = scalar_lea.sflag [#allocation3], %s4003
        %s4005 = sand.u32 %s125, 1
        %s4006 = smul.addr %s4005, 8
        %s4007 = scalar_lea.vmem [#allocation2], %s4006
        %s4008 = sand.u32 %s151, 1
        %s4009 = scalar_lea.sflag [#allocation5], %s4008
        %s4010 = sand.u32 %s151, 1
        %s4011 = smul.addr %s4010, 8
        %s4012 = scalar_lea.vmem [#allocation4], %s4011
        // Predicated region
        $region33: #{tpu_custom_call.1} parent=31 // pred_check
          %p4013 = pneg %p109
        $region34: #{tpu_custom_call.1} parent=31 // pred_check_branch
          %4015 = sbr.rel (%p4013) target = $region36
        $region35: #{tpu_custom_call.1} parent=31 // pred_region
          %s4016 = smul.u32 128, %s23
        $region36: #{tpu_custom_call.1} parent=31 // pred_fallthru
          _
        // Predicated region
        $region37: #{tpu_custom_call.1} parent=31 // pred_check
          %p4017 = pneg %p135
        $region38: #{tpu_custom_call.1} parent=31 // pred_check_branch
          %4019 = sbr.rel (%p4017) target = $region40
        $region39: #{tpu_custom_call.1} parent=31 // pred_region
          %4021 = vsyncadd %s4004, 0
          %s4022 = smul.addr %s23, 8
          %s4023 = scalar_lea.hbm %s4, %s4022
          %s4025 = sshll.u32 %s4007, 4
          %s4026 = int_to_ptr.vmem [resolvable:$true] %s4025
          %s4027 = sshll.u32 %s4023, 4
          %s4028 = int_to_ptr.hbm [resolvable:$true] %s4027
          %4030 = dma.vmem_to_hbm [thread:$0]  %s4026, 128, %s4028, %s4004
        $region40: #{tpu_custom_call.1} parent=31 // pred_fallthru
          _
        // Predicated region
        $region41: #{tpu_custom_call.1} parent=31 // pred_check
          %p4031 = pneg %p161
        $region42: #{tpu_custom_call.1} parent=31 // pred_check_branch
          %4033 = sbr.rel (%p4031) target = $region44
        $region43: #{tpu_custom_call.1} parent=31 // pred_region
          %4035 = vsyncadd %s4009, 0
          %s4036 = smul.addr %s23, 8
          %s4037 = scalar_lea.hbm %s5, %s4036
          %s4039 = sshll.u32 %s4012, 4
          %s4040 = int_to_ptr.vmem [resolvable:$true] %s4039
          %s4041 = sshll.u32 %s4037, 4
          %s4042 = int_to_ptr.hbm [resolvable:$true] %s4041
          %4044 = dma.vmem_to_hbm [thread:$0]  %s4040, 128, %s4042, %s4009
        $region44: #{tpu_custom_call.1} parent=31 // pred_fallthru
          _
      $region32: #{tpu_custom_call.1} parent=5 // pred_fallthru
        _
      %p4045 = scmp.le.s32.totalorder 2, %s18
      // Predicated region
      $region45: #{tpu_custom_call.1} parent=5 // pred_check
        %p4046 = pneg %p4045
      $region46: #{tpu_custom_call.1} parent=5 // pred_check_branch
        %4048 = sbr.rel (%p4046) target = $region48
      $region47: #{tpu_custom_call.1} parent=5 // pred_region
        %s4049 = ssub.s32 %s18, 2
        // Predicated region
        $region49: #{tpu_custom_call.1} parent=47 // pred_check
          %p4050 = pneg %p115
        $region50: #{tpu_custom_call.1} parent=47 // pred_check_branch
          %4052 = sbr.rel (%p4050) target = $region52
        $region51: #{tpu_custom_call.1} parent=47 // pred_region
          %s4053 = smul.u32 128, %s24
          %p4054 = scmp.lt.s32.totalorder %s4053, 255
          %s4055 = scalar_select %p4054, %s4053, 255
          %s4056 = smul.addr %s4055, 8
          %s4057 = scalar_lea.vmem %s3, %s4056
        $region52: #{tpu_custom_call.1} parent=47 // pred_fallthru
          _
        // Predicated region
        $region53: #{tpu_custom_call.1} parent=47 // pred_check
          %p4058 = pneg %p141
        $region54: #{tpu_custom_call.1} parent=47 // pred_check_branch
          %4060 = sbr.rel (%p4058) target = $region56
        $region55: #{tpu_custom_call.1} parent=47 // pred_region
          %s4061 = sand.u32 %s126, 1
          %s4062 = scalar_lea.sflag [#allocation3], %s4061
          %s4063 = sand.u32 %s126, 1
          %s4064 = smul.addr %s4063, 8
          %s4065 = scalar_lea.vmem [#allocation2], %s4064
          %4067 = dma.done %s4062, 128
        $region56: #{tpu_custom_call.1} parent=47 // pred_fallthru
          _
        // Predicated region
        $region57: #{tpu_custom_call.1} parent=47 // pred_check
          %p4068 = pneg %p167
        $region58: #{tpu_custom_call.1} parent=47 // pred_check_branch
          %4070 = sbr.rel (%p4068) target = $region60
        $region59: #{tpu_custom_call.1} parent=47 // pred_region
          %s4071 = sand.u32 %s152, 1
          %s4072 = scalar_lea.sflag [#allocation5], %s4071
          %s4073 = sand.u32 %s152, 1
          %s4074 = smul.addr %s4073, 8
          %s4075 = scalar_lea.vmem [#allocation4], %s4074
          %4077 = dma.done %s4072, 128
        $region60: #{tpu_custom_call.1} parent=47 // pred_fallthru
          _
      $region48: #{tpu_custom_call.1} parent=5 // pred_fallthru
        _
    $region6: #{tpu_custom_call.1} parent=1 // loop_footer
      %s22 = sadd.s32 1, %s18
    $region7: #{tpu_custom_call.1} parent=1 // loop_footer_branch
      %17 = sbr.rel target = $region3
    $region8: #{tpu_custom_call.1} parent=1 // loop_exit
      _
    %4078 = vsyncpa [#allocation3], 1
    %s4079 = scalar_lea.sflag [#allocation3], 1
    %4080 = vsyncpa %s4079, 1
    %4081 = vsyncpa [#allocation5], 1
    %s4082 = scalar_lea.sflag [#allocation5], 1
    %4083 = vsyncpa %s4082, 1

</llo_original>
